<compile_context>
chip_gen: v5e
topology: v5e:2x2
jax: 0.10.0
libtpu: 0.0.40
codegen_flags: <defaults>
</compile_context>

<pallas_src>
import functools
import math

import jax
import jax.numpy as jnp
from jax import lax
from jax.experimental import pallas as pl
from jax.experimental.pallas import tpu as pltpu


def _mha_kernel(x_ref, wqt_ref, wkt_ref, wvt_ref, wot_ref, bo_ref, o_ref,
                *, num_heads, head_dim, apply_mask):
    x = x_ref[0]                                   # (T, Din) bf16
    T = x.shape[0]
    dout = wot_ref.shape[1]

    # Full-width QKV projections on the MXU (bf16 operands, f32 accumulation).
    q = jnp.dot(x, wqt_ref[...], preferred_element_type=jnp.float32)   # (T, Dout)
    k = jnp.dot(x, wkt_ref[...], preferred_element_type=jnp.float32)   # (T, Dout)
    v = jnp.dot(x, wvt_ref[...], preferred_element_type=jnp.float32)   # (T, Dout)

    # Fold 1/sqrt(head_dim) into Q once (cheaper than scaling each (T, T) score).
    q = q * jnp.float32(1.0 / math.sqrt(head_dim))

    if apply_mask:
        row = lax.broadcasted_iota(jnp.int32, (T, T), 0)
        col = lax.broadcasted_iota(jnp.int32, (T, T), 1)
        causal = col > row                          # computed once, reused per head

    wo_bf = wot_ref[...]                            # (Dout, Dout) bf16, VMEM-resident

    # Accumulator seeded with the output-projection bias (broadcast hoisted out
    # of the head loop; f32 throughout).
    acc = jnp.broadcast_to(bo_ref[...], (T, dout)).astype(jnp.float32)

    dn_t = (((1,), (1,)), ((), ()))                 # contract dim 1 of both: A @ B^T

    for h in range(num_heads):                      # small static head count -> unroll
        lo = h * head_dim
        qh = q[:, lo:lo + head_dim].astype(jnp.bfloat16)   # (T, hd)
        kh = k[:, lo:lo + head_dim].astype(jnp.bfloat16)   # (T, hd)
        vh = v[:, lo:lo + head_dim].astype(jnp.bfloat16)   # (T, hd)

        # scores = Q_h @ K_h^T (already scaled)
        s = lax.dot_general(qh, kh, dn_t, preferred_element_type=jnp.float32)  # (T, T)
        if apply_mask:
            # Large finite negative instead of -inf: avoids NaN if a row were fully masked.
            s = jnp.where(causal, jnp.float32(-1e30), s)

        # Softmax in f32: max-sub, exp, row-sum, EUP reciprocal (no divide).
        m = jnp.max(s, axis=-1, keepdims=True)
        p = jnp.exp(s - m)
        denom = jnp.sum(p, axis=-1, keepdims=True)
        w = p * pl.reciprocal(denom, approx=True)
        # TODO(synk): attention-weight dropout is identity (eval-mode forward).

        ctx = jnp.dot(w.astype(jnp.bfloat16), vh,
                      preferred_element_type=jnp.float32)              # (T, hd)

        # This head's contribution to the output projection: (T, hd) @ (hd, Dout).
        acc = acc + jnp.dot(ctx.astype(jnp.bfloat16), wo_bf[lo:lo + head_dim, :],
                            preferred_element_type=jnp.float32)

    o_ref[0] = acc                                   # single lane-dense f32 store


def multi_head_attention(x, wq, wk, wv, wo, bo, *, num_heads, apply_mask=False):
    """x: (B, T, Din) f32.  wq/wk/wv/wo: (Dout, Din)/(Dout, Dout) PyTorch style.  bo: (Dout,)."""
    B, T, Din = x.shape
    Dout = wq.shape[0]
    hd = Dout // num_heads

    # Cast MXU operands to bf16 in the wrapper (halves HBM traffic for x / weights);
    # bias and all in-kernel elementwise math stay f32.
    x_bf = x.astype(jnp.bfloat16)
    wqt = wq.T.astype(jnp.bfloat16)                 # (Din, Dout)
    wkt = wk.T.astype(jnp.bfloat16)
    wvt = wv.T.astype(jnp.bfloat16)
    wot = wo.T.astype(jnp.bfloat16)                 # (Dout, Dout): ctx @ wo.T
    bo2 = bo.reshape(1, Dout).astype(jnp.float32)

    kernel = functools.partial(_mha_kernel, num_heads=num_heads, head_dim=hd,
                               apply_mask=apply_mask)

    return pl.pallas_call(
        kernel,
        out_shape=jax.ShapeDtypeStruct((B, T, Dout), jnp.float32),
        grid_spec=pltpu.PrefetchScalarGridSpec(
            num_scalar_prefetch=0,
            grid=(B,),
            in_specs=[
                pl.BlockSpec((1, T, Din), lambda b: (b, 0, 0)),    # x (per batch)
                pl.BlockSpec((Din, Dout), lambda b: (0, 0)),       # Wq^T (VMEM-resident)
                pl.BlockSpec((Din, Dout), lambda b: (0, 0)),       # Wk^T
                pl.BlockSpec((Din, Dout), lambda b: (0, 0)),       # Wv^T
                pl.BlockSpec((Dout, Dout), lambda b: (0, 0)),      # Wout^T
                pl.BlockSpec((1, Dout), lambda b: (0, 0)),         # bias
            ],
            out_specs=pl.BlockSpec((1, T, Dout), lambda b: (b, 0, 0)),
        ),
        compiler_params=pltpu.CompilerParams(
            dimension_semantics=("parallel",)),
    )(x_bf, wqt, wkt, wvt, wot, bo2)


def _reference_mha(x, wq, wk, wv, wo, bo, num_heads, apply_mask):
    B, T, Din = x.shape
    Dout = wq.shape[0]
    hd = Dout // num_heads
    Q = x @ wq.T
    K = x @ wk.T
    V = x @ wv.T
    Q = Q.reshape(B, T, num_heads, hd).transpose(0, 2, 1, 3)
    K = K.reshape(B, T, num_heads, hd).transpose(0, 2, 1, 3)
    V = V.reshape(B, T, num_heads, hd).transpose(0, 2, 1, 3)
    scores = jnp.einsum("bhqd,bhkd->bhqk", Q, K) / math.sqrt(hd)
    if apply_mask:
        mask = jnp.triu(jnp.ones((T, T), dtype=bool), k=1)
        scores = jnp.where(mask[None, None], -jnp.inf, scores)
    w = jax.nn.softmax(scores, axis=-1)
    ctx = jnp.einsum("bhqk,bhkd->bhqd", w, V)
    ctx = ctx.transpose(0, 2, 1, 3).reshape(B, T, Dout)
    return ctx @ wo.T + bo


def _rel_err(a, b):
    a = a.astype(jnp.float32)
    b = b.astype(jnp.float32)
    return float(jnp.linalg.norm(a - b) / jnp.linalg.norm(b))


if __name__ == "__main__":
    # Small but lane-dense shapes consistent with the module
    # (input_dim == output_dim, heads divide dim, Dout multiple of 128).
    B, T, D, H = 2, 128, 256, 4

    key = jax.random.PRNGKey(0)
    kx, kq, kk, kv, ko, kb = jax.random.split(key, 6)
    scale = 1.0 / math.sqrt(D)
    x = jax.random.normal(kx, (B, T, D), dtype=jnp.float32)
    wq = jax.random.normal(kq, (D, D), dtype=jnp.float32) * scale
    wk = jax.random.normal(kk, (D, D), dtype=jnp.float32) * scale
    wv = jax.random.normal(kv, (D, D), dtype=jnp.float32) * scale
    wo = jax.random.normal(ko, (D, D), dtype=jnp.float32) * scale
    bo = jax.random.normal(kb, (D,), dtype=jnp.float32) * scale

    # Masked (causal) path.
    out = jax.block_until_ready(
        multi_head_attention(x, wq, wk, wv, wo, bo, num_heads=H, apply_mask=True))
    ref = _reference_mha(x, wq, wk, wv, wo, bo, H, True)
    assert out.shape == (B, T, D)
    err = _rel_err(out, ref)
    assert err < 5e-2, f"masked rel-L2 err too large: {err}"
    assert jnp.allclose(out, ref, atol=1e-1, rtol=1e-1), "mismatch vs reference (masked)"

    # Unmasked path.
    out2 = jax.block_until_ready(
        multi_head_attention(x, wq, wk, wv, wo, bo, num_heads=H, apply_mask=False))
    ref2 = _reference_mha(x, wq, wk, wv, wo, bo, H, False)
    err2 = _rel_err(out2, ref2)
    assert err2 < 5e-2, f"unmasked rel-L2 err too large: {err2}"
    assert jnp.allclose(out2, ref2, atol=1e-1, rtol=1e-1), "mismatch vs reference (unmasked)"

    print("KERNEL_OK")
</pallas_src>

<mosaic_0001>
module attributes {stable_mosaic.version = 11 : i64} {
  func.func @_mha_kernel(%arg0: i32, %arg1: memref<1x128x256xbf16, #tpu.memory_space<vmem>>, %arg2: memref<256x256xbf16, #tpu.memory_space<vmem>>, %arg3: memref<256x256xbf16, #tpu.memory_space<vmem>>, %arg4: memref<256x256xbf16, #tpu.memory_space<vmem>>, %arg5: memref<256x256xbf16, #tpu.memory_space<vmem>>, %arg6: memref<1x256xf32, #tpu.memory_space<vmem>>, %arg7: memref<1x128x256xf32, #tpu.memory_space<vmem>>) attributes {dimension_semantics = [#tpu.dimension_semantics<parallel>], iteration_bounds = array<i64: 2>, scalar_prefetch = 0 : i64, scratch_operands = 0 : i64, tpu.core_type = #tpu.core_type<tc>, window_params = [{transform_indices = @transform_0, window_bounds = array<i64: 1, 128, 256>}, {pipeline_mode = #tpu.pipeline_mode<synchronous>, transform_indices = @transform_1, window_bounds = array<i64: 256, 256>}, {pipeline_mode = #tpu.pipeline_mode<synchronous>, transform_indices = @transform_2, window_bounds = array<i64: 256, 256>}, {pipeline_mode = #tpu.pipeline_mode<synchronous>, transform_indices = @transform_3, window_bounds = array<i64: 256, 256>}, {pipeline_mode = #tpu.pipeline_mode<synchronous>, transform_indices = @transform_4, window_bounds = array<i64: 256, 256>}, {pipeline_mode = #tpu.pipeline_mode<synchronous>, transform_indices = @transform_5, window_bounds = array<i64: 1, 256>}, {transform_indices = @transform_6, window_bounds = array<i64: 1, 128, 256>}]} {
    %c0 = arith.constant 0 : index
    %c0_0 = arith.constant 0 : index
    %c0_1 = arith.constant 0 : index
    %0 = vector.load %arg1[%c0, %c0_0, %c0_1] : memref<1x128x256xbf16, #tpu.memory_space<vmem>>, vector<1x128x256xbf16>
    %1 = vector.shape_cast %0 : vector<1x128x256xbf16> to vector<128x256xbf16>
    %c0_2 = arith.constant 0 : index
    %c0_3 = arith.constant 0 : index
    %2 = vector.load %arg2[%c0_2, %c0_3] : memref<256x256xbf16, #tpu.memory_space<vmem>>, vector<256x256xbf16>
    %cst = arith.constant dense<0.000000e+00> : vector<128x256xf32>
    %3 = tpu.matmul %1, %2, %cst {dimension_numbers = #tpu.dot_dimension_numbers<[1], [0], [0], [1], [0, 0, 1, 1], [], []>} : vector<128x256xbf16>, vector<256x256xbf16>, vector<128x256xf32> -> vector<128x256xf32>
    %c0_4 = arith.constant 0 : index
    %c0_5 = arith.constant 0 : index
    %4 = vector.load %arg3[%c0_4, %c0_5] : memref<256x256xbf16, #tpu.memory_space<vmem>>, vector<256x256xbf16>
    %cst_6 = arith.constant dense<0.000000e+00> : vector<128x256xf32>
    %5 = tpu.matmul %1, %4, %cst_6 {dimension_numbers = #tpu.dot_dimension_numbers<[1], [0], [0], [1], [0, 0, 1, 1], [], []>} : vector<128x256xbf16>, vector<256x256xbf16>, vector<128x256xf32> -> vector<128x256xf32>
    %c0_7 = arith.constant 0 : index
    %c0_8 = arith.constant 0 : index
    %6 = vector.load %arg4[%c0_7, %c0_8] : memref<256x256xbf16, #tpu.memory_space<vmem>>, vector<256x256xbf16>
    %cst_9 = arith.constant dense<0.000000e+00> : vector<128x256xf32>
    %7 = tpu.matmul %1, %6, %cst_9 {dimension_numbers = #tpu.dot_dimension_numbers<[1], [0], [0], [1], [0, 0, 1, 1], [], []>} : vector<128x256xbf16>, vector<256x256xbf16>, vector<128x256xf32> -> vector<128x256xf32>
    %cst_10 = arith.constant 1.250000e-01 : f32
    %8 = vector.broadcast %cst_10 : f32 to vector<128x256xf32>
    %9 = arith.mulf %3, %8 : vector<128x256xf32>
    %10 = tpu.iota {dimensions = array<i32: 0>} : vector<128x128xi32>
    %11 = tpu.iota {dimensions = array<i32: 1>} : vector<128x128xi32>
    %12 = arith.cmpi sgt, %11, %10 : vector<128x128xi32>
    %c0_11 = arith.constant 0 : index
    %c0_12 = arith.constant 0 : index
    %13 = vector.load %arg5[%c0_11, %c0_12] : memref<256x256xbf16, #tpu.memory_space<vmem>>, vector<256x256xbf16>
    %c0_13 = arith.constant 0 : index
    %c0_14 = arith.constant 0 : index
    %14 = vector.load %arg6[%c0_13, %c0_14] : memref<1x256xf32, #tpu.memory_space<vmem>>, vector<1x256xf32>
    %15 = vector.shape_cast %14 : vector<1x256xf32> to vector<1x256xf32>
    %16 = vector.broadcast %15 : vector<1x256xf32> to vector<128x256xf32>
    %17 = vector.extract_strided_slice %9 {offsets = [0, 0], sizes = [128, 64], strides = [1, 1]} : vector<128x256xf32> to vector<128x64xf32>
    %18 = arith.truncf %17 : vector<128x64xf32> to vector<128x64xbf16>
    %19 = vector.extract_strided_slice %5 {offsets = [0, 0], sizes = [128, 64], strides = [1, 1]} : vector<128x256xf32> to vector<128x64xf32>
    %20 = arith.truncf %19 : vector<128x64xf32> to vector<128x64xbf16>
    %21 = vector.extract_strided_slice %7 {offsets = [0, 0], sizes = [128, 64], strides = [1, 1]} : vector<128x256xf32> to vector<128x64xf32>
    %22 = arith.truncf %21 : vector<128x64xf32> to vector<128x64xbf16>
    %cst_15 = arith.constant dense<0.000000e+00> : vector<128x128xf32>
    %23 = tpu.matmul %18, %20, %cst_15 {dimension_numbers = #tpu.dot_dimension_numbers<[1], [1], [0], [0], [0, 0, 1, 0], [], []>} : vector<128x64xbf16>, vector<128x64xbf16>, vector<128x128xf32> -> vector<128x128xf32>
    %cst_16 = arith.constant -1.000000e+30 : f32
    %24 = vector.broadcast %cst_16 : f32 to vector<128x128xf32>
    %25 = arith.select %12, %24, %23 : vector<128x128xi1>, vector<128x128xf32>
    %cst_17 = arith.constant dense<0xFF800000> : vector<128xf32>
    %26 = vector.multi_reduction <maximumf>, %25, %cst_17 [1] : vector<128x128xf32> to vector<128xf32>
    %27 = vector.shape_cast %26 : vector<128xf32> to vector<128x1xf32>
    %28 = vector.broadcast %27 : vector<128x1xf32> to vector<128x128xf32>
    %29 = arith.subf %25, %28 : vector<128x128xf32>
    %30 = math.exp %29 : vector<128x128xf32>
    %cst_18 = arith.constant dense<0.000000e+00> : vector<128xf32>
    %31 = vector.multi_reduction <add>, %30, %cst_18 [1] : vector<128x128xf32> to vector<128xf32>
    %32 = vector.shape_cast %31 : vector<128xf32> to vector<128x1xf32>
    %33 = tpu.reciprocal %32 {approx = true} : vector<128x1xf32> -> vector<128x1xf32>
    %34 = vector.broadcast %33 : vector<128x1xf32> to vector<128x128xf32>
    %35 = arith.mulf %30, %34 : vector<128x128xf32>
    %36 = arith.truncf %35 : vector<128x128xf32> to vector<128x128xbf16>
    %cst_19 = arith.constant dense<0.000000e+00> : vector<128x64xf32>
    %37 = tpu.matmul %36, %22, %cst_19 {dimension_numbers = #tpu.dot_dimension_numbers<[1], [0], [0], [1], [0, 0, 1, 1], [], []>} : vector<128x128xbf16>, vector<128x64xbf16>, vector<128x64xf32> -> vector<128x64xf32>
    %38 = arith.truncf %37 : vector<128x64xf32> to vector<128x64xbf16>
    %39 = vector.extract_strided_slice %13 {offsets = [0, 0], sizes = [64, 256], strides = [1, 1]} : vector<256x256xbf16> to vector<64x256xbf16>
    %cst_20 = arith.constant dense<0.000000e+00> : vector<128x256xf32>
    %40 = tpu.matmul %38, %39, %cst_20 {dimension_numbers = #tpu.dot_dimension_numbers<[1], [0], [0], [1], [0, 0, 1, 1], [], []>} : vector<128x64xbf16>, vector<64x256xbf16>, vector<128x256xf32> -> vector<128x256xf32>
    %41 = arith.addf %16, %40 : vector<128x256xf32>
    %42 = vector.extract_strided_slice %9 {offsets = [0, 64], sizes = [128, 64], strides = [1, 1]} : vector<128x256xf32> to vector<128x64xf32>
    %43 = arith.truncf %42 : vector<128x64xf32> to vector<128x64xbf16>
    %44 = vector.extract_strided_slice %5 {offsets = [0, 64], sizes = [128, 64], strides = [1, 1]} : vector<128x256xf32> to vector<128x64xf32>
    %45 = arith.truncf %44 : vector<128x64xf32> to vector<128x64xbf16>
    %46 = vector.extract_strided_slice %7 {offsets = [0, 64], sizes = [128, 64], strides = [1, 1]} : vector<128x256xf32> to vector<128x64xf32>
    %47 = arith.truncf %46 : vector<128x64xf32> to vector<128x64xbf16>
    %cst_21 = arith.constant dense<0.000000e+00> : vector<128x128xf32>
    %48 = tpu.matmul %43, %45, %cst_21 {dimension_numbers = #tpu.dot_dimension_numbers<[1], [1], [0], [0], [0, 0, 1, 0], [], []>} : vector<128x64xbf16>, vector<128x64xbf16>, vector<128x128xf32> -> vector<128x128xf32>
    %cst_22 = arith.constant -1.000000e+30 : f32
    %49 = vector.broadcast %cst_22 : f32 to vector<128x128xf32>
    %50 = arith.select %12, %49, %48 : vector<128x128xi1>, vector<128x128xf32>
    %cst_23 = arith.constant dense<0xFF800000> : vector<128xf32>
    %51 = vector.multi_reduction <maximumf>, %50, %cst_23 [1] : vector<128x128xf32> to vector<128xf32>
    %52 = vector.shape_cast %51 : vector<128xf32> to vector<128x1xf32>
    %53 = vector.broadcast %52 : vector<128x1xf32> to vector<128x128xf32>
    %54 = arith.subf %50, %53 : vector<128x128xf32>
    %55 = math.exp %54 : vector<128x128xf32>
    %cst_24 = arith.constant dense<0.000000e+00> : vector<128xf32>
    %56 = vector.multi_reduction <add>, %55, %cst_24 [1] : vector<128x128xf32> to vector<128xf32>
    %57 = vector.shape_cast %56 : vector<128xf32> to vector<128x1xf32>
    %58 = tpu.reciprocal %57 {approx = true} : vector<128x1xf32> -> vector<128x1xf32>
    %59 = vector.broadcast %58 : vector<128x1xf32> to vector<128x128xf32>
    %60 = arith.mulf %55, %59 : vector<128x128xf32>
    %61 = arith.truncf %60 : vector<128x128xf32> to vector<128x128xbf16>
    %cst_25 = arith.constant dense<0.000000e+00> : vector<128x64xf32>
    %62 = tpu.matmul %61, %47, %cst_25 {dimension_numbers = #tpu.dot_dimension_numbers<[1], [0], [0], [1], [0, 0, 1, 1], [], []>} : vector<128x128xbf16>, vector<128x64xbf16>, vector<128x64xf32> -> vector<128x64xf32>
    %63 = arith.truncf %62 : vector<128x64xf32> to vector<128x64xbf16>
    %64 = vector.extract_strided_slice %13 {offsets = [64, 0], sizes = [64, 256], strides = [1, 1]} : vector<256x256xbf16> to vector<64x256xbf16>
    %cst_26 = arith.constant dense<0.000000e+00> : vector<128x256xf32>
    %65 = tpu.matmul %63, %64, %cst_26 {dimension_numbers = #tpu.dot_dimension_numbers<[1], [0], [0], [1], [0, 0, 1, 1], [], []>} : vector<128x64xbf16>, vector<64x256xbf16>, vector<128x256xf32> -> vector<128x256xf32>
    %66 = arith.addf %41, %65 : vector<128x256xf32>
    %67 = vector.extract_strided_slice %9 {offsets = [0, 128], sizes = [128, 64], strides = [1, 1]} : vector<128x256xf32> to vector<128x64xf32>
    %68 = arith.truncf %67 : vector<128x64xf32> to vector<128x64xbf16>
    %69 = vector.extract_strided_slice %5 {offsets = [0, 128], sizes = [128, 64], strides = [1, 1]} : vector<128x256xf32> to vector<128x64xf32>
    %70 = arith.truncf %69 : vector<128x64xf32> to vector<128x64xbf16>
    %71 = vector.extract_strided_slice %7 {offsets = [0, 128], sizes = [128, 64], strides = [1, 1]} : vector<128x256xf32> to vector<128x64xf32>
    %72 = arith.truncf %71 : vector<128x64xf32> to vector<128x64xbf16>
    %cst_27 = arith.constant dense<0.000000e+00> : vector<128x128xf32>
    %73 = tpu.matmul %68, %70, %cst_27 {dimension_numbers = #tpu.dot_dimension_numbers<[1], [1], [0], [0], [0, 0, 1, 0], [], []>} : vector<128x64xbf16>, vector<128x64xbf16>, vector<128x128xf32> -> vector<128x128xf32>
    %cst_28 = arith.constant -1.000000e+30 : f32
    %74 = vector.broadcast %cst_28 : f32 to vector<128x128xf32>
    %75 = arith.select %12, %74, %73 : vector<128x128xi1>, vector<128x128xf32>
    %cst_29 = arith.constant dense<0xFF800000> : vector<128xf32>
    %76 = vector.multi_reduction <maximumf>, %75, %cst_29 [1] : vector<128x128xf32> to vector<128xf32>
    %77 = vector.shape_cast %76 : vector<128xf32> to vector<128x1xf32>
    %78 = vector.broadcast %77 : vector<128x1xf32> to vector<128x128xf32>
    %79 = arith.subf %75, %78 : vector<128x128xf32>
    %80 = math.exp %79 : vector<128x128xf32>
    %cst_30 = arith.constant dense<0.000000e+00> : vector<128xf32>
    %81 = vector.multi_reduction <add>, %80, %cst_30 [1] : vector<128x128xf32> to vector<128xf32>
    %82 = vector.shape_cast %81 : vector<128xf32> to vector<128x1xf32>
    %83 = tpu.reciprocal %82 {approx = true} : vector<128x1xf32> -> vector<128x1xf32>
    %84 = vector.broadcast %83 : vector<128x1xf32> to vector<128x128xf32>
    %85 = arith.mulf %80, %84 : vector<128x128xf32>
    %86 = arith.truncf %85 : vector<128x128xf32> to vector<128x128xbf16>
    %cst_31 = arith.constant dense<0.000000e+00> : vector<128x64xf32>
    %87 = tpu.matmul %86, %72, %cst_31 {dimension_numbers = #tpu.dot_dimension_numbers<[1], [0], [0], [1], [0, 0, 1, 1], [], []>} : vector<128x128xbf16>, vector<128x64xbf16>, vector<128x64xf32> -> vector<128x64xf32>
    %88 = arith.truncf %87 : vector<128x64xf32> to vector<128x64xbf16>
    %89 = vector.extract_strided_slice %13 {offsets = [128, 0], sizes = [64, 256], strides = [1, 1]} : vector<256x256xbf16> to vector<64x256xbf16>
    %cst_32 = arith.constant dense<0.000000e+00> : vector<128x256xf32>
    %90 = tpu.matmul %88, %89, %cst_32 {dimension_numbers = #tpu.dot_dimension_numbers<[1], [0], [0], [1], [0, 0, 1, 1], [], []>} : vector<128x64xbf16>, vector<64x256xbf16>, vector<128x256xf32> -> vector<128x256xf32>
    %91 = arith.addf %66, %90 : vector<128x256xf32>
    %92 = vector.extract_strided_slice %9 {offsets = [0, 192], sizes = [128, 64], strides = [1, 1]} : vector<128x256xf32> to vector<128x64xf32>
    %93 = arith.truncf %92 : vector<128x64xf32> to vector<128x64xbf16>
    %94 = vector.extract_strided_slice %5 {offsets = [0, 192], sizes = [128, 64], strides = [1, 1]} : vector<128x256xf32> to vector<128x64xf32>
    %95 = arith.truncf %94 : vector<128x64xf32> to vector<128x64xbf16>
    %96 = vector.extract_strided_slice %7 {offsets = [0, 192], sizes = [128, 64], strides = [1, 1]} : vector<128x256xf32> to vector<128x64xf32>
    %97 = arith.truncf %96 : vector<128x64xf32> to vector<128x64xbf16>
    %cst_33 = arith.constant dense<0.000000e+00> : vector<128x128xf32>
    %98 = tpu.matmul %93, %95, %cst_33 {dimension_numbers = #tpu.dot_dimension_numbers<[1], [1], [0], [0], [0, 0, 1, 0], [], []>} : vector<128x64xbf16>, vector<128x64xbf16>, vector<128x128xf32> -> vector<128x128xf32>
    %cst_34 = arith.constant -1.000000e+30 : f32
    %99 = vector.broadcast %cst_34 : f32 to vector<128x128xf32>
    %100 = arith.select %12, %99, %98 : vector<128x128xi1>, vector<128x128xf32>
    %cst_35 = arith.constant dense<0xFF800000> : vector<128xf32>
    %101 = vector.multi_reduction <maximumf>, %100, %cst_35 [1] : vector<128x128xf32> to vector<128xf32>
    %102 = vector.shape_cast %101 : vector<128xf32> to vector<128x1xf32>
    %103 = vector.broadcast %102 : vector<128x1xf32> to vector<128x128xf32>
    %104 = arith.subf %100, %103 : vector<128x128xf32>
    %105 = math.exp %104 : vector<128x128xf32>
    %cst_36 = arith.constant dense<0.000000e+00> : vector<128xf32>
    %106 = vector.multi_reduction <add>, %105, %cst_36 [1] : vector<128x128xf32> to vector<128xf32>
    %107 = vector.shape_cast %106 : vector<128xf32> to vector<128x1xf32>
    %108 = tpu.reciprocal %107 {approx = true} : vector<128x1xf32> -> vector<128x1xf32>
    %109 = vector.broadcast %108 : vector<128x1xf32> to vector<128x128xf32>
    %110 = arith.mulf %105, %109 : vector<128x128xf32>
    %111 = arith.truncf %110 : vector<128x128xf32> to vector<128x128xbf16>
    %cst_37 = arith.constant dense<0.000000e+00> : vector<128x64xf32>
    %112 = tpu.matmul %111, %97, %cst_37 {dimension_numbers = #tpu.dot_dimension_numbers<[1], [0], [0], [1], [0, 0, 1, 1], [], []>} : vector<128x128xbf16>, vector<128x64xbf16>, vector<128x64xf32> -> vector<128x64xf32>
    %113 = arith.truncf %112 : vector<128x64xf32> to vector<128x64xbf16>
    %114 = vector.extract_strided_slice %13 {offsets = [192, 0], sizes = [64, 256], strides = [1, 1]} : vector<256x256xbf16> to vector<64x256xbf16>
    %cst_38 = arith.constant dense<0.000000e+00> : vector<128x256xf32>
    %115 = tpu.matmul %113, %114, %cst_38 {dimension_numbers = #tpu.dot_dimension_numbers<[1], [0], [0], [1], [0, 0, 1, 1], [], []>} : vector<128x64xbf16>, vector<64x256xbf16>, vector<128x256xf32> -> vector<128x256xf32>
    %116 = arith.addf %91, %115 : vector<128x256xf32>
    %c0_39 = arith.constant 0 : index
    %c0_40 = arith.constant 0 : index
    %c0_41 = arith.constant 0 : index
    %117 = vector.load %arg7[%c0_39, %c0_40, %c0_41] : memref<1x128x256xf32, #tpu.memory_space<vmem>>, vector<1x128x256xf32>
    %118 = vector.shape_cast %117 : vector<1x128x256xf32> to vector<128x256xf32>
    %119 = vector.shape_cast %116 : vector<128x256xf32> to vector<1x128x256xf32>
    tpu.vector_store %arg7[%c0_39, %c0_40, %c0_41], %119 {strides = array<i32>} : memref<1x128x256xf32, #tpu.memory_space<vmem>>, vector<1x128x256xf32>,
    return
  }
  func.func @transform_0(%arg0: i32) -> (i32, i32, i32) {
    %c0_i32 = arith.constant 0 : i32
    %c0_i32_0 = arith.constant 0 : i32
    %c0_i32_1 = arith.constant 0 : i32
    return %arg0, %c0_i32, %c0_i32_0 : i32, i32, i32
  }
  func.func @transform_1(%arg0: i32) -> (i32, i32) {
    %c0_i32 = arith.constant 0 : i32
    %c0_i32_0 = arith.constant 0 : i32
    %c0_i32_1 = arith.constant 0 : i32
    return %c0_i32, %c0_i32_0 : i32, i32
  }
  func.func @transform_2(%arg0: i32) -> (i32, i32) {
    %c0_i32 = arith.constant 0 : i32
    %c0_i32_0 = arith.constant 0 : i32
    %c0_i32_1 = arith.constant 0 : i32
    return %c0_i32, %c0_i32_0 : i32, i32
  }
  func.func @transform_3(%arg0: i32) -> (i32, i32) {
    %c0_i32 = arith.constant 0 : i32
    %c0_i32_0 = arith.constant 0 : i32
    %c0_i32_1 = arith.constant 0 : i32
    return %c0_i32, %c0_i32_0 : i32, i32
  }
  func.func @transform_4(%arg0: i32) -> (i32, i32) {
    %c0_i32 = arith.constant 0 : i32
    %c0_i32_0 = arith.constant 0 : i32
    %c0_i32_1 = arith.constant 0 : i32
    return %c0_i32, %c0_i32_0 : i32, i32
  }
  func.func @transform_5(%arg0: i32) -> (i32, i32) {
    %c0_i32 = arith.constant 0 : i32
    %c0_i32_0 = arith.constant 0 : i32
    %c0_i32_1 = arith.constant 0 : i32
    return %c0_i32, %c0_i32_0 : i32, i32
  }
  func.func @transform_6(%arg0: i32) -> (i32, i32, i32) {
    %c0_i32 = arith.constant 0 : i32
    %c0_i32_0 = arith.constant 0 : i32
    %c0_i32_1 = arith.constant 0 : i32
    return %arg0, %c0_i32, %c0_i32_0 : i32, i32, i32
  }
}

</mosaic_0001>

<llo_original>
// kernel: tpu_custom_call.1
$region0: #{tpu_custom_call.1}
  #allocation0 [shape = 'u32[]', space=smem, size = 0x4, offset = 0x4, fixed_abs, tag = 'smem constant byte address 0x4 - core index']
  #allocation1 [shape = 'u32[72,128]{1,0:T(1,128)}', space=vmem, size = 0x9000, scoped, tag = 'internal scratch']
  %s0 = inlined_call_operand.hbm [shape: bf16[2,128,256], index: 0, kind: input, shape index: {}]
  %s1 = inlined_call_operand.hbm [shape: bf16[256,256], index: 1, kind: input, shape index: {}]
  %s2 = inlined_call_operand.hbm [shape: bf16[256,256], index: 2, kind: input, shape index: {}]
  %s3 = inlined_call_operand.hbm [shape: bf16[256,256], index: 3, kind: input, shape index: {}]
  %s4 = inlined_call_operand.hbm [shape: bf16[256,256], index: 4, kind: input, shape index: {}]
  %s5 = inlined_call_operand.vmem [shape: f32[1,256], index: 5, kind: input, shape index: {}]
  %s6 = inlined_call_operand.hbm [shape: f32[2,128,256], index: 6, kind: output, shape index: {}]
  %s7 = sld [smem:[#allocation0]]
  $region77: #{tpu_custom_call.1} parent=0
    _
  %s9 = ssub.s32 1, %s7
  %s10 = scalar_select 0, %s9, %s7
  $region1: #{tpu_custom_call.1} parent=0
    #allocation2 [shape = 'u8[131072]{0}', space=vmem, size = 0x20000, scoped, tag = 'input window, operand 0']
    #allocation3 [shape = 's32[2]{0}', space=sflag, size = 0x8, scoped, tag = 'scoped memory for tpu_custom_call.1']
    #allocation4 [shape = 's32[2]{0}', space=sflag, size = 0x8, scoped, tag = 'scoped memory for tpu_custom_call.1']
    #allocation5 [shape = 'u8[131072]{0}', space=vmem, size = 0x20000, scoped, tag = 'input window, operand 1, single buffered']
    #allocation6 [shape = 's32[1]{0}', space=sflag, size = 0x4, scoped, tag = 'scoped memory for tpu_custom_call.1']
    #allocation7 [shape = 'u8[131072]{0}', space=vmem, size = 0x20000, scoped, tag = 'input window, operand 2, single buffered']
    #allocation8 [shape = 'u8[131072]{0}', space=vmem, size = 0x20000, scoped, tag = 'input window, operand 3, single buffered']
    #allocation9 [shape = 's32[1]{0}', space=sflag, size = 0x4, scoped, tag = 'scoped memory for tpu_custom_call.1']
    #allocation10 [shape = 'u8[131072]{0}', space=vmem, size = 0x20000, scoped, tag = 'input window, operand 4, single buffered']
    #allocation11 [shape = 'u8[262144]{0}', space=vmem, size = 0x40000, scoped, tag = 'output window, operand 0']
    %11 = vsyncpa [#allocation3], 0
    %s12 = scalar_lea.sflag [#allocation3], 1
    %13 = vsyncpa %s12, 0
    %14 = vsyncpa [#allocation6], 0
    %15 = vsyncpa [#allocation9], 0
    %16 = vsyncpa [#allocation4], 0
    %s17 = scalar_lea.sflag [#allocation4], 1
    %18 = vsyncpa %s17, 0
    loop: start=0, step=1, limit=4
    $region2: #{tpu_custom_call.1} parent=1 // loop_pre_header
      _
    $region3: #{tpu_custom_call.1} parent=1 // loop_header
      %s20 = sphi 0, %s24
      %p21 = scmp.ge.s32.totalorder %s20, 4
      %s30 = sphi 0, %s32
      %s33 = sphi 0, %s30
      %s34 = sphi 0, %s33
      %s50 = sphi 0, %s34
      %s54 = sphi 0, %s54
      %s56 = sphi 0, %s54
      %s57 = sphi 0, %s56
      %s71 = sphi 0, %s57
      %s75 = sphi 0, %s75
      %s77 = sphi 0, %s75
      %s78 = sphi 0, %s77
      %s92 = sphi 0, %s78
      %s96 = sphi 0, %s96
      %s98 = sphi 0, %s96
      %s99 = sphi 0, %s98
      %s113 = sphi 0, %s99
      %s117 = sphi 0, %s117
      %s119 = sphi 0, %s117
      %s120 = sphi 0, %s119
      %s134 = sphi 0, %s120
      %s138 = sphi 0, %s138
      %s140 = sphi 0, %s138
      %s141 = sphi 0, %s140
      %s155 = sphi 0, %s141
      %s161 = sphi 0, %s163
      %s164 = sphi 0, %s161
      %s165 = sphi 0, %s164
      %s181 = sphi 0, %s165
    $region4: #{tpu_custom_call.1} parent=1 // loop_header_branch
      %23 = sbr.rel (%p21) target = $region8
    $region5: #{tpu_custom_call.1} parent=1 // loop_body
      %s25 = ssub.s32 %s20, 1
      %s26 = ssub.s32 %s20, 2
      %s27 = sadd.s32 %s20, 1
      %s28 = ssub.s32 %s20, %s27
      %p29 = scmp.eq.s32.totalorder %s28, 0
      %s31 = sadd.s32 %s30, 1
      %s32 = scalar_select %p29, %s30, %s31
      %p35 = pneg %p29
      %p36 = scmp.eq.s32.totalorder %s20, 1
      %p37 = por %p35, %p36
      %p38 = scmp.ne.s32.totalorder %s30, %s33
      %p39 = scmp.eq.s32.totalorder %s20, 0
      %p40 = por %p38, %p39
      %p41 = scmp.ne.s32.totalorder %s30, %s33
      %p42 = scmp.eq.s32.totalorder %s25, 1
      %p43 = por %p41, %p42
      %p44 = scmp.ne.s32.totalorder %s33, %s34
      %p45 = scmp.eq.s32.totalorder %s25, 0
      %p46 = por %p44, %p45
      %p47 = scmp.ne.s32.totalorder %s33, %s34
      %p48 = scmp.eq.s32.totalorder %s26, 1
      %p49 = por %p47, %p48
      %p51 = scmp.ne.s32.totalorder %s34, %s50
      %p52 = scmp.eq.s32.totalorder %s26, 0
      %p53 = por %p51, %p52
      %s55 = sadd.s32 %s54, 1
      %p58 = scmp.eq.s32.totalorder %s20, 1
      %p59 = scmp.ne.s32.totalorder %s54, %s56
      %p60 = scmp.eq.s32.totalorder %s20, 0
      %p61 = por %p59, %p60
      %p62 = scmp.ne.s32.totalorder %s54, %s56
      %p63 = scmp.eq.s32.totalorder %s25, 1
      %p64 = por %p62, %p63
      %p65 = scmp.ne.s32.totalorder %s56, %s57
      %p66 = scmp.eq.s32.totalorder %s25, 0
      %p67 = por %p65, %p66
      %p68 = scmp.ne.s32.totalorder %s56, %s57
      %p69 = scmp.eq.s32.totalorder %s26, 1
      %p70 = por %p68, %p69
      %p72 = scmp.ne.s32.totalorder %s57, %s71
      %p73 = scmp.eq.s32.totalorder %s26, 0
      %p74 = por %p72, %p73
      %s76 = sadd.s32 %s75, 1
      %p79 = scmp.eq.s32.totalorder %s20, 1
      %p80 = scmp.ne.s32.totalorder %s75, %s77
      %p81 = scmp.eq.s32.totalorder %s20, 0
      %p82 = por %p80, %p81
      %p83 = scmp.ne.s32.totalorder %s75, %s77
      %p84 = scmp.eq.s32.totalorder %s25, 1
      %p85 = por %p83, %p84
      %p86 = scmp.ne.s32.totalorder %s77, %s78
      %p87 = scmp.eq.s32.totalorder %s25, 0
      %p88 = por %p86, %p87
      %p89 = scmp.ne.s32.totalorder %s77, %s78
      %p90 = scmp.eq.s32.totalorder %s26, 1
      %p91 = por %p89, %p90
      %p93 = scmp.ne.s32.totalorder %s78, %s92
      %p94 = scmp.eq.s32.totalorder %s26, 0
      %p95 = por %p93, %p94
      %s97 = sadd.s32 %s96, 1
      %p100 = scmp.eq.s32.totalorder %s20, 1
      %p101 = scmp.ne.s32.totalorder %s96, %s98
      %p102 = scmp.eq.s32.totalorder %s20, 0
      %p103 = por %p101, %p102
      %p104 = scmp.ne.s32.totalorder %s96, %s98
      %p105 = scmp.eq.s32.totalorder %s25, 1
      %p106 = por %p104, %p105
      %p107 = scmp.ne.s32.totalorder %s98, %s99
      %p108 = scmp.eq.s32.totalorder %s25, 0
      %p109 = por %p107, %p108
      %p110 = scmp.ne.s32.totalorder %s98, %s99
      %p111 = scmp.eq.s32.totalorder %s26, 1
      %p112 = por %p110, %p111
      %p114 = scmp.ne.s32.totalorder %s99, %s113
      %p115 = scmp.eq.s32.totalorder %s26, 0
      %p116 = por %p114, %p115
      %s118 = sadd.s32 %s117, 1
      %p121 = scmp.eq.s32.totalorder %s20, 1
      %p122 = scmp.ne.s32.totalorder %s117, %s119
      %p123 = scmp.eq.s32.totalorder %s20, 0
      %p124 = por %p122, %p123
      %p125 = scmp.ne.s32.totalorder %s117, %s119
      %p126 = scmp.eq.s32.totalorder %s25, 1
      %p127 = por %p125, %p126
      %p128 = scmp.ne.s32.totalorder %s119, %s120
      %p129 = scmp.eq.s32.totalorder %s25, 0
      %p130 = por %p128, %p129
      %p131 = scmp.ne.s32.totalorder %s119, %s120
      %p132 = scmp.eq.s32.totalorder %s26, 1
      %p133 = por %p131, %p132
      %p135 = scmp.ne.s32.totalorder %s120, %s134
      %p136 = scmp.eq.s32.totalorder %s26, 0
      %p137 = por %p135, %p136
      %s139 = sadd.s32 %s138, 1
      %p142 = scmp.eq.s32.totalorder %s20, 1
      %p143 = scmp.ne.s32.totalorder %s138, %s140
      %p144 = scmp.eq.s32.totalorder %s20, 0
      %p145 = por %p143, %p144
      %p146 = scmp.ne.s32.totalorder %s138, %s140
      %p147 = scmp.eq.s32.totalorder %s25, 1
      %p148 = por %p146, %p147
      %p149 = scmp.ne.s32.totalorder %s140, %s141
      %p150 = scmp.eq.s32.totalorder %s25, 0
      %p151 = por %p149, %p150
      %p152 = scmp.ne.s32.totalorder %s140, %s141
      %p153 = scmp.eq.s32.totalorder %s26, 1
      %p154 = por %p152, %p153
      %p156 = scmp.ne.s32.totalorder %s141, %s155
      %p157 = scmp.eq.s32.totalorder %s26, 0
      %p158 = por %p156, %p157
      %s159 = ssub.s32 %s20, %s27
      %p160 = scmp.eq.s32.totalorder %s159, 0
      %s162 = sadd.s32 %s161, 1
      %s163 = scalar_select %p160, %s161, %s162
      %p166 = pneg %p160
      %p167 = scmp.eq.s32.totalorder %s20, 1
      %p168 = por %p166, %p167
      %p169 = scmp.ne.s32.totalorder %s161, %s164
      %p170 = scmp.eq.s32.totalorder %s20, 0
      %p171 = por %p169, %p170
      %p172 = scmp.ne.s32.totalorder %s161, %s164
      %p173 = scmp.eq.s32.totalorder %s25, 1
      %p174 = por %p172, %p173
      %p175 = scmp.ne.s32.totalorder %s164, %s165
      %p176 = scmp.eq.s32.totalorder %s25, 0
      %p177 = por %p175, %p176
      %p178 = scmp.ne.s32.totalorder %s164, %s165
      %p179 = scmp.eq.s32.totalorder %s26, 1
      %p180 = por %p178, %p179
      %p182 = scmp.ne.s32.totalorder %s165, %s181
      %p183 = scmp.eq.s32.totalorder %s26, 0
      %p184 = por %p182, %p183
      %p185 = scmp.le.s32.totalorder 1, %s20
      %p186 = scmp.lt.s32.totalorder %s20, 3
      %p187 = pnand %p185, %p186
      %p188 = pneg %p187
      // Predicated region
      $region9: #{tpu_custom_call.1} parent=5 // pred_check
        _
      $region10: #{tpu_custom_call.1} parent=5 // pred_check_branch
        %190 = sbr.rel (%p187) target = $region12
      $region11: #{tpu_custom_call.1} parent=5 // pred_region
        %s191 = ssub.s32 %s20, 1
        // Predicated region
        $region13: #{tpu_custom_call.1} parent=11 // pred_check
          %p192 = pneg %p67
        $region14: #{tpu_custom_call.1} parent=11 // pred_check_branch
          %194 = sbr.rel (%p192) target = $region16
        $region15: #{tpu_custom_call.1} parent=11 // pred_region
          %196 = vsyncadd [#allocation6], 0
          %s197 = sshll.u32 %s1, 4
          %s198 = int_to_ptr.hbm [resolvable:$true] %s197
          %s199 = sshll.u32 [#allocation5], 4
          %s200 = int_to_ptr.vmem [resolvable:$true] %s199
          %205 = dma.hbm_to_vmem [thread:$0]  %s198, 4096, %s200, [#allocation6], 128, 128, 8
        $region16: #{tpu_custom_call.1} parent=11 // pred_fallthru
          _
        // Predicated region
        $region17: #{tpu_custom_call.1} parent=11 // pred_check
          %p206 = pneg %p88
        $region18: #{tpu_custom_call.1} parent=11 // pred_check_branch
          %208 = sbr.rel (%p206) target = $region20
        $region19: #{tpu_custom_call.1} parent=11 // pred_region
          %210 = vsyncadd [#allocation6], 0
          %s211 = sshll.u32 %s2, 4
          %s212 = int_to_ptr.hbm [resolvable:$true] %s211
          %s213 = sshll.u32 [#allocation7], 4
          %s214 = int_to_ptr.vmem [resolvable:$true] %s213
          %219 = dma.hbm_to_vmem [thread:$0]  %s212, 4096, %s214, [#allocation6], 128, 128, 8
        $region20: #{tpu_custom_call.1} parent=11 // pred_fallthru
          _
        // Predicated region
        $region21: #{tpu_custom_call.1} parent=11 // pred_check
          %p220 = pneg %p109
        $region22: #{tpu_custom_call.1} parent=11 // pred_check_branch
          %222 = sbr.rel (%p220) target = $region24
        $region23: #{tpu_custom_call.1} parent=11 // pred_region
          %224 = vsyncadd [#allocation9], 0
          %s225 = sshll.u32 %s3, 4
          %s226 = int_to_ptr.hbm [resolvable:$true] %s225
          %s227 = sshll.u32 [#allocation8], 4
          %s228 = int_to_ptr.vmem [resolvable:$true] %s227
          %233 = dma.hbm_to_vmem [thread:$0]  %s226, 4096, %s228, [#allocation9], 128, 128, 8
        $region24: #{tpu_custom_call.1} parent=11 // pred_fallthru
          _
        // Predicated region
        $region25: #{tpu_custom_call.1} parent=11 // pred_check
          %p234 = pneg %p130
        $region26: #{tpu_custom_call.1} parent=11 // pred_check_branch
          %236 = sbr.rel (%p234) target = $region28
        $region27: #{tpu_custom_call.1} parent=11 // pred_region
          %238 = vsyncadd [#allocation9], 0
          %s239 = sshll.u32 %s4, 4
          %s240 = int_to_ptr.hbm [resolvable:$true] %s239
          %s241 = sshll.u32 [#allocation10], 4
          %s242 = int_to_ptr.vmem [resolvable:$true] %s241
          %247 = dma.hbm_to_vmem [thread:$0]  %s240, 4096, %s242, [#allocation9], 128, 128, 8
        $region28: #{tpu_custom_call.1} parent=11 // pred_fallthru
          _
        // Predicated region
        $region29: #{tpu_custom_call.1} parent=11 // pred_check
          %p248 = pneg %p151
        $region30: #{tpu_custom_call.1} parent=11 // pred_check_branch
          %250 = sbr.rel (%p248) target = $region32
        $region31: #{tpu_custom_call.1} parent=11 // pred_region
          _
        $region32: #{tpu_custom_call.1} parent=11 // pred_fallthru
          _
      $region12: #{tpu_custom_call.1} parent=5 // pred_fallthru
        _
      %p251 = scmp.lt.s32.totalorder %s20, 2
      // Predicated region
      $region33: #{tpu_custom_call.1} parent=5 // pred_check
        %p252 = pneg %p251
      $region34: #{tpu_custom_call.1} parent=5 // pred_check_branch
        %254 = sbr.rel (%p252) target = $region36
      $region35: #{tpu_custom_call.1} parent=5 // pred_region
        // Predicated region
        $region37: #{tpu_custom_call.1} parent=35 // pred_check
          %p255 = pneg %p40
        $region38: #{tpu_custom_call.1} parent=35 // pred_check_branch
          %257 = sbr.rel (%p255) target = $region40
        $region39: #{tpu_custom_call.1} parent=35 // pred_region
          %s258 = sand.u32 %s30, 1
          %s259 = scalar_lea.sflag [#allocation3], %s258
          %s260 = sand.u32 %s30, 1
          %s261 = smul.addr %s260, 128
          %s262 = scalar_lea.vmem [#allocation2], %s261
          %264 = vsyncadd %s259, 0
          %s265 = smul.addr %s20, 32
          %s266 = smul.addr %s265, 4
          %s267 = scalar_lea.hbm %s0, %s266
          %s268 = sshll.u32 %s267, 4
          %s269 = int_to_ptr.hbm [resolvable:$true] %s268
          %s270 = sshll.u32 %s262, 4
          %s271 = int_to_ptr.vmem [resolvable:$true] %s270
          %276 = dma.hbm_to_vmem [thread:$0]  %s269, 2048, %s271, %s259, 128, 128, 8
        $region40: #{tpu_custom_call.1} parent=35 // pred_fallthru
          _
      $region36: #{tpu_custom_call.1} parent=5 // pred_fallthru
        _
      %p277 = scmp.le.s32.totalorder 1, %s20
      %p278 = scmp.lt.s32.totalorder %s20, 3
      %p279 = pnand %p277, %p278
      %p280 = pneg %p279
      // Predicated region
      $region41: #{tpu_custom_call.1} parent=5 // pred_check
        _
      $region42: #{tpu_custom_call.1} parent=5 // pred_check_branch
        %282 = sbr.rel (%p279) target = $region44
      $region43: #{tpu_custom_call.1} parent=5 // pred_region
        %s283 = ssub.s32 %s20, 1
        %s284 = sand.u32 %s33, 1
        %s285 = scalar_lea.sflag [#allocation3], %s284
        %s286 = sand.u32 %s33, 1
        %s287 = smul.addr %s286, 128
        %s288 = scalar_lea.vmem [#allocation2], %s287
        // Predicated region
        $region45: #{tpu_custom_call.1} parent=43 // pred_check
          %p289 = pneg %p46
        $region46: #{tpu_custom_call.1} parent=43 // pred_check_branch
          %291 = sbr.rel (%p289) target = $region48
        $region47: #{tpu_custom_call.1} parent=43 // pred_region
          %293 = dma.done %s285, 2048
        $region48: #{tpu_custom_call.1} parent=43 // pred_fallthru
          _
        // Predicated region
        $region49: #{tpu_custom_call.1} parent=43 // pred_check
          %p294 = pneg %p67
        $region50: #{tpu_custom_call.1} parent=43 // pred_check_branch
          %296 = sbr.rel (%p294) target = $region52
        $region51: #{tpu_custom_call.1} parent=43 // pred_region
          %298 = dma.done [#allocation6], 4096
        $region52: #{tpu_custom_call.1} parent=43 // pred_fallthru
          _
        // Predicated region
        $region53: #{tpu_custom_call.1} parent=43 // pred_check
          %p299 = pneg %p88
        $region54: #{tpu_custom_call.1} parent=43 // pred_check_branch
          %301 = sbr.rel (%p299) target = $region56
        $region55: #{tpu_custom_call.1} parent=43 // pred_region
          %303 = dma.done [#allocation6], 4096
        $region56: #{tpu_custom_call.1} parent=43 // pred_fallthru
          _
        // Predicated region
        $region57: #{tpu_custom_call.1} parent=43 // pred_check
          %p304 = pneg %p109
        $region58: #{tpu_custom_call.1} parent=43 // pred_check_branch
          %306 = sbr.rel (%p304) target = $region60
        $region59: #{tpu_custom_call.1} parent=43 // pred_region
          %308 = dma.done [#allocation9], 4096
        $region60: #{tpu_custom_call.1} parent=43 // pred_fallthru
          _
        // Predicated region
        $region61: #{tpu_custom_call.1} parent=43 // pred_check
          %p309 = pneg %p130
        $region62: #{tpu_custom_call.1} parent=43 // pred_check_branch
          %311 = sbr.rel (%p309) target = $region64
        $region63: #{tpu_custom_call.1} parent=43 // pred_region
          %313 = dma.done [#allocation9], 4096
        $region64: #{tpu_custom_call.1} parent=43 // pred_fallthru
          _
        %s314 = sand.u32 %s33, 1
        %s315 = scalar_lea.sflag [#allocation3], %s314
        %s316 = sand.u32 %s33, 1
        %s317 = smul.addr %s316, 128
        %s318 = scalar_lea.vmem [#allocation2], %s317
        %p319 = pneg %p46
        %p320 = pneg %p43
        %p321 = pneg %p67
        %p322 = pneg %p64
        %p323 = pneg %p88
        %p324 = pneg %p85
        %p325 = pneg %p109
        %p326 = pneg %p106
        %p327 = pneg %p130
        %p328 = pneg %p127
        %p329 = pneg %p151
        %p330 = pneg %p148
        %p331 = pneg %p177
        %p332 = pneg %p174
        %s333 = sand.u32 %s164, 1
        %s334 = scalar_lea.sflag [#allocation4], %s333
        %s335 = sand.u32 %s164, 1
        %s336 = smul.addr %s335, 256
        %s337 = scalar_lea.vmem [#allocation11], %s336
        %v339 = vld [vmem:[%s288] sm:$0xff]
        %v340 = vld [vmem:[%s288 + $0x8] sm:$0xff]
        %v341 = vld [vmem:[%s288 + $0x10] sm:$0xff]
        %v342 = vld [vmem:[%s288 + $0x18] sm:$0xff]
        %v343 = vld [vmem:[%s288 + $0x20] sm:$0xff]
        %v344 = vld [vmem:[%s288 + $0x28] sm:$0xff]
        %v345 = vld [vmem:[%s288 + $0x30] sm:$0xff]
        %v346 = vld [vmem:[%s288 + $0x38] sm:$0xff]
        %v347 = vld [vmem:[%s288 + $0x40] sm:$0xff]
        %v348 = vld [vmem:[%s288 + $0x48] sm:$0xff]
        %v349 = vld [vmem:[%s288 + $0x50] sm:$0xff]
        %v350 = vld [vmem:[%s288 + $0x58] sm:$0xff]
        %v351 = vld [vmem:[%s288 + $0x60] sm:$0xff]
        %v352 = vld [vmem:[%s288 + $0x68] sm:$0xff]
        %v353 = vld [vmem:[%s288 + $0x70] sm:$0xff]
        %v354 = vld [vmem:[%s288 + $0x78] sm:$0xff]
        %v355 = vld [vmem:[#allocation5] sm:$0xff]
        %v356 = vld [vmem:[#allocation5 + $0x8] sm:$0xff]
        %v357 = vld [vmem:[#allocation5 + $0x10] sm:$0xff]
        %v358 = vld [vmem:[#allocation5 + $0x18] sm:$0xff]
        %v359 = vld [vmem:[#allocation5 + $0x20] sm:$0xff]
        %v360 = vld [vmem:[#allocation5 + $0x28] sm:$0xff]
        %v361 = vld [vmem:[#allocation5 + $0x30] sm:$0xff]
        %v362 = vld [vmem:[#allocation5 + $0x38] sm:$0xff]
        %v363 = vld [vmem:[#allocation5 + $0x40] sm:$0xff]
        %v364 = vld [vmem:[#allocation5 + $0x48] sm:$0xff]
        %v365 = vld [vmem:[#allocation5 + $0x50] sm:$0xff]
        %v366 = vld [vmem:[#allocation5 + $0x58] sm:$0xff]
        %v367 = vld [vmem:[#allocation5 + $0x60] sm:$0xff]
        %v368 = vld [vmem:[#allocation5 + $0x68] sm:$0xff]
        %v369 = vld [vmem:[#allocation5 + $0x70] sm:$0xff]
        %v370 = vld [vmem:[#allocation5 + $0x78] sm:$0xff]
        %v371 = vld [vmem:[#allocation5 + $0x80] sm:$0xff]
        %v372 = vld [vmem:[#allocation5 + $0x88] sm:$0xff]
        %v373 = vld [vmem:[#allocation5 + $0x90] sm:$0xff]
        %v374 = vld [vmem:[#allocation5 + $0x98] sm:$0xff]
        %v375 = vld [vmem:[#allocation5 + $0xa0] sm:$0xff]
        %v376 = vld [vmem:[#allocation5 + $0xa8] sm:$0xff]
        %v377 = vld [vmem:[#allocation5 + $0xb0] sm:$0xff]
        %v378 = vld [vmem:[#allocation5 + $0xb8] sm:$0xff]
        %v379 = vld [vmem:[#allocation5 + $0xc0] sm:$0xff]
        %v380 = vld [vmem:[#allocation5 + $0xc8] sm:$0xff]
        %v381 = vld [vmem:[#allocation5 + $0xd0] sm:$0xff]
        %v382 = vld [vmem:[#allocation5 + $0xd8] sm:$0xff]
        %v383 = vld [vmem:[#allocation5 + $0xe0] sm:$0xff]
        %v384 = vld [vmem:[#allocation5 + $0xe8] sm:$0xff]
        %v385 = vld [vmem:[#allocation5 + $0xf0] sm:$0xff]
        %v386 = vld [vmem:[#allocation5 + $0xf8] sm:$0xff]
        %v403 = vunpack.c.l.b16 %v339
        %v404 = vunpack.c.h.b16 %v339
        %v405 = vunpack.c.l.b16 %v340
        %v406 = vunpack.c.h.b16 %v340
        %v407 = vunpack.c.l.b16 %v341
        %v408 = vunpack.c.h.b16 %v341
        %v409 = vunpack.c.l.b16 %v342
        %v410 = vunpack.c.h.b16 %v342
        %v411 = vunpack.c.l.b16 %v343
        %v412 = vunpack.c.h.b16 %v343
        %v413 = vunpack.c.l.b16 %v344
        %v414 = vunpack.c.h.b16 %v344
        %v415 = vunpack.c.l.b16 %v345
        %v416 = vunpack.c.h.b16 %v345
        %v417 = vunpack.c.l.b16 %v346
        %v418 = vunpack.c.h.b16 %v346
        %v419 = vunpack.c.l.b16 %v347
        %v420 = vunpack.c.h.b16 %v347
        %v421 = vunpack.c.l.b16 %v348
        %v422 = vunpack.c.h.b16 %v348
        %v423 = vunpack.c.l.b16 %v349
        %v424 = vunpack.c.h.b16 %v349
        %v425 = vunpack.c.l.b16 %v350
        %v426 = vunpack.c.h.b16 %v350
        %v427 = vunpack.c.l.b16 %v351
        %v428 = vunpack.c.h.b16 %v351
        %v429 = vunpack.c.l.b16 %v352
        %v430 = vunpack.c.h.b16 %v352
        %v431 = vunpack.c.l.b16 %v353
        %v432 = vunpack.c.h.b16 %v353
        %v433 = vunpack.c.l.b16 %v354
        %v434 = vunpack.c.h.b16 %v354
        %v435 = vpack.c.b16 %v405, %v403
        %v436 = vpack.c.b16 %v406, %v404
        %v437 = vpack.c.b16 %v409, %v407
        %v438 = vpack.c.b16 %v410, %v408
        %v439 = vpack.c.b16 %v413, %v411
        %v440 = vpack.c.b16 %v414, %v412
        %v441 = vpack.c.b16 %v417, %v415
        %v442 = vpack.c.b16 %v418, %v416
        %v443 = vpack.c.b16 %v421, %v419
        %v444 = vpack.c.b16 %v422, %v420
        %v445 = vpack.c.b16 %v425, %v423
        %v446 = vpack.c.b16 %v426, %v424
        %v447 = vpack.c.b16 %v429, %v427
        %v448 = vpack.c.b16 %v430, %v428
        %v449 = vpack.c.b16 %v433, %v431
        %v450 = vpack.c.b16 %v434, %v432
        %v499 = vunpack.c.l.b16 %v355
        %v500 = vunpack.c.h.b16 %v355
        %v501 = vunpack.c.l.b16 %v356
        %v502 = vunpack.c.h.b16 %v356
        %v503 = vunpack.c.l.b16 %v357
        %v504 = vunpack.c.h.b16 %v357
        %v505 = vunpack.c.l.b16 %v358
        %v506 = vunpack.c.h.b16 %v358
        %v507 = vunpack.c.l.b16 %v359
        %v508 = vunpack.c.h.b16 %v359
        %v509 = vunpack.c.l.b16 %v360
        %v510 = vunpack.c.h.b16 %v360
        %v511 = vunpack.c.l.b16 %v361
        %v512 = vunpack.c.h.b16 %v361
        %v513 = vunpack.c.l.b16 %v362
        %v514 = vunpack.c.h.b16 %v362
        %v515 = vunpack.c.l.b16 %v363
        %v516 = vunpack.c.h.b16 %v363
        %v517 = vunpack.c.l.b16 %v364
        %v518 = vunpack.c.h.b16 %v364
        %v519 = vunpack.c.l.b16 %v365
        %v520 = vunpack.c.h.b16 %v365
        %v521 = vunpack.c.l.b16 %v366
        %v522 = vunpack.c.h.b16 %v366
        %v523 = vunpack.c.l.b16 %v367
        %v524 = vunpack.c.h.b16 %v367
        %v525 = vunpack.c.l.b16 %v368
        %v526 = vunpack.c.h.b16 %v368
        %v527 = vunpack.c.l.b16 %v369
        %v528 = vunpack.c.h.b16 %v369
        %v529 = vunpack.c.l.b16 %v370
        %v530 = vunpack.c.h.b16 %v370
        %v531 = vunpack.c.l.b16 %v371
        %v532 = vunpack.c.h.b16 %v371
        %v533 = vunpack.c.l.b16 %v372
        %v534 = vunpack.c.h.b16 %v372
        %v535 = vunpack.c.l.b16 %v373
        %v536 = vunpack.c.h.b16 %v373
        %v537 = vunpack.c.l.b16 %v374
        %v538 = vunpack.c.h.b16 %v374
        %v539 = vunpack.c.l.b16 %v375
        %v540 = vunpack.c.h.b16 %v375
        %v541 = vunpack.c.l.b16 %v376
        %v542 = vunpack.c.h.b16 %v376
        %v543 = vunpack.c.l.b16 %v377
        %v544 = vunpack.c.h.b16 %v377
        %v545 = vunpack.c.l.b16 %v378
        %v546 = vunpack.c.h.b16 %v378
        %v547 = vunpack.c.l.b16 %v379
        %v548 = vunpack.c.h.b16 %v379
        %v549 = vunpack.c.l.b16 %v380
        %v550 = vunpack.c.h.b16 %v380
        %v551 = vunpack.c.l.b16 %v381
        %v552 = vunpack.c.h.b16 %v381
        %v553 = vunpack.c.l.b16 %v382
        %v554 = vunpack.c.h.b16 %v382
        %v555 = vunpack.c.l.b16 %v383
        %v556 = vunpack.c.h.b16 %v383
        %v557 = vunpack.c.l.b16 %v384
        %v558 = vunpack.c.h.b16 %v384
        %v559 = vunpack.c.l.b16 %v385
        %v560 = vunpack.c.h.b16 %v385
        %v561 = vunpack.c.l.b16 %v386
        %v562 = vunpack.c.h.b16 %v386
        %v563 = vpack.c.b16 %v501, %v499
        %v564 = vpack.c.b16 %v502, %v500
        %v565 = vpack.c.b16 %v505, %v503
        %v566 = vpack.c.b16 %v506, %v504
        %v567 = vpack.c.b16 %v509, %v507
        %v568 = vpack.c.b16 %v510, %v508
        %v569 = vpack.c.b16 %v513, %v511
        %v570 = vpack.c.b16 %v514, %v512
        %v571 = vpack.c.b16 %v517, %v515
        %v572 = vpack.c.b16 %v518, %v516
        %v573 = vpack.c.b16 %v521, %v519
        %v574 = vpack.c.b16 %v522, %v520
        %v575 = vpack.c.b16 %v525, %v523
        %v576 = vpack.c.b16 %v526, %v524
        %v577 = vpack.c.b16 %v529, %v527
        %v578 = vpack.c.b16 %v530, %v528
        %v579 = vpack.c.b16 %v533, %v531
        %v580 = vpack.c.b16 %v534, %v532
        %v581 = vpack.c.b16 %v537, %v535
        %v582 = vpack.c.b16 %v538, %v536
        %v583 = vpack.c.b16 %v541, %v539
        %v584 = vpack.c.b16 %v542, %v540
        %v585 = vpack.c.b16 %v545, %v543
        %v586 = vpack.c.b16 %v546, %v544
        %v587 = vpack.c.b16 %v549, %v547
        %v588 = vpack.c.b16 %v550, %v548
        %v589 = vpack.c.b16 %v553, %v551
        %v590 = vpack.c.b16 %v554, %v552
        %v591 = vpack.c.b16 %v557, %v555
        %v592 = vpack.c.b16 %v558, %v556
        %v593 = vpack.c.b16 %v561, %v559
        %v594 = vpack.c.b16 %v562, %v560
        %627 = vmatpush.bf16.msra.mxu0 %v577
        %628 = vmatpush.bf16.msra.mxu0 %v575
        %629 = vmatpush.bf16.msra.mxu0 %v573
        %630 = vmatpush.bf16.msra.mxu0 %v571
        %631 = vmatpush.bf16.msra.mxu0 %v569
        %632 = vmatpush.bf16.msra.mxu0 %v567
        %633 = vmatpush.bf16.msra.mxu0 %v565
        %634 = vmatpush.bf16.msra.mxu0 %v563
        %635 = vmatmul.bf16.gmra.mxu0 %v435
        %v636 = vpop.f32.mrf.mxu0
        %v637 = vadd.f32 0.0, %v636
        %v638 = vpop.f32.mrf.mxu0
        %v639 = vadd.f32 0.0, %v638
        %640 = vmatmul.bf16.gmra.mxu0 %v437
        %v641 = vpop.f32.mrf.mxu0
        %v642 = vadd.f32 0.0, %v641
        %v643 = vpop.f32.mrf.mxu0
        %v644 = vadd.f32 0.0, %v643
        %645 = vmatmul.bf16.gmra.mxu0 %v439
        %v646 = vpop.f32.mrf.mxu0
        %v647 = vadd.f32 0.0, %v646
        %v648 = vpop.f32.mrf.mxu0
        %v649 = vadd.f32 0.0, %v648
        %650 = vmatmul.bf16.gmra.mxu0 %v441
        %v651 = vpop.f32.mrf.mxu0
        %v652 = vadd.f32 0.0, %v651
        %v653 = vpop.f32.mrf.mxu0
        %v654 = vadd.f32 0.0, %v653
        %655 = vmatmul.bf16.gmra.mxu0 %v443
        %v656 = vpop.f32.mrf.mxu0
        %v657 = vadd.f32 0.0, %v656
        %v658 = vpop.f32.mrf.mxu0
        %v659 = vadd.f32 0.0, %v658
        %660 = vmatmul.bf16.gmra.mxu0 %v445
        %v661 = vpop.f32.mrf.mxu0
        %v662 = vadd.f32 0.0, %v661
        %v663 = vpop.f32.mrf.mxu0
        %v664 = vadd.f32 0.0, %v663
        %665 = vmatmul.bf16.gmra.mxu0 %v447
        %v666 = vpop.f32.mrf.mxu0
        %v667 = vadd.f32 0.0, %v666
        %v668 = vpop.f32.mrf.mxu0
        %v669 = vadd.f32 0.0, %v668
        %670 = vmatmul.bf16.gmra.mxu0 %v449
        %v671 = vpop.f32.mrf.mxu0
        %v672 = vadd.f32 0.0, %v671
        %v673 = vpop.f32.mrf.mxu0
        %v674 = vadd.f32 0.0, %v673
        %675 = vdwg.mxu0
        %676 = vmatpush.bf16.msra.mxu0 %v593
        %677 = vmatpush.bf16.msra.mxu0 %v591
        %678 = vmatpush.bf16.msra.mxu0 %v589
        %679 = vmatpush.bf16.msra.mxu0 %v587
        %680 = vmatpush.bf16.msra.mxu0 %v585
        %681 = vmatpush.bf16.msra.mxu0 %v583
        %682 = vmatpush.bf16.msra.mxu0 %v581
        %683 = vmatpush.bf16.msra.mxu0 %v579
        %684 = vmatmul.bf16.gmra.mxu0 %v436
        %v685 = vpop.f32.mrf.mxu0
        %v686 = vadd.f32 %v637, %v685
        %v687 = vpop.f32.mrf.mxu0
        %v688 = vadd.f32 %v639, %v687
        %689 = vmatmul.bf16.gmra.mxu0 %v438
        %v690 = vpop.f32.mrf.mxu0
        %v691 = vadd.f32 %v642, %v690
        %v692 = vpop.f32.mrf.mxu0
        %v693 = vadd.f32 %v644, %v692
        %694 = vmatmul.bf16.gmra.mxu0 %v440
        %v695 = vpop.f32.mrf.mxu0
        %v696 = vadd.f32 %v647, %v695
        %v697 = vpop.f32.mrf.mxu0
        %v698 = vadd.f32 %v649, %v697
        %699 = vmatmul.bf16.gmra.mxu0 %v442
        %v700 = vpop.f32.mrf.mxu0
        %v701 = vadd.f32 %v652, %v700
        %v702 = vpop.f32.mrf.mxu0
        %v703 = vadd.f32 %v654, %v702
        %704 = vmatmul.bf16.gmra.mxu0 %v444
        %v705 = vpop.f32.mrf.mxu0
        %v706 = vadd.f32 %v657, %v705
        %v707 = vpop.f32.mrf.mxu0
        %v708 = vadd.f32 %v659, %v707
        %709 = vmatmul.bf16.gmra.mxu0 %v446
        %v710 = vpop.f32.mrf.mxu0
        %v711 = vadd.f32 %v662, %v710
        %v712 = vpop.f32.mrf.mxu0
        %v713 = vadd.f32 %v664, %v712
        %714 = vmatmul.bf16.gmra.mxu0 %v448
        %v715 = vpop.f32.mrf.mxu0
        %v716 = vadd.f32 %v667, %v715
        %v717 = vpop.f32.mrf.mxu0
        %v718 = vadd.f32 %v669, %v717
        %719 = vmatmul.bf16.gmra.mxu0 %v450
        %v720 = vpop.f32.mrf.mxu0
        %v721 = vadd.f32 %v672, %v720
        %v722 = vpop.f32.mrf.mxu0
        %v723 = vadd.f32 %v674, %v722
        %724 = vdwg.mxu0
        %725 = vmatpush.bf16.msra.mxu0 %v578
        %726 = vmatpush.bf16.msra.mxu0 %v576
        %727 = vmatpush.bf16.msra.mxu0 %v574
        %728 = vmatpush.bf16.msra.mxu0 %v572
        %729 = vmatpush.bf16.msra.mxu0 %v570
        %730 = vmatpush.bf16.msra.mxu0 %v568
        %731 = vmatpush.bf16.msra.mxu0 %v566
        %732 = vmatpush.bf16.msra.mxu0 %v564
        %733 = vmatmul.bf16.gmra.mxu0 %v435
        %v734 = vpop.f32.mrf.mxu0
        %v735 = vadd.f32 0.0, %v734
        %v736 = vpop.f32.mrf.mxu0
        %v737 = vadd.f32 0.0, %v736
        %738 = vmatmul.bf16.gmra.mxu0 %v437
        %v739 = vpop.f32.mrf.mxu0
        %v740 = vadd.f32 0.0, %v739
        %v741 = vpop.f32.mrf.mxu0
        %v742 = vadd.f32 0.0, %v741
        %743 = vmatmul.bf16.gmra.mxu0 %v439
        %v744 = vpop.f32.mrf.mxu0
        %v745 = vadd.f32 0.0, %v744
        %v746 = vpop.f32.mrf.mxu0
        %v747 = vadd.f32 0.0, %v746
        %748 = vmatmul.bf16.gmra.mxu0 %v441
        %v749 = vpop.f32.mrf.mxu0
        %v750 = vadd.f32 0.0, %v749
        %v751 = vpop.f32.mrf.mxu0
        %v752 = vadd.f32 0.0, %v751
        %753 = vmatmul.bf16.gmra.mxu0 %v443
        %v754 = vpop.f32.mrf.mxu0
        %v755 = vadd.f32 0.0, %v754
        %v756 = vpop.f32.mrf.mxu0
        %v757 = vadd.f32 0.0, %v756
        %758 = vmatmul.bf16.gmra.mxu0 %v445
        %v759 = vpop.f32.mrf.mxu0
        %v760 = vadd.f32 0.0, %v759
        %v761 = vpop.f32.mrf.mxu0
        %v762 = vadd.f32 0.0, %v761
        %763 = vmatmul.bf16.gmra.mxu0 %v447
        %v764 = vpop.f32.mrf.mxu0
        %v765 = vadd.f32 0.0, %v764
        %v766 = vpop.f32.mrf.mxu0
        %v767 = vadd.f32 0.0, %v766
        %768 = vmatmul.bf16.gmra.mxu0 %v449
        %v769 = vpop.f32.mrf.mxu0
        %v770 = vadd.f32 0.0, %v769
        %v771 = vpop.f32.mrf.mxu0
        %v772 = vadd.f32 0.0, %v771
        %773 = vdwg.mxu0
        %774 = vmatpush.bf16.msra.mxu0 %v594
        %775 = vmatpush.bf16.msra.mxu0 %v592
        %776 = vmatpush.bf16.msra.mxu0 %v590
        %777 = vmatpush.bf16.msra.mxu0 %v588
        %778 = vmatpush.bf16.msra.mxu0 %v586
        %779 = vmatpush.bf16.msra.mxu0 %v584
        %780 = vmatpush.bf16.msra.mxu0 %v582
        %781 = vmatpush.bf16.msra.mxu0 %v580
        %782 = vmatmul.bf16.gmra.mxu0 %v436
        %v783 = vpop.f32.mrf.mxu0
        %v784 = vadd.f32 %v735, %v783
        %v785 = vpop.f32.mrf.mxu0
        %v786 = vadd.f32 %v737, %v785
        %787 = vmatmul.bf16.gmra.mxu0 %v438
        %v788 = vpop.f32.mrf.mxu0
        %v789 = vadd.f32 %v740, %v788
        %v790 = vpop.f32.mrf.mxu0
        %v791 = vadd.f32 %v742, %v790
        %792 = vmatmul.bf16.gmra.mxu0 %v440
        %v793 = vpop.f32.mrf.mxu0
        %v794 = vadd.f32 %v745, %v793
        %v795 = vpop.f32.mrf.mxu0
        %v796 = vadd.f32 %v747, %v795
        %797 = vmatmul.bf16.gmra.mxu0 %v442
        %v798 = vpop.f32.mrf.mxu0
        %v799 = vadd.f32 %v750, %v798
        %v800 = vpop.f32.mrf.mxu0
        %v801 = vadd.f32 %v752, %v800
        %802 = vmatmul.bf16.gmra.mxu0 %v444
        %v803 = vpop.f32.mrf.mxu0
        %v804 = vadd.f32 %v755, %v803
        %v805 = vpop.f32.mrf.mxu0
        %v806 = vadd.f32 %v757, %v805
        %807 = vmatmul.bf16.gmra.mxu0 %v446
        %v808 = vpop.f32.mrf.mxu0
        %v809 = vadd.f32 %v760, %v808
        %v810 = vpop.f32.mrf.mxu0
        %v811 = vadd.f32 %v762, %v810
        %812 = vmatmul.bf16.gmra.mxu0 %v448
        %v813 = vpop.f32.mrf.mxu0
        %v814 = vadd.f32 %v765, %v813
        %v815 = vpop.f32.mrf.mxu0
        %v816 = vadd.f32 %v767, %v815
        %817 = vmatmul.bf16.gmra.mxu0 %v450
        %v818 = vpop.f32.mrf.mxu0
        %v819 = vadd.f32 %v770, %v818
        %v820 = vpop.f32.mrf.mxu0
        %v821 = vadd.f32 %v772, %v820
        %822 = vdwg.mxu0
        %v823 = vld [vmem:[#allocation7] sm:$0xff]
        %v824 = vld [vmem:[#allocation7 + $0x8] sm:$0xff]
        %v825 = vld [vmem:[#allocation7 + $0x10] sm:$0xff]
        %v826 = vld [vmem:[#allocation7 + $0x18] sm:$0xff]
        %v827 = vld [vmem:[#allocation7 + $0x20] sm:$0xff]
        %v828 = vld [vmem:[#allocation7 + $0x28] sm:$0xff]
        %v829 = vld [vmem:[#allocation7 + $0x30] sm:$0xff]
        %v830 = vld [vmem:[#allocation7 + $0x38] sm:$0xff]
        %v831 = vld [vmem:[#allocation7 + $0x40] sm:$0xff]
        %v832 = vld [vmem:[#allocation7 + $0x48] sm:$0xff]
        %v833 = vld [vmem:[#allocation7 + $0x50] sm:$0xff]
        %v834 = vld [vmem:[#allocation7 + $0x58] sm:$0xff]
        %v835 = vld [vmem:[#allocation7 + $0x60] sm:$0xff]
        %v836 = vld [vmem:[#allocation7 + $0x68] sm:$0xff]
        %v837 = vld [vmem:[#allocation7 + $0x70] sm:$0xff]
        %v838 = vld [vmem:[#allocation7 + $0x78] sm:$0xff]
        %v839 = vld [vmem:[#allocation7 + $0x80] sm:$0xff]
        %v840 = vld [vmem:[#allocation7 + $0x88] sm:$0xff]
        %v841 = vld [vmem:[#allocation7 + $0x90] sm:$0xff]
        %v842 = vld [vmem:[#allocation7 + $0x98] sm:$0xff]
        %v843 = vld [vmem:[#allocation7 + $0xa0] sm:$0xff]
        %v844 = vld [vmem:[#allocation7 + $0xa8] sm:$0xff]
        %v845 = vld [vmem:[#allocation7 + $0xb0] sm:$0xff]
        %v846 = vld [vmem:[#allocation7 + $0xb8] sm:$0xff]
        %v847 = vld [vmem:[#allocation7 + $0xc0] sm:$0xff]
        %v848 = vld [vmem:[#allocation7 + $0xc8] sm:$0xff]
        %v849 = vld [vmem:[#allocation7 + $0xd0] sm:$0xff]
        %v850 = vld [vmem:[#allocation7 + $0xd8] sm:$0xff]
        %v851 = vld [vmem:[#allocation7 + $0xe0] sm:$0xff]
        %v852 = vld [vmem:[#allocation7 + $0xe8] sm:$0xff]
        %v853 = vld [vmem:[#allocation7 + $0xf0] sm:$0xff]
        %v854 = vld [vmem:[#allocation7 + $0xf8] sm:$0xff]
        %v887 = vunpack.c.l.b16 %v823
        %v888 = vunpack.c.h.b16 %v823
        %v889 = vunpack.c.l.b16 %v824
        %v890 = vunpack.c.h.b16 %v824
        %v891 = vunpack.c.l.b16 %v825
        %v892 = vunpack.c.h.b16 %v825
        %v893 = vunpack.c.l.b16 %v826
        %v894 = vunpack.c.h.b16 %v826
        %v895 = vunpack.c.l.b16 %v827
        %v896 = vunpack.c.h.b16 %v827
        %v897 = vunpack.c.l.b16 %v828
        %v898 = vunpack.c.h.b16 %v828
        %v899 = vunpack.c.l.b16 %v829
        %v900 = vunpack.c.h.b16 %v829
        %v901 = vunpack.c.l.b16 %v830
        %v902 = vunpack.c.h.b16 %v830
        %v903 = vunpack.c.l.b16 %v831
        %v904 = vunpack.c.h.b16 %v831
        %v905 = vunpack.c.l.b16 %v832
        %v906 = vunpack.c.h.b16 %v832
        %v907 = vunpack.c.l.b16 %v833
        %v908 = vunpack.c.h.b16 %v833
        %v909 = vunpack.c.l.b16 %v834
        %v910 = vunpack.c.h.b16 %v834
        %v911 = vunpack.c.l.b16 %v835
        %v912 = vunpack.c.h.b16 %v835
        %v913 = vunpack.c.l.b16 %v836
        %v914 = vunpack.c.h.b16 %v836
        %v915 = vunpack.c.l.b16 %v837
        %v916 = vunpack.c.h.b16 %v837
        %v917 = vunpack.c.l.b16 %v838
        %v918 = vunpack.c.h.b16 %v838
        %v919 = vunpack.c.l.b16 %v839
        %v920 = vunpack.c.h.b16 %v839
        %v921 = vunpack.c.l.b16 %v840
        %v922 = vunpack.c.h.b16 %v840
        %v923 = vunpack.c.l.b16 %v841
        %v924 = vunpack.c.h.b16 %v841
        %v925 = vunpack.c.l.b16 %v842
        %v926 = vunpack.c.h.b16 %v842
        %v927 = vunpack.c.l.b16 %v843
        %v928 = vunpack.c.h.b16 %v843
        %v929 = vunpack.c.l.b16 %v844
        %v930 = vunpack.c.h.b16 %v844
        %v931 = vunpack.c.l.b16 %v845
        %v932 = vunpack.c.h.b16 %v845
        %v933 = vunpack.c.l.b16 %v846
        %v934 = vunpack.c.h.b16 %v846
        %v935 = vunpack.c.l.b16 %v847
        %v936 = vunpack.c.h.b16 %v847
        %v937 = vunpack.c.l.b16 %v848
        %v938 = vunpack.c.h.b16 %v848
        %v939 = vunpack.c.l.b16 %v849
        %v940 = vunpack.c.h.b16 %v849
        %v941 = vunpack.c.l.b16 %v850
        %v942 = vunpack.c.h.b16 %v850
        %v943 = vunpack.c.l.b16 %v851
        %v944 = vunpack.c.h.b16 %v851
        %v945 = vunpack.c.l.b16 %v852
        %v946 = vunpack.c.h.b16 %v852
        %v947 = vunpack.c.l.b16 %v853
        %v948 = vunpack.c.h.b16 %v853
        %v949 = vunpack.c.l.b16 %v854
        %v950 = vunpack.c.h.b16 %v854
        %v951 = vpack.c.b16 %v889, %v887
        %v952 = vpack.c.b16 %v890, %v888
        %v953 = vpack.c.b16 %v893, %v891
        %v954 = vpack.c.b16 %v894, %v892
        %v955 = vpack.c.b16 %v897, %v895
        %v956 = vpack.c.b16 %v898, %v896
        %v957 = vpack.c.b16 %v901, %v899
        %v958 = vpack.c.b16 %v902, %v900
        %v959 = vpack.c.b16 %v905, %v903
        %v960 = vpack.c.b16 %v906, %v904
        %v961 = vpack.c.b16 %v909, %v907
        %v962 = vpack.c.b16 %v910, %v908
        %v963 = vpack.c.b16 %v913, %v911
        %v964 = vpack.c.b16 %v914, %v912
        %v965 = vpack.c.b16 %v917, %v915
        %v966 = vpack.c.b16 %v918, %v916
        %v967 = vpack.c.b16 %v921, %v919
        %v968 = vpack.c.b16 %v922, %v920
        %v969 = vpack.c.b16 %v925, %v923
        %v970 = vpack.c.b16 %v926, %v924
        %v971 = vpack.c.b16 %v929, %v927
        %v972 = vpack.c.b16 %v930, %v928
        %v973 = vpack.c.b16 %v933, %v931
        %v974 = vpack.c.b16 %v934, %v932
        %v975 = vpack.c.b16 %v937, %v935
        %v976 = vpack.c.b16 %v938, %v936
        %v977 = vpack.c.b16 %v941, %v939
        %v978 = vpack.c.b16 %v942, %v940
        %v979 = vpack.c.b16 %v945, %v943
        %v980 = vpack.c.b16 %v946, %v944
        %v981 = vpack.c.b16 %v949, %v947
        %v982 = vpack.c.b16 %v950, %v948
        %1015 = vmatpush.bf16.msra.mxu0 %v965
        %1016 = vmatpush.bf16.msra.mxu0 %v963
        %1017 = vmatpush.bf16.msra.mxu0 %v961
        %1018 = vmatpush.bf16.msra.mxu0 %v959
        %1019 = vmatpush.bf16.msra.mxu0 %v957
        %1020 = vmatpush.bf16.msra.mxu0 %v955
        %1021 = vmatpush.bf16.msra.mxu0 %v953
        %1022 = vmatpush.bf16.msra.mxu0 %v951
        %1023 = vmatmul.bf16.gmra.mxu0 %v435
        %v1024 = vpop.f32.mrf.mxu0
        %v1025 = vadd.f32 0.0, %v1024
        %v1026 = vpop.f32.mrf.mxu0
        %v1027 = vadd.f32 0.0, %v1026
        %1028 = vmatmul.bf16.gmra.mxu0 %v437
        %v1029 = vpop.f32.mrf.mxu0
        %v1030 = vadd.f32 0.0, %v1029
        %v1031 = vpop.f32.mrf.mxu0
        %v1032 = vadd.f32 0.0, %v1031
        %1033 = vmatmul.bf16.gmra.mxu0 %v439
        %v1034 = vpop.f32.mrf.mxu0
        %v1035 = vadd.f32 0.0, %v1034
        %v1036 = vpop.f32.mrf.mxu0
        %v1037 = vadd.f32 0.0, %v1036
        %1038 = vmatmul.bf16.gmra.mxu0 %v441
        %v1039 = vpop.f32.mrf.mxu0
        %v1040 = vadd.f32 0.0, %v1039
        %v1041 = vpop.f32.mrf.mxu0
        %v1042 = vadd.f32 0.0, %v1041
        %1043 = vmatmul.bf16.gmra.mxu0 %v443
        %v1044 = vpop.f32.mrf.mxu0
        %v1045 = vadd.f32 0.0, %v1044
        %v1046 = vpop.f32.mrf.mxu0
        %v1047 = vadd.f32 0.0, %v1046
        %1048 = vmatmul.bf16.gmra.mxu0 %v445
        %v1049 = vpop.f32.mrf.mxu0
        %v1050 = vadd.f32 0.0, %v1049
        %v1051 = vpop.f32.mrf.mxu0
        %v1052 = vadd.f32 0.0, %v1051
        %1053 = vmatmul.bf16.gmra.mxu0 %v447
        %v1054 = vpop.f32.mrf.mxu0
        %v1055 = vadd.f32 0.0, %v1054
        %v1056 = vpop.f32.mrf.mxu0
        %v1057 = vadd.f32 0.0, %v1056
        %1058 = vmatmul.bf16.gmra.mxu0 %v449
        %v1059 = vpop.f32.mrf.mxu0
        %v1060 = vadd.f32 0.0, %v1059
        %v1061 = vpop.f32.mrf.mxu0
        %v1062 = vadd.f32 0.0, %v1061
        %1063 = vdwg.mxu0
        %1064 = vmatpush.bf16.msra.mxu0 %v981
        %1065 = vmatpush.bf16.msra.mxu0 %v979
        %1066 = vmatpush.bf16.msra.mxu0 %v977
        %1067 = vmatpush.bf16.msra.mxu0 %v975
        %1068 = vmatpush.bf16.msra.mxu0 %v973
        %1069 = vmatpush.bf16.msra.mxu0 %v971
        %1070 = vmatpush.bf16.msra.mxu0 %v969
        %1071 = vmatpush.bf16.msra.mxu0 %v967
        %1072 = vmatmul.bf16.gmra.mxu0 %v436
        %v1073 = vpop.f32.mrf.mxu0
        %v1074 = vadd.f32 %v1025, %v1073
        %v1075 = vpop.f32.mrf.mxu0
        %v1076 = vadd.f32 %v1027, %v1075
        %1077 = vmatmul.bf16.gmra.mxu0 %v438
        %v1078 = vpop.f32.mrf.mxu0
        %v1079 = vadd.f32 %v1030, %v1078
        %v1080 = vpop.f32.mrf.mxu0
        %v1081 = vadd.f32 %v1032, %v1080
        %1082 = vmatmul.bf16.gmra.mxu0 %v440
        %v1083 = vpop.f32.mrf.mxu0
        %v1084 = vadd.f32 %v1035, %v1083
        %v1085 = vpop.f32.mrf.mxu0
        %v1086 = vadd.f32 %v1037, %v1085
        %1087 = vmatmul.bf16.gmra.mxu0 %v442
        %v1088 = vpop.f32.mrf.mxu0
        %v1089 = vadd.f32 %v1040, %v1088
        %v1090 = vpop.f32.mrf.mxu0
        %v1091 = vadd.f32 %v1042, %v1090
        %1092 = vmatmul.bf16.gmra.mxu0 %v444
        %v1093 = vpop.f32.mrf.mxu0
        %v1094 = vadd.f32 %v1045, %v1093
        %v1095 = vpop.f32.mrf.mxu0
        %v1096 = vadd.f32 %v1047, %v1095
        %1097 = vmatmul.bf16.gmra.mxu0 %v446
        %v1098 = vpop.f32.mrf.mxu0
        %v1099 = vadd.f32 %v1050, %v1098
        %v1100 = vpop.f32.mrf.mxu0
        %v1101 = vadd.f32 %v1052, %v1100
        %1102 = vmatmul.bf16.gmra.mxu0 %v448
        %v1103 = vpop.f32.mrf.mxu0
        %v1104 = vadd.f32 %v1055, %v1103
        %v1105 = vpop.f32.mrf.mxu0
        %v1106 = vadd.f32 %v1057, %v1105
        %1107 = vmatmul.bf16.gmra.mxu0 %v450
        %v1108 = vpop.f32.mrf.mxu0
        %v1109 = vadd.f32 %v1060, %v1108
        %v1110 = vpop.f32.mrf.mxu0
        %v1111 = vadd.f32 %v1062, %v1110
        %1112 = vdwg.mxu0
        %1113 = vmatpush.bf16.msra.mxu0 %v966
        %1114 = vmatpush.bf16.msra.mxu0 %v964
        %1115 = vmatpush.bf16.msra.mxu0 %v962
        %1116 = vmatpush.bf16.msra.mxu0 %v960
        %1117 = vmatpush.bf16.msra.mxu0 %v958
        %1118 = vmatpush.bf16.msra.mxu0 %v956
        %1119 = vmatpush.bf16.msra.mxu0 %v954
        %1120 = vmatpush.bf16.msra.mxu0 %v952
        %1121 = vmatmul.bf16.gmra.mxu0 %v435
        %v1122 = vpop.f32.mrf.mxu0
        %v1123 = vadd.f32 0.0, %v1122
        %v1124 = vpop.f32.mrf.mxu0
        %v1125 = vadd.f32 0.0, %v1124
        %1126 = vmatmul.bf16.gmra.mxu0 %v437
        %v1127 = vpop.f32.mrf.mxu0
        %v1128 = vadd.f32 0.0, %v1127
        %v1129 = vpop.f32.mrf.mxu0
        %v1130 = vadd.f32 0.0, %v1129
        %1131 = vmatmul.bf16.gmra.mxu0 %v439
        %v1132 = vpop.f32.mrf.mxu0
        %v1133 = vadd.f32 0.0, %v1132
        %v1134 = vpop.f32.mrf.mxu0
        %v1135 = vadd.f32 0.0, %v1134
        %1136 = vmatmul.bf16.gmra.mxu0 %v441
        %v1137 = vpop.f32.mrf.mxu0
        %v1138 = vadd.f32 0.0, %v1137
        %v1139 = vpop.f32.mrf.mxu0
        %v1140 = vadd.f32 0.0, %v1139
        %1141 = vmatmul.bf16.gmra.mxu0 %v443
        %v1142 = vpop.f32.mrf.mxu0
        %v1143 = vadd.f32 0.0, %v1142
        %v1144 = vpop.f32.mrf.mxu0
        %v1145 = vadd.f32 0.0, %v1144
        %1146 = vmatmul.bf16.gmra.mxu0 %v445
        %v1147 = vpop.f32.mrf.mxu0
        %v1148 = vadd.f32 0.0, %v1147
        %v1149 = vpop.f32.mrf.mxu0
        %v1150 = vadd.f32 0.0, %v1149
        %1151 = vmatmul.bf16.gmra.mxu0 %v447
        %v1152 = vpop.f32.mrf.mxu0
        %v1153 = vadd.f32 0.0, %v1152
        %v1154 = vpop.f32.mrf.mxu0
        %v1155 = vadd.f32 0.0, %v1154
        %1156 = vmatmul.bf16.gmra.mxu0 %v449
        %v1157 = vpop.f32.mrf.mxu0
        %v1158 = vadd.f32 0.0, %v1157
        %v1159 = vpop.f32.mrf.mxu0
        %v1160 = vadd.f32 0.0, %v1159
        %1161 = vdwg.mxu0
        %1162 = vmatpush.bf16.msra.mxu0 %v982
        %1163 = vmatpush.bf16.msra.mxu0 %v980
        %1164 = vmatpush.bf16.msra.mxu0 %v978
        %1165 = vmatpush.bf16.msra.mxu0 %v976
        %1166 = vmatpush.bf16.msra.mxu0 %v974
        %1167 = vmatpush.bf16.msra.mxu0 %v972
        %1168 = vmatpush.bf16.msra.mxu0 %v970
        %1169 = vmatpush.bf16.msra.mxu0 %v968
        %1170 = vmatmul.bf16.gmra.mxu0 %v436
        %v1171 = vpop.f32.mrf.mxu0
        %v1172 = vadd.f32 %v1123, %v1171
        %v1173 = vpop.f32.mrf.mxu0
        %v1174 = vadd.f32 %v1125, %v1173
        %1175 = vmatmul.bf16.gmra.mxu0 %v438
        %v1176 = vpop.f32.mrf.mxu0
        %v1177 = vadd.f32 %v1128, %v1176
        %v1178 = vpop.f32.mrf.mxu0
        %v1179 = vadd.f32 %v1130, %v1178
        %1180 = vmatmul.bf16.gmra.mxu0 %v440
        %v1181 = vpop.f32.mrf.mxu0
        %v1182 = vadd.f32 %v1133, %v1181
        %v1183 = vpop.f32.mrf.mxu0
        %v1184 = vadd.f32 %v1135, %v1183
        %1185 = vmatmul.bf16.gmra.mxu0 %v442
        %v1186 = vpop.f32.mrf.mxu0
        %v1187 = vadd.f32 %v1138, %v1186
        %v1188 = vpop.f32.mrf.mxu0
        %v1189 = vadd.f32 %v1140, %v1188
        %1190 = vmatmul.bf16.gmra.mxu0 %v444
        %v1191 = vpop.f32.mrf.mxu0
        %v1192 = vadd.f32 %v1143, %v1191
        %v1193 = vpop.f32.mrf.mxu0
        %v1194 = vadd.f32 %v1145, %v1193
        %1195 = vmatmul.bf16.gmra.mxu0 %v446
        %v1196 = vpop.f32.mrf.mxu0
        %v1197 = vadd.f32 %v1148, %v1196
        %v1198 = vpop.f32.mrf.mxu0
        %v1199 = vadd.f32 %v1150, %v1198
        %1200 = vmatmul.bf16.gmra.mxu0 %v448
        %v1201 = vpop.f32.mrf.mxu0
        %v1202 = vadd.f32 %v1153, %v1201
        %v1203 = vpop.f32.mrf.mxu0
        %v1204 = vadd.f32 %v1155, %v1203
        %1205 = vmatmul.bf16.gmra.mxu0 %v450
        %v1206 = vpop.f32.mrf.mxu0
        %v1207 = vadd.f32 %v1158, %v1206
        %v1208 = vpop.f32.mrf.mxu0
        %v1209 = vadd.f32 %v1160, %v1208
        %1210 = vdwg.mxu0
        %v1211 = vld [vmem:[#allocation8] sm:$0xff]
        %v1212 = vld [vmem:[#allocation8 + $0x8] sm:$0xff]
        %v1213 = vld [vmem:[#allocation8 + $0x10] sm:$0xff]
        %v1214 = vld [vmem:[#allocation8 + $0x18] sm:$0xff]
        %v1215 = vld [vmem:[#allocation8 + $0x20] sm:$0xff]
        %v1216 = vld [vmem:[#allocation8 + $0x28] sm:$0xff]
        %v1217 = vld [vmem:[#allocation8 + $0x30] sm:$0xff]
        %v1218 = vld [vmem:[#allocation8 + $0x38] sm:$0xff]
        %v1219 = vld [vmem:[#allocation8 + $0x40] sm:$0xff]
        %v1220 = vld [vmem:[#allocation8 + $0x48] sm:$0xff]
        %v1221 = vld [vmem:[#allocation8 + $0x50] sm:$0xff]
        %v1222 = vld [vmem:[#allocation8 + $0x58] sm:$0xff]
        %v1223 = vld [vmem:[#allocation8 + $0x60] sm:$0xff]
        %v1224 = vld [vmem:[#allocation8 + $0x68] sm:$0xff]
        %v1225 = vld [vmem:[#allocation8 + $0x70] sm:$0xff]
        %v1226 = vld [vmem:[#allocation8 + $0x78] sm:$0xff]
        %v1227 = vld [vmem:[#allocation8 + $0x80] sm:$0xff]
        %v1228 = vld [vmem:[#allocation8 + $0x88] sm:$0xff]
        %v1229 = vld [vmem:[#allocation8 + $0x90] sm:$0xff]
        %v1230 = vld [vmem:[#allocation8 + $0x98] sm:$0xff]
        %v1231 = vld [vmem:[#allocation8 + $0xa0] sm:$0xff]
        %v1232 = vld [vmem:[#allocation8 + $0xa8] sm:$0xff]
        %v1233 = vld [vmem:[#allocation8 + $0xb0] sm:$0xff]
        %v1234 = vld [vmem:[#allocation8 + $0xb8] sm:$0xff]
        %v1235 = vld [vmem:[#allocation8 + $0xc0] sm:$0xff]
        %v1236 = vld [vmem:[#allocation8 + $0xc8] sm:$0xff]
        %v1237 = vld [vmem:[#allocation8 + $0xd0] sm:$0xff]
        %v1238 = vld [vmem:[#allocation8 + $0xd8] sm:$0xff]
        %v1239 = vld [vmem:[#allocation8 + $0xe0] sm:$0xff]
        %v1240 = vld [vmem:[#allocation8 + $0xe8] sm:$0xff]
        %v1241 = vld [vmem:[#allocation8 + $0xf0] sm:$0xff]
        %v1242 = vld [vmem:[#allocation8 + $0xf8] sm:$0xff]
        %v1275 = vunpack.c.l.b16 %v1211
        %v1276 = vunpack.c.h.b16 %v1211
        %v1277 = vunpack.c.l.b16 %v1212
        %v1278 = vunpack.c.h.b16 %v1212
        %v1279 = vunpack.c.l.b16 %v1213
        %v1280 = vunpack.c.h.b16 %v1213
        %v1281 = vunpack.c.l.b16 %v1214
        %v1282 = vunpack.c.h.b16 %v1214
        %v1283 = vunpack.c.l.b16 %v1215
        %v1284 = vunpack.c.h.b16 %v1215
        %v1285 = vunpack.c.l.b16 %v1216
        %v1286 = vunpack.c.h.b16 %v1216
        %v1287 = vunpack.c.l.b16 %v1217
        %v1288 = vunpack.c.h.b16 %v1217
        %v1289 = vunpack.c.l.b16 %v1218
        %v1290 = vunpack.c.h.b16 %v1218
        %v1291 = vunpack.c.l.b16 %v1219
        %v1292 = vunpack.c.h.b16 %v1219
        %v1293 = vunpack.c.l.b16 %v1220
        %v1294 = vunpack.c.h.b16 %v1220
        %v1295 = vunpack.c.l.b16 %v1221
        %v1296 = vunpack.c.h.b16 %v1221
        %v1297 = vunpack.c.l.b16 %v1222
        %v1298 = vunpack.c.h.b16 %v1222
        %v1299 = vunpack.c.l.b16 %v1223
        %v1300 = vunpack.c.h.b16 %v1223
        %v1301 = vunpack.c.l.b16 %v1224
        %v1302 = vunpack.c.h.b16 %v1224
        %v1303 = vunpack.c.l.b16 %v1225
        %v1304 = vunpack.c.h.b16 %v1225
        %v1305 = vunpack.c.l.b16 %v1226
        %v1306 = vunpack.c.h.b16 %v1226
        %v1307 = vunpack.c.l.b16 %v1227
        %v1308 = vunpack.c.h.b16 %v1227
        %v1309 = vunpack.c.l.b16 %v1228
        %v1310 = vunpack.c.h.b16 %v1228
        %v1311 = vunpack.c.l.b16 %v1229
        %v1312 = vunpack.c.h.b16 %v1229
        %v1313 = vunpack.c.l.b16 %v1230
        %v1314 = vunpack.c.h.b16 %v1230
        %v1315 = vunpack.c.l.b16 %v1231
        %v1316 = vunpack.c.h.b16 %v1231
        %v1317 = vunpack.c.l.b16 %v1232
        %v1318 = vunpack.c.h.b16 %v1232
        %v1319 = vunpack.c.l.b16 %v1233
        %v1320 = vunpack.c.h.b16 %v1233
        %v1321 = vunpack.c.l.b16 %v1234
        %v1322 = vunpack.c.h.b16 %v1234
        %v1323 = vunpack.c.l.b16 %v1235
        %v1324 = vunpack.c.h.b16 %v1235
        %v1325 = vunpack.c.l.b16 %v1236
        %v1326 = vunpack.c.h.b16 %v1236
        %v1327 = vunpack.c.l.b16 %v1237
        %v1328 = vunpack.c.h.b16 %v1237
        %v1329 = vunpack.c.l.b16 %v1238
        %v1330 = vunpack.c.h.b16 %v1238
        %v1331 = vunpack.c.l.b16 %v1239
        %v1332 = vunpack.c.h.b16 %v1239
        %v1333 = vunpack.c.l.b16 %v1240
        %v1334 = vunpack.c.h.b16 %v1240
        %v1335 = vunpack.c.l.b16 %v1241
        %v1336 = vunpack.c.h.b16 %v1241
        %v1337 = vunpack.c.l.b16 %v1242
        %v1338 = vunpack.c.h.b16 %v1242
        %v1339 = vpack.c.b16 %v1277, %v1275
        %v1340 = vpack.c.b16 %v1278, %v1276
        %v1341 = vpack.c.b16 %v1281, %v1279
        %v1342 = vpack.c.b16 %v1282, %v1280
        %v1343 = vpack.c.b16 %v1285, %v1283
        %v1344 = vpack.c.b16 %v1286, %v1284
        %v1345 = vpack.c.b16 %v1289, %v1287
        %v1346 = vpack.c.b16 %v1290, %v1288
        %v1347 = vpack.c.b16 %v1293, %v1291
        %v1348 = vpack.c.b16 %v1294, %v1292
        %v1349 = vpack.c.b16 %v1297, %v1295
        %v1350 = vpack.c.b16 %v1298, %v1296
        %v1351 = vpack.c.b16 %v1301, %v1299
        %v1352 = vpack.c.b16 %v1302, %v1300
        %v1353 = vpack.c.b16 %v1305, %v1303
        %v1354 = vpack.c.b16 %v1306, %v1304
        %v1355 = vpack.c.b16 %v1309, %v1307
        %v1356 = vpack.c.b16 %v1310, %v1308
        %v1357 = vpack.c.b16 %v1313, %v1311
        %v1358 = vpack.c.b16 %v1314, %v1312
        %v1359 = vpack.c.b16 %v1317, %v1315
        %v1360 = vpack.c.b16 %v1318, %v1316
        %v1361 = vpack.c.b16 %v1321, %v1319
        %v1362 = vpack.c.b16 %v1322, %v1320
        %v1363 = vpack.c.b16 %v1325, %v1323
        %v1364 = vpack.c.b16 %v1326, %v1324
        %v1365 = vpack.c.b16 %v1329, %v1327
        %v1366 = vpack.c.b16 %v1330, %v1328
        %v1367 = vpack.c.b16 %v1333, %v1331
        %v1368 = vpack.c.b16 %v1334, %v1332
        %v1369 = vpack.c.b16 %v1337, %v1335
        %v1370 = vpack.c.b16 %v1338, %v1336
        %1403 = vmatpush.bf16.msra.mxu0 %v1353
        %1404 = vmatpush.bf16.msra.mxu0 %v1351
        %1405 = vmatpush.bf16.msra.mxu0 %v1349
        %1406 = vmatpush.bf16.msra.mxu0 %v1347
        %1407 = vmatpush.bf16.msra.mxu0 %v1345
        %1408 = vmatpush.bf16.msra.mxu0 %v1343
        %1409 = vmatpush.bf16.msra.mxu0 %v1341
        %1410 = vmatpush.bf16.msra.mxu0 %v1339
        %1411 = vmatmul.bf16.gmra.mxu0 %v435
        %v1412 = vpop.f32.mrf.mxu0
        %v1413 = vadd.f32 0.0, %v1412
        %v1414 = vpop.f32.mrf.mxu0
        %v1415 = vadd.f32 0.0, %v1414
        %1416 = vmatmul.bf16.gmra.mxu0 %v437
        %v1417 = vpop.f32.mrf.mxu0
        %v1418 = vadd.f32 0.0, %v1417
        %v1419 = vpop.f32.mrf.mxu0
        %v1420 = vadd.f32 0.0, %v1419
        %1421 = vmatmul.bf16.gmra.mxu0 %v439
        %v1422 = vpop.f32.mrf.mxu0
        %v1423 = vadd.f32 0.0, %v1422
        %v1424 = vpop.f32.mrf.mxu0
        %v1425 = vadd.f32 0.0, %v1424
        %1426 = vmatmul.bf16.gmra.mxu0 %v441
        %v1427 = vpop.f32.mrf.mxu0
        %v1428 = vadd.f32 0.0, %v1427
        %v1429 = vpop.f32.mrf.mxu0
        %v1430 = vadd.f32 0.0, %v1429
        %1431 = vmatmul.bf16.gmra.mxu0 %v443
        %v1432 = vpop.f32.mrf.mxu0
        %v1433 = vadd.f32 0.0, %v1432
        %v1434 = vpop.f32.mrf.mxu0
        %v1435 = vadd.f32 0.0, %v1434
        %1436 = vmatmul.bf16.gmra.mxu0 %v445
        %v1437 = vpop.f32.mrf.mxu0
        %v1438 = vadd.f32 0.0, %v1437
        %v1439 = vpop.f32.mrf.mxu0
        %v1440 = vadd.f32 0.0, %v1439
        %1441 = vmatmul.bf16.gmra.mxu0 %v447
        %v1442 = vpop.f32.mrf.mxu0
        %v1443 = vadd.f32 0.0, %v1442
        %v1444 = vpop.f32.mrf.mxu0
        %v1445 = vadd.f32 0.0, %v1444
        %1446 = vmatmul.bf16.gmra.mxu0 %v449
        %v1447 = vpop.f32.mrf.mxu0
        %v1448 = vadd.f32 0.0, %v1447
        %v1449 = vpop.f32.mrf.mxu0
        %v1450 = vadd.f32 0.0, %v1449
        %1451 = vdwg.mxu0
        %1452 = vmatpush.bf16.msra.mxu0 %v1369
        %1453 = vmatpush.bf16.msra.mxu0 %v1367
        %1454 = vmatpush.bf16.msra.mxu0 %v1365
        %1455 = vmatpush.bf16.msra.mxu0 %v1363
        %1456 = vmatpush.bf16.msra.mxu0 %v1361
        %1457 = vmatpush.bf16.msra.mxu0 %v1359
        %1458 = vmatpush.bf16.msra.mxu0 %v1357
        %1459 = vmatpush.bf16.msra.mxu0 %v1355
        %1460 = vmatmul.bf16.gmra.mxu0 %v436
        %v1461 = vpop.f32.mrf.mxu0
        %v1462 = vadd.f32 %v1413, %v1461
        %v1463 = vpop.f32.mrf.mxu0
        %v1464 = vadd.f32 %v1415, %v1463
        %1465 = vmatmul.bf16.gmra.mxu0 %v438
        %v1466 = vpop.f32.mrf.mxu0
        %v1467 = vadd.f32 %v1418, %v1466
        %v1468 = vpop.f32.mrf.mxu0
        %v1469 = vadd.f32 %v1420, %v1468
        %1470 = vmatmul.bf16.gmra.mxu0 %v440
        %v1471 = vpop.f32.mrf.mxu0
        %v1472 = vadd.f32 %v1423, %v1471
        %v1473 = vpop.f32.mrf.mxu0
        %v1474 = vadd.f32 %v1425, %v1473
        %1475 = vmatmul.bf16.gmra.mxu0 %v442
        %v1476 = vpop.f32.mrf.mxu0
        %v1477 = vadd.f32 %v1428, %v1476
        %v1478 = vpop.f32.mrf.mxu0
        %v1479 = vadd.f32 %v1430, %v1478
        %1480 = vmatmul.bf16.gmra.mxu0 %v444
        %v1481 = vpop.f32.mrf.mxu0
        %v1482 = vadd.f32 %v1433, %v1481
        %v1483 = vpop.f32.mrf.mxu0
        %v1484 = vadd.f32 %v1435, %v1483
        %1485 = vmatmul.bf16.gmra.mxu0 %v446
        %v1486 = vpop.f32.mrf.mxu0
        %v1487 = vadd.f32 %v1438, %v1486
        %v1488 = vpop.f32.mrf.mxu0
        %v1489 = vadd.f32 %v1440, %v1488
        %1490 = vmatmul.bf16.gmra.mxu0 %v448
        %v1491 = vpop.f32.mrf.mxu0
        %v1492 = vadd.f32 %v1443, %v1491
        %v1493 = vpop.f32.mrf.mxu0
        %v1494 = vadd.f32 %v1445, %v1493
        %1495 = vmatmul.bf16.gmra.mxu0 %v450
        %v1496 = vpop.f32.mrf.mxu0
        %v1497 = vadd.f32 %v1448, %v1496
        %v1498 = vpop.f32.mrf.mxu0
        %v1499 = vadd.f32 %v1450, %v1498
        %1500 = vdwg.mxu0
        %1501 = vmatpush.bf16.msra.mxu0 %v1354
        %1502 = vmatpush.bf16.msra.mxu0 %v1352
        %1503 = vmatpush.bf16.msra.mxu0 %v1350
        %1504 = vmatpush.bf16.msra.mxu0 %v1348
        %1505 = vmatpush.bf16.msra.mxu0 %v1346
        %1506 = vmatpush.bf16.msra.mxu0 %v1344
        %1507 = vmatpush.bf16.msra.mxu0 %v1342
        %1508 = vmatpush.bf16.msra.mxu0 %v1340
        %1509 = vmatmul.bf16.gmra.mxu0 %v435
        %v1510 = vpop.f32.mrf.mxu0
        %v1511 = vadd.f32 0.0, %v1510
        %v1512 = vpop.f32.mrf.mxu0
        %v1513 = vadd.f32 0.0, %v1512
        %1514 = vmatmul.bf16.gmra.mxu0 %v437
        %v1515 = vpop.f32.mrf.mxu0
        %v1516 = vadd.f32 0.0, %v1515
        %v1517 = vpop.f32.mrf.mxu0
        %v1518 = vadd.f32 0.0, %v1517
        %1519 = vmatmul.bf16.gmra.mxu0 %v439
        %v1520 = vpop.f32.mrf.mxu0
        %v1521 = vadd.f32 0.0, %v1520
        %v1522 = vpop.f32.mrf.mxu0
        %v1523 = vadd.f32 0.0, %v1522
        %1524 = vmatmul.bf16.gmra.mxu0 %v441
        %v1525 = vpop.f32.mrf.mxu0
        %v1526 = vadd.f32 0.0, %v1525
        %v1527 = vpop.f32.mrf.mxu0
        %v1528 = vadd.f32 0.0, %v1527
        %1529 = vmatmul.bf16.gmra.mxu0 %v443
        %v1530 = vpop.f32.mrf.mxu0
        %v1531 = vadd.f32 0.0, %v1530
        %v1532 = vpop.f32.mrf.mxu0
        %v1533 = vadd.f32 0.0, %v1532
        %1534 = vmatmul.bf16.gmra.mxu0 %v445
        %v1535 = vpop.f32.mrf.mxu0
        %v1536 = vadd.f32 0.0, %v1535
        %v1537 = vpop.f32.mrf.mxu0
        %v1538 = vadd.f32 0.0, %v1537
        %1539 = vmatmul.bf16.gmra.mxu0 %v447
        %v1540 = vpop.f32.mrf.mxu0
        %v1541 = vadd.f32 0.0, %v1540
        %v1542 = vpop.f32.mrf.mxu0
        %v1543 = vadd.f32 0.0, %v1542
        %1544 = vmatmul.bf16.gmra.mxu0 %v449
        %v1545 = vpop.f32.mrf.mxu0
        %v1546 = vadd.f32 0.0, %v1545
        %v1547 = vpop.f32.mrf.mxu0
        %v1548 = vadd.f32 0.0, %v1547
        %1549 = vdwg.mxu0
        %1550 = vmatpush.bf16.msra.mxu0 %v1370
        %1551 = vmatpush.bf16.msra.mxu0 %v1368
        %1552 = vmatpush.bf16.msra.mxu0 %v1366
        %1553 = vmatpush.bf16.msra.mxu0 %v1364
        %1554 = vmatpush.bf16.msra.mxu0 %v1362
        %1555 = vmatpush.bf16.msra.mxu0 %v1360
        %1556 = vmatpush.bf16.msra.mxu0 %v1358
        %1557 = vmatpush.bf16.msra.mxu0 %v1356
        %1558 = vmatmul.bf16.gmra.mxu0 %v436
        %v1559 = vpop.f32.mrf.mxu0
        %v1560 = vadd.f32 %v1511, %v1559
        %v1561 = vpop.f32.mrf.mxu0
        %v1562 = vadd.f32 %v1513, %v1561
        %1563 = vmatmul.bf16.gmra.mxu0 %v438
        %v1564 = vpop.f32.mrf.mxu0
        %v1565 = vadd.f32 %v1516, %v1564
        %v1566 = vpop.f32.mrf.mxu0
        %v1567 = vadd.f32 %v1518, %v1566
        %1568 = vmatmul.bf16.gmra.mxu0 %v440
        %v1569 = vpop.f32.mrf.mxu0
        %v1570 = vadd.f32 %v1521, %v1569
        %v1571 = vpop.f32.mrf.mxu0
        %v1572 = vadd.f32 %v1523, %v1571
        %1573 = vmatmul.bf16.gmra.mxu0 %v442
        %v1574 = vpop.f32.mrf.mxu0
        %v1575 = vadd.f32 %v1526, %v1574
        %v1576 = vpop.f32.mrf.mxu0
        %v1577 = vadd.f32 %v1528, %v1576
        %1578 = vmatmul.bf16.gmra.mxu0 %v444
        %v1579 = vpop.f32.mrf.mxu0
        %v1580 = vadd.f32 %v1531, %v1579
        %v1581 = vpop.f32.mrf.mxu0
        %v1582 = vadd.f32 %v1533, %v1581
        %1583 = vmatmul.bf16.gmra.mxu0 %v446
        %v1584 = vpop.f32.mrf.mxu0
        %v1585 = vadd.f32 %v1536, %v1584
        %v1586 = vpop.f32.mrf.mxu0
        %v1587 = vadd.f32 %v1538, %v1586
        %1588 = vmatmul.bf16.gmra.mxu0 %v448
        %v1589 = vpop.f32.mrf.mxu0
        %v1590 = vadd.f32 %v1541, %v1589
        %v1591 = vpop.f32.mrf.mxu0
        %v1592 = vadd.f32 %v1543, %v1591
        %1593 = vmatmul.bf16.gmra.mxu0 %v450
        %v1594 = vpop.f32.mrf.mxu0
        %v1595 = vadd.f32 %v1546, %v1594
        %v1596 = vpop.f32.mrf.mxu0
        %v1597 = vadd.f32 %v1548, %v1596
        %1598 = vdwg.mxu0
        %v1599 = vmul.f32 %v686, 0.125
        %v1600 = vmul.f32 %v784, 0.125
        %v1601 = vmul.f32 %v688, 0.125
        %v1602 = vmul.f32 %v786, 0.125
        %v1603 = vmul.f32 %v691, 0.125
        %v1604 = vmul.f32 %v789, 0.125
        %v1605 = vmul.f32 %v693, 0.125
        %v1606 = vmul.f32 %v791, 0.125
        %v1607 = vmul.f32 %v696, 0.125
        %v1608 = vmul.f32 %v794, 0.125
        %v1609 = vmul.f32 %v698, 0.125
        %v1610 = vmul.f32 %v796, 0.125
        %v1611 = vmul.f32 %v701, 0.125
        %v1612 = vmul.f32 %v799, 0.125
        %v1613 = vmul.f32 %v703, 0.125
        %v1614 = vmul.f32 %v801, 0.125
        %v1615 = vmul.f32 %v706, 0.125
        %v1616 = vmul.f32 %v804, 0.125
        %v1617 = vmul.f32 %v708, 0.125
        %v1618 = vmul.f32 %v806, 0.125
        %v1619 = vmul.f32 %v711, 0.125
        %v1620 = vmul.f32 %v809, 0.125
        %v1621 = vmul.f32 %v713, 0.125
        %v1622 = vmul.f32 %v811, 0.125
        %v1623 = vmul.f32 %v716, 0.125
        %v1624 = vmul.f32 %v814, 0.125
        %v1625 = vmul.f32 %v718, 0.125
        %v1626 = vmul.f32 %v816, 0.125
        %v1627 = vmul.f32 %v721, 0.125
        %v1628 = vmul.f32 %v819, 0.125
        %v1629 = vmul.f32 %v723, 0.125
        %v1630 = vmul.f32 %v821, 0.125
        %v1631 = vlaneseq
        %v1632 = vshrl.u32 %v1631, 7
        %v1633 = vadd.s32 %v1632, 8
        %v1634 = vadd.s32 %v1632, 16
        %v1635 = vadd.s32 %v1632, 24
        %v1636 = vadd.s32 %v1632, 32
        %v1637 = vadd.s32 %v1632, 40
        %v1638 = vadd.s32 %v1632, 48
        %v1639 = vadd.s32 %v1632, 56
        %v1640 = vadd.s32 %v1632, 64
        %v1641 = vadd.s32 %v1632, 72
        %v1642 = vadd.s32 %v1632, 80
        %v1643 = vadd.s32 %v1632, 88
        %v1644 = vadd.s32 %v1632, 96
        %v1645 = vadd.s32 %v1632, 104
        %v1646 = vadd.s32 %v1632, 112
        %v1647 = vadd.s32 %v1632, 120
        %v1648 = vlaneseq
        %v1649 = vand.u32 %v1648, 127
        %vm1650 = vcmp.gt.s32.totalorder %v1649, %v1632
        %vm1651 = vcmp.gt.s32.totalorder %v1649, %v1633
        %vm1652 = vcmp.gt.s32.totalorder %v1649, %v1634
        %vm1653 = vcmp.gt.s32.totalorder %v1649, %v1635
        %vm1654 = vcmp.gt.s32.totalorder %v1649, %v1636
        %vm1655 = vcmp.gt.s32.totalorder %v1649, %v1637
        %vm1656 = vcmp.gt.s32.totalorder %v1649, %v1638
        %vm1657 = vcmp.gt.s32.totalorder %v1649, %v1639
        %vm1658 = vcmp.gt.s32.totalorder %v1649, %v1640
        %vm1659 = vcmp.gt.s32.totalorder %v1649, %v1641
        %vm1660 = vcmp.gt.s32.totalorder %v1649, %v1642
        %vm1661 = vcmp.gt.s32.totalorder %v1649, %v1643
        %vm1662 = vcmp.gt.s32.totalorder %v1649, %v1644
        %vm1663 = vcmp.gt.s32.totalorder %v1649, %v1645
        %vm1664 = vcmp.gt.s32.totalorder %v1649, %v1646
        %vm1665 = vcmp.gt.s32.totalorder %v1649, %v1647
        %v1666 = vld [vmem:[#allocation10] sm:$0xff]
        %v1667 = vld [vmem:[#allocation10 + $0x8] sm:$0xff]
        %v1668 = vld [vmem:[#allocation10 + $0x10] sm:$0xff]
        %v1669 = vld [vmem:[#allocation10 + $0x18] sm:$0xff]
        %v1670 = vld [vmem:[#allocation10 + $0x20] sm:$0xff]
        %v1671 = vld [vmem:[#allocation10 + $0x28] sm:$0xff]
        %v1672 = vld [vmem:[#allocation10 + $0x30] sm:$0xff]
        %v1673 = vld [vmem:[#allocation10 + $0x38] sm:$0xff]
        %v1674 = vld [vmem:[#allocation10 + $0x40] sm:$0xff]
        %v1675 = vld [vmem:[#allocation10 + $0x48] sm:$0xff]
        %v1676 = vld [vmem:[#allocation10 + $0x50] sm:$0xff]
        %v1677 = vld [vmem:[#allocation10 + $0x58] sm:$0xff]
        %v1678 = vld [vmem:[#allocation10 + $0x60] sm:$0xff]
        %v1679 = vld [vmem:[#allocation10 + $0x68] sm:$0xff]
        %v1680 = vld [vmem:[#allocation10 + $0x70] sm:$0xff]
        %v1681 = vld [vmem:[#allocation10 + $0x78] sm:$0xff]
        %v1682 = vld [vmem:[#allocation10 + $0x80] sm:$0xff]
        %v1683 = vld [vmem:[#allocation10 + $0x88] sm:$0xff]
        %v1684 = vld [vmem:[#allocation10 + $0x90] sm:$0xff]
        %v1685 = vld [vmem:[#allocation10 + $0x98] sm:$0xff]
        %v1686 = vld [vmem:[#allocation10 + $0xa0] sm:$0xff]
        %v1687 = vld [vmem:[#allocation10 + $0xa8] sm:$0xff]
        %v1688 = vld [vmem:[#allocation10 + $0xb0] sm:$0xff]
        %v1689 = vld [vmem:[#allocation10 + $0xb8] sm:$0xff]
        %v1690 = vld [vmem:[#allocation10 + $0xc0] sm:$0xff]
        %v1691 = vld [vmem:[#allocation10 + $0xc8] sm:$0xff]
        %v1692 = vld [vmem:[#allocation10 + $0xd0] sm:$0xff]
        %v1693 = vld [vmem:[#allocation10 + $0xd8] sm:$0xff]
        %v1694 = vld [vmem:[#allocation10 + $0xe0] sm:$0xff]
        %v1695 = vld [vmem:[#allocation10 + $0xe8] sm:$0xff]
        %v1696 = vld [vmem:[#allocation10 + $0xf0] sm:$0xff]
        %v1697 = vld [vmem:[#allocation10 + $0xf8] sm:$0xff]
        %v1698 = vld [vmem:[%s5] sm:$0x3]
        %v1700 = vperm.slane %v1698, 0
        %v1701 = vperm.slane %v1698, 1
        %v1704 = vpack.c.bf16 %v1601, %v1599
        %v1705 = vpack.c.bf16 %v1605, %v1603
        %v1706 = vpack.c.bf16 %v1609, %v1607
        %v1707 = vpack.c.bf16 %v1613, %v1611
        %v1708 = vpack.c.bf16 %v1617, %v1615
        %v1709 = vpack.c.bf16 %v1621, %v1619
        %v1710 = vpack.c.bf16 %v1625, %v1623
        %v1711 = vpack.c.bf16 %v1629, %v1627
        %v1712 = vpack.c.bf16 %v1076, %v1074
        %v1713 = vpack.c.bf16 %v1081, %v1079
        %v1714 = vpack.c.bf16 %v1086, %v1084
        %v1715 = vpack.c.bf16 %v1091, %v1089
        %v1716 = vpack.c.bf16 %v1096, %v1094
        %v1717 = vpack.c.bf16 %v1101, %v1099
        %v1718 = vpack.c.bf16 %v1106, %v1104
        %v1719 = vpack.c.bf16 %v1111, %v1109
        %v1720 = vpack.c.bf16 %v1464, %v1462
        %v1721 = vpack.c.bf16 %v1469, %v1467
        %v1722 = vpack.c.bf16 %v1474, %v1472
        %v1723 = vpack.c.bf16 %v1479, %v1477
        %v1724 = vpack.c.bf16 %v1484, %v1482
        %v1725 = vpack.c.bf16 %v1489, %v1487
        %v1726 = vpack.c.bf16 %v1494, %v1492
        %v1727 = vpack.c.bf16 %v1499, %v1497
        %vm1728 = vcmask 523264
        %v1730 = vsel %vm1728, %v1704, 0
        %v1733 = vsel %vm1728, %v1705, 0
        %v1736 = vsel %vm1728, %v1706, 0
        %v1739 = vsel %vm1728, %v1707, 0
        %v1742 = vsel %vm1728, %v1708, 0
        %v1745 = vsel %vm1728, %v1709, 0
        %v1748 = vsel %vm1728, %v1710, 0
        %v1751 = vsel %vm1728, %v1711, 0
        %v1754 = vsel %vm1728, %v1712, 0
        %v1757 = vsel %vm1728, %v1713, 0
        %v1760 = vsel %vm1728, %v1714, 0
        %v1763 = vsel %vm1728, %v1715, 0
        %v1766 = vsel %vm1728, %v1716, 0
        %v1769 = vsel %vm1728, %v1717, 0
        %v1772 = vsel %vm1728, %v1718, 0
        %v1775 = vsel %vm1728, %v1719, 0
        %1777 = vmatpush.bf16.xpose.msra.mxu0 %v1775
        %1778 = vmatpush.bf16.xpose.msra.mxu0 %v1772
        %1779 = vmatpush.bf16.xpose.msra.mxu0 %v1769
        %1780 = vmatpush.bf16.xpose.msra.mxu0 %v1766
        %1781 = vmatpush.bf16.xpose.msra.mxu0 %v1763
        %1782 = vmatpush.bf16.xpose.msra.mxu0 %v1760
        %1783 = vmatpush.bf16.xpose.msra.mxu0 %v1757
        %1784 = vmatpush.bf16.xpose.msra.mxu0 %v1754
        %1785 = vmatmul.bf16.gmra.mxu0 %v1730
        %v1786 = vpop.f32.mrf.mxu0
        %v1787 = vadd.f32 0.0, %v1786
        %v1788 = vpop.f32.mrf.mxu0
        %v1789 = vadd.f32 0.0, %v1788
        %1790 = vmatmul.bf16.gmra.mxu0 %v1733
        %v1791 = vpop.f32.mrf.mxu0
        %v1792 = vadd.f32 0.0, %v1791
        %v1793 = vpop.f32.mrf.mxu0
        %v1794 = vadd.f32 0.0, %v1793
        %1795 = vmatmul.bf16.gmra.mxu0 %v1736
        %v1796 = vpop.f32.mrf.mxu0
        %v1797 = vadd.f32 0.0, %v1796
        %v1798 = vpop.f32.mrf.mxu0
        %v1799 = vadd.f32 0.0, %v1798
        %1800 = vmatmul.bf16.gmra.mxu0 %v1739
        %v1801 = vpop.f32.mrf.mxu0
        %v1802 = vadd.f32 0.0, %v1801
        %v1803 = vpop.f32.mrf.mxu0
        %v1804 = vadd.f32 0.0, %v1803
        %1805 = vmatmul.bf16.gmra.mxu0 %v1742
        %v1806 = vpop.f32.mrf.mxu0
        %v1807 = vadd.f32 0.0, %v1806
        %v1808 = vpop.f32.mrf.mxu0
        %v1809 = vadd.f32 0.0, %v1808
        %1810 = vmatmul.bf16.gmra.mxu0 %v1745
        %v1811 = vpop.f32.mrf.mxu0
        %v1812 = vadd.f32 0.0, %v1811
        %v1813 = vpop.f32.mrf.mxu0
        %v1814 = vadd.f32 0.0, %v1813
        %1815 = vmatmul.bf16.gmra.mxu0 %v1748
        %v1816 = vpop.f32.mrf.mxu0
        %v1817 = vadd.f32 0.0, %v1816
        %v1818 = vpop.f32.mrf.mxu0
        %v1819 = vadd.f32 0.0, %v1818
        %1820 = vmatmul.bf16.gmra.mxu0 %v1751
        %v1821 = vpop.f32.mrf.mxu0
        %v1822 = vadd.f32 0.0, %v1821
        %v1823 = vpop.f32.mrf.mxu0
        %v1824 = vadd.f32 0.0, %v1823
        %1825 = vdwg.mxu0
        %v1826 = vsel %vm1650, -1e+30, %v1787
        %v1827 = vsel %vm1651, -1e+30, %v1789
        %v1828 = vsel %vm1652, -1e+30, %v1792
        %v1829 = vsel %vm1653, -1e+30, %v1794
        %v1830 = vsel %vm1654, -1e+30, %v1797
        %v1831 = vsel %vm1655, -1e+30, %v1799
        %v1832 = vsel %vm1656, -1e+30, %v1802
        %v1833 = vsel %vm1657, -1e+30, %v1804
        %v1834 = vsel %vm1658, -1e+30, %v1807
        %v1835 = vsel %vm1659, -1e+30, %v1809
        %v1836 = vsel %vm1660, -1e+30, %v1812
        %v1837 = vsel %vm1661, -1e+30, %v1814
        %v1838 = vsel %vm1662, -1e+30, %v1817
        %v1839 = vsel %vm1663, -1e+30, %v1819
        %v1840 = vsel %vm1664, -1e+30, %v1822
        %v1841 = vsel %vm1665, -1e+30, %v1824
        %1842 = vmax.xlane.f32.xlu0 %v1826
        %v1843 = vpop.xlane.xlu0 %1842
        %1844 = vmax.xlane.f32.xlu0 %v1827
        %v1845 = vpop.xlane.xlu0 %1844
        %1846 = vmax.xlane.f32.xlu0 %v1828
        %v1847 = vpop.xlane.xlu0 %1846
        %1848 = vmax.xlane.f32.xlu0 %v1829
        %v1849 = vpop.xlane.xlu0 %1848
        %1850 = vmax.xlane.f32.xlu0 %v1830
        %v1851 = vpop.xlane.xlu0 %1850
        %1852 = vmax.xlane.f32.xlu0 %v1831
        %v1853 = vpop.xlane.xlu0 %1852
        %1854 = vmax.xlane.f32.xlu0 %v1832
        %v1855 = vpop.xlane.xlu0 %1854
        %1856 = vmax.xlane.f32.xlu0 %v1833
        %v1857 = vpop.xlane.xlu0 %1856
        %1858 = vmax.xlane.f32.xlu0 %v1834
        %v1859 = vpop.xlane.xlu0 %1858
        %1860 = vmax.xlane.f32.xlu0 %v1835
        %v1861 = vpop.xlane.xlu0 %1860
        %1862 = vmax.xlane.f32.xlu0 %v1836
        %v1863 = vpop.xlane.xlu0 %1862
        %1864 = vmax.xlane.f32.xlu0 %v1837
        %v1865 = vpop.xlane.xlu0 %1864
        %1866 = vmax.xlane.f32.xlu0 %v1838
        %v1867 = vpop.xlane.xlu0 %1866
        %1868 = vmax.xlane.f32.xlu0 %v1839
        %v1869 = vpop.xlane.xlu0 %1868
        %1870 = vmax.xlane.f32.xlu0 %v1840
        %v1871 = vpop.xlane.xlu0 %1870
        %1872 = vmax.xlane.f32.xlu0 %v1841
        %v1873 = vpop.xlane.xlu0 %1872
        %v1874 = vsub.f32 %v1826, %v1843
        %v1875 = vsub.f32 %v1827, %v1845
        %v1876 = vsub.f32 %v1828, %v1847
        %v1877 = vsub.f32 %v1829, %v1849
        %v1878 = vsub.f32 %v1830, %v1851
        %v1879 = vsub.f32 %v1831, %v1853
        %v1880 = vsub.f32 %v1832, %v1855
        %v1881 = vsub.f32 %v1833, %v1857
        %v1882 = vsub.f32 %v1834, %v1859
        %v1883 = vsub.f32 %v1835, %v1861
        %v1884 = vsub.f32 %v1836, %v1863
        %v1885 = vsub.f32 %v1837, %v1865
        %v1886 = vsub.f32 %v1838, %v1867
        %v1887 = vsub.f32 %v1839, %v1869
        %v1888 = vsub.f32 %v1840, %v1871
        %v1889 = vsub.f32 %v1841, %v1873
        %v1890 = vmul.f32 %v1874, 1.442695
        %v1891 = vpow.pop %v1890
        %v1892 = vmul.f32 %v1875, 1.442695
        %v1893 = vpow.pop %v1892
        %v1894 = vmul.f32 %v1876, 1.442695
        %v1895 = vpow.pop %v1894
        %v1896 = vmul.f32 %v1877, 1.442695
        %v1897 = vpow.pop %v1896
        %v1898 = vmul.f32 %v1878, 1.442695
        %v1899 = vpow.pop %v1898
        %v1900 = vmul.f32 %v1879, 1.442695
        %v1901 = vpow.pop %v1900
        %v1902 = vmul.f32 %v1880, 1.442695
        %v1903 = vpow.pop %v1902
        %v1904 = vmul.f32 %v1881, 1.442695
        %v1905 = vpow.pop %v1904
        %v1906 = vmul.f32 %v1882, 1.442695
        %v1907 = vpow.pop %v1906
        %v1908 = vmul.f32 %v1883, 1.442695
        %v1909 = vpow.pop %v1908
        %v1910 = vmul.f32 %v1884, 1.442695
        %v1911 = vpow.pop %v1910
        %v1912 = vmul.f32 %v1885, 1.442695
        %v1913 = vpow.pop %v1912
        %v1914 = vmul.f32 %v1886, 1.442695
        %v1915 = vpow.pop %v1914
        %v1916 = vmul.f32 %v1887, 1.442695
        %v1917 = vpow.pop %v1916
        %v1918 = vmul.f32 %v1888, 1.442695
        %v1919 = vpow.pop %v1918
        %v1920 = vmul.f32 %v1889, 1.442695
        %v1921 = vpow.pop %v1920
        %1922 = vadd.xlane.f32.xlu0 %v1891
        %v1923 = vpop.xlane.xlu0 %1922
        %1924 = vadd.xlane.f32.xlu0 %v1893
        %v1925 = vpop.xlane.xlu0 %1924
        %1926 = vadd.xlane.f32.xlu0 %v1895
        %v1927 = vpop.xlane.xlu0 %1926
        %1928 = vadd.xlane.f32.xlu0 %v1897
        %v1929 = vpop.xlane.xlu0 %1928
        %1930 = vadd.xlane.f32.xlu0 %v1899
        %v1931 = vpop.xlane.xlu0 %1930
        %1932 = vadd.xlane.f32.xlu0 %v1901
        %v1933 = vpop.xlane.xlu0 %1932
        %1934 = vadd.xlane.f32.xlu0 %v1903
        %v1935 = vpop.xlane.xlu0 %1934
        %1936 = vadd.xlane.f32.xlu0 %v1905
        %v1937 = vpop.xlane.xlu0 %1936
        %1938 = vadd.xlane.f32.xlu0 %v1907
        %v1939 = vpop.xlane.xlu0 %1938
        %1940 = vadd.xlane.f32.xlu0 %v1909
        %v1941 = vpop.xlane.xlu0 %1940
        %1942 = vadd.xlane.f32.xlu0 %v1911
        %v1943 = vpop.xlane.xlu0 %1942
        %1944 = vadd.xlane.f32.xlu0 %v1913
        %v1945 = vpop.xlane.xlu0 %1944
        %1946 = vadd.xlane.f32.xlu0 %v1915
        %v1947 = vpop.xlane.xlu0 %1946
        %1948 = vadd.xlane.f32.xlu0 %v1917
        %v1949 = vpop.xlane.xlu0 %1948
        %1950 = vadd.xlane.f32.xlu0 %v1919
        %v1951 = vpop.xlane.xlu0 %1950
        %1952 = vadd.xlane.f32.xlu0 %v1921
        %v1953 = vpop.xlane.xlu0 %1952
        %v1954 = vrcp.pop %v1923
        %v1955 = vrcp.pop %v1925
        %v1956 = vrcp.pop %v1927
        %v1957 = vrcp.pop %v1929
        %v1958 = vrcp.pop %v1931
        %v1959 = vrcp.pop %v1933
        %v1960 = vrcp.pop %v1935
        %v1961 = vrcp.pop %v1937
        %v1962 = vrcp.pop %v1939
        %v1963 = vrcp.pop %v1941
        %v1964 = vrcp.pop %v1943
        %v1965 = vrcp.pop %v1945
        %v1966 = vrcp.pop %v1947
        %v1967 = vrcp.pop %v1949
        %v1968 = vrcp.pop %v1951
        %v1969 = vrcp.pop %v1953
        %v1970 = vmul.f32 %v1891, %v1954
        %v1971 = vmul.f32 %v1893, %v1955
        %v1972 = vmul.f32 %v1895, %v1956
        %v1973 = vmul.f32 %v1897, %v1957
        %v1974 = vmul.f32 %v1899, %v1958
        %v1975 = vmul.f32 %v1901, %v1959
        %v1976 = vmul.f32 %v1903, %v1960
        %v1977 = vmul.f32 %v1905, %v1961
        %v1978 = vmul.f32 %v1907, %v1962
        %v1979 = vmul.f32 %v1909, %v1963
        %v1980 = vmul.f32 %v1911, %v1964
        %v1981 = vmul.f32 %v1913, %v1965
        %v1982 = vmul.f32 %v1915, %v1966
        %v1983 = vmul.f32 %v1917, %v1967
        %v1984 = vmul.f32 %v1919, %v1968
        %v1985 = vmul.f32 %v1921, %v1969
        %v1986 = vpack.c.bf16 %v1971, %v1970
        %v1987 = vpack.c.bf16 %v1973, %v1972
        %v1988 = vpack.c.bf16 %v1975, %v1974
        %v1989 = vpack.c.bf16 %v1977, %v1976
        %v1990 = vpack.c.bf16 %v1979, %v1978
        %v1991 = vpack.c.bf16 %v1981, %v1980
        %v1992 = vpack.c.bf16 %v1983, %v1982
        %v1993 = vpack.c.bf16 %v1985, %v1984
        %1994 = vmatpush.bf16.msra.mxu0 %v1727
        %1995 = vmatpush.bf16.msra.mxu0 %v1726
        %1996 = vmatpush.bf16.msra.mxu0 %v1725
        %1997 = vmatpush.bf16.msra.mxu0 %v1724
        %1998 = vmatpush.bf16.msra.mxu0 %v1723
        %1999 = vmatpush.bf16.msra.mxu0 %v1722
        %2000 = vmatpush.bf16.msra.mxu0 %v1721
        %2001 = vmatpush.bf16.msra.mxu0 %v1720
        %2002 = vmatmul.bf16.gmra.mxu0 %v1986
        %v2003 = vpop.f32.mrf.mxu0
        %v2004 = vadd.f32 0.0, %v2003
        %v2005 = vpop.f32.mrf.mxu0
        %v2006 = vadd.f32 0.0, %v2005
        %2007 = vmatmul.bf16.gmra.mxu0 %v1987
        %v2008 = vpop.f32.mrf.mxu0
        %v2009 = vadd.f32 0.0, %v2008
        %v2010 = vpop.f32.mrf.mxu0
        %v2011 = vadd.f32 0.0, %v2010
        %2012 = vmatmul.bf16.gmra.mxu0 %v1988
        %v2013 = vpop.f32.mrf.mxu0
        %v2014 = vadd.f32 0.0, %v2013
        %v2015 = vpop.f32.mrf.mxu0
        %v2016 = vadd.f32 0.0, %v2015
        %2017 = vmatmul.bf16.gmra.mxu0 %v1989
        %v2018 = vpop.f32.mrf.mxu0
        %v2019 = vadd.f32 0.0, %v2018
        %v2020 = vpop.f32.mrf.mxu0
        %v2021 = vadd.f32 0.0, %v2020
        %2022 = vmatmul.bf16.gmra.mxu0 %v1990
        %v2023 = vpop.f32.mrf.mxu0
        %v2024 = vadd.f32 0.0, %v2023
        %v2025 = vpop.f32.mrf.mxu0
        %v2026 = vadd.f32 0.0, %v2025
        %2027 = vmatmul.bf16.gmra.mxu0 %v1991
        %v2028 = vpop.f32.mrf.mxu0
        %v2029 = vadd.f32 0.0, %v2028
        %v2030 = vpop.f32.mrf.mxu0
        %v2031 = vadd.f32 0.0, %v2030
        %2032 = vmatmul.bf16.gmra.mxu0 %v1992
        %v2033 = vpop.f32.mrf.mxu0
        %v2034 = vadd.f32 0.0, %v2033
        %v2035 = vpop.f32.mrf.mxu0
        %v2036 = vadd.f32 0.0, %v2035
        %2037 = vmatmul.bf16.gmra.mxu0 %v1993
        %v2038 = vpop.f32.mrf.mxu0
        %v2039 = vadd.f32 0.0, %v2038
        %v2040 = vpop.f32.mrf.mxu0
        %v2041 = vadd.f32 0.0, %v2040
        %2042 = vdwg.mxu0
        %v2043 = vpack.c.bf16 %v2006, %v2004
        %v2044 = vpack.c.bf16 %v2011, %v2009
        %v2045 = vpack.c.bf16 %v2016, %v2014
        %v2046 = vpack.c.bf16 %v2021, %v2019
        %v2047 = vpack.c.bf16 %v2026, %v2024
        %v2048 = vpack.c.bf16 %v2031, %v2029
        %v2049 = vpack.c.bf16 %v2036, %v2034
        %v2050 = vpack.c.bf16 %v2041, %v2039
        %v2059 = vunpack.c.l.b16 %v1666
        %v2060 = vunpack.c.h.b16 %v1666
        %v2061 = vunpack.c.l.b16 %v1667
        %v2062 = vunpack.c.h.b16 %v1667
        %v2063 = vunpack.c.l.b16 %v1668
        %v2064 = vunpack.c.h.b16 %v1668
        %v2065 = vunpack.c.l.b16 %v1669
        %v2066 = vunpack.c.h.b16 %v1669
        %v2067 = vunpack.c.l.b16 %v1670
        %v2068 = vunpack.c.h.b16 %v1670
        %v2069 = vunpack.c.l.b16 %v1671
        %v2070 = vunpack.c.h.b16 %v1671
        %v2071 = vunpack.c.l.b16 %v1672
        %v2072 = vunpack.c.h.b16 %v1672
        %v2073 = vunpack.c.l.b16 %v1673
        %v2074 = vunpack.c.h.b16 %v1673
        %v2075 = vpack.c.b16 %v2061, %v2059
        %v2076 = vpack.c.b16 %v2062, %v2060
        %v2077 = vpack.c.b16 %v2065, %v2063
        %v2078 = vpack.c.b16 %v2066, %v2064
        %v2079 = vpack.c.b16 %v2069, %v2067
        %v2080 = vpack.c.b16 %v2070, %v2068
        %v2081 = vpack.c.b16 %v2073, %v2071
        %v2082 = vpack.c.b16 %v2074, %v2072
        %v2092 = vsel %vm1728, %v2043, 0
        %v2095 = vsel %vm1728, %v2044, 0
        %v2098 = vsel %vm1728, %v2045, 0
        %v2101 = vsel %vm1728, %v2046, 0
        %v2104 = vsel %vm1728, %v2047, 0
        %v2107 = vsel %vm1728, %v2048, 0
        %v2110 = vsel %vm1728, %v2049, 0
        %v2113 = vsel %vm1728, %v2050, 0
        %2115 = vmatpush.bf16.msra.mxu0 0
        %2116 = vmatpush.bf16.msra.mxu0 0
        %2117 = vmatpush.bf16.msra.mxu0 0
        %2118 = vmatpush.bf16.msra.mxu0 0
        %2119 = vmatpush.bf16.msra.mxu0 %v2081
        %2120 = vmatpush.bf16.msra.mxu0 %v2079
        %2121 = vmatpush.bf16.msra.mxu0 %v2077
        %2122 = vmatpush.bf16.msra.mxu0 %v2075
        %2123 = vmatmul.bf16.gmra.mxu0 %v2092
        %v2124 = vpop.f32.mrf.mxu0
        %v2125 = vadd.f32 0.0, %v2124
        %v2126 = vpop.f32.mrf.mxu0
        %v2127 = vadd.f32 0.0, %v2126
        %2128 = vmatmul.bf16.gmra.mxu0 %v2095
        %v2129 = vpop.f32.mrf.mxu0
        %v2130 = vadd.f32 0.0, %v2129
        %v2131 = vpop.f32.mrf.mxu0
        %v2132 = vadd.f32 0.0, %v2131
        %2133 = vmatmul.bf16.gmra.mxu0 %v2098
        %v2134 = vpop.f32.mrf.mxu0
        %v2135 = vadd.f32 0.0, %v2134
        %v2136 = vpop.f32.mrf.mxu0
        %v2137 = vadd.f32 0.0, %v2136
        %2138 = vmatmul.bf16.gmra.mxu0 %v2101
        %v2139 = vpop.f32.mrf.mxu0
        %v2140 = vadd.f32 0.0, %v2139
        %v2141 = vpop.f32.mrf.mxu0
        %v2142 = vadd.f32 0.0, %v2141
        %2143 = vmatmul.bf16.gmra.mxu0 %v2104
        %v2144 = vpop.f32.mrf.mxu0
        %v2145 = vadd.f32 0.0, %v2144
        %v2146 = vpop.f32.mrf.mxu0
        %v2147 = vadd.f32 0.0, %v2146
        %2148 = vmatmul.bf16.gmra.mxu0 %v2107
        %v2149 = vpop.f32.mrf.mxu0
        %v2150 = vadd.f32 0.0, %v2149
        %v2151 = vpop.f32.mrf.mxu0
        %v2152 = vadd.f32 0.0, %v2151
        %2153 = vmatmul.bf16.gmra.mxu0 %v2110
        %v2154 = vpop.f32.mrf.mxu0
        %v2155 = vadd.f32 0.0, %v2154
        %v2156 = vpop.f32.mrf.mxu0
        %v2157 = vadd.f32 0.0, %v2156
        %2158 = vmatmul.bf16.gmra.mxu0 %v2113
        %v2159 = vpop.f32.mrf.mxu0
        %v2160 = vadd.f32 0.0, %v2159
        %v2161 = vpop.f32.mrf.mxu0
        %v2162 = vadd.f32 0.0, %v2161
        %2163 = vdwg.mxu0
        %2164 = vmatpush.bf16.msra.mxu0 0
        %2165 = vmatpush.bf16.msra.mxu0 0
        %2166 = vmatpush.bf16.msra.mxu0 0
        %2167 = vmatpush.bf16.msra.mxu0 0
        %2168 = vmatpush.bf16.msra.mxu0 %v2082
        %2169 = vmatpush.bf16.msra.mxu0 %v2080
        %2170 = vmatpush.bf16.msra.mxu0 %v2078
        %2171 = vmatpush.bf16.msra.mxu0 %v2076
        %2172 = vmatmul.bf16.gmra.mxu0 %v2092
        %v2173 = vpop.f32.mrf.mxu0
        %v2174 = vadd.f32 0.0, %v2173
        %v2175 = vpop.f32.mrf.mxu0
        %v2176 = vadd.f32 0.0, %v2175
        %2177 = vmatmul.bf16.gmra.mxu0 %v2095
        %v2178 = vpop.f32.mrf.mxu0
        %v2179 = vadd.f32 0.0, %v2178
        %v2180 = vpop.f32.mrf.mxu0
        %v2181 = vadd.f32 0.0, %v2180
        %2182 = vmatmul.bf16.gmra.mxu0 %v2098
        %v2183 = vpop.f32.mrf.mxu0
        %v2184 = vadd.f32 0.0, %v2183
        %v2185 = vpop.f32.mrf.mxu0
        %v2186 = vadd.f32 0.0, %v2185
        %2187 = vmatmul.bf16.gmra.mxu0 %v2101
        %v2188 = vpop.f32.mrf.mxu0
        %v2189 = vadd.f32 0.0, %v2188
        %v2190 = vpop.f32.mrf.mxu0
        %v2191 = vadd.f32 0.0, %v2190
        %2192 = vmatmul.bf16.gmra.mxu0 %v2104
        %v2193 = vpop.f32.mrf.mxu0
        %v2194 = vadd.f32 0.0, %v2193
        %v2195 = vpop.f32.mrf.mxu0
        %v2196 = vadd.f32 0.0, %v2195
        %2197 = vmatmul.bf16.gmra.mxu0 %v2107
        %v2198 = vpop.f32.mrf.mxu0
        %v2199 = vadd.f32 0.0, %v2198
        %v2200 = vpop.f32.mrf.mxu0
        %v2201 = vadd.f32 0.0, %v2200
        %2202 = vmatmul.bf16.gmra.mxu0 %v2110
        %v2203 = vpop.f32.mrf.mxu0
        %v2204 = vadd.f32 0.0, %v2203
        %v2205 = vpop.f32.mrf.mxu0
        %v2206 = vadd.f32 0.0, %v2205
        %2207 = vmatmul.bf16.gmra.mxu0 %v2113
        %v2208 = vpop.f32.mrf.mxu0
        %v2209 = vadd.f32 0.0, %v2208
        %v2210 = vpop.f32.mrf.mxu0
        %v2211 = vadd.f32 0.0, %v2210
        %2212 = vdwg.mxu0
        %v2213 = vadd.f32 %v1700, %v2125
        %v2214 = vadd.f32 %v1701, %v2174
        %v2215 = vadd.f32 %v1700, %v2127
        %v2216 = vadd.f32 %v1701, %v2176
        %v2217 = vadd.f32 %v1700, %v2130
        %v2218 = vadd.f32 %v1701, %v2179
        %v2219 = vadd.f32 %v1700, %v2132
        %v2220 = vadd.f32 %v1701, %v2181
        %v2221 = vadd.f32 %v1700, %v2135
        %v2222 = vadd.f32 %v1701, %v2184
        %v2223 = vadd.f32 %v1700, %v2137
        %v2224 = vadd.f32 %v1701, %v2186
        %v2225 = vadd.f32 %v1700, %v2140
        %v2226 = vadd.f32 %v1701, %v2189
        %v2227 = vadd.f32 %v1700, %v2142
        %v2228 = vadd.f32 %v1701, %v2191
        %v2229 = vadd.f32 %v1700, %v2145
        %v2230 = vadd.f32 %v1701, %v2194
        %v2231 = vadd.f32 %v1700, %v2147
        %v2232 = vadd.f32 %v1701, %v2196
        %v2233 = vadd.f32 %v1700, %v2150
        %v2234 = vadd.f32 %v1701, %v2199
        %v2235 = vadd.f32 %v1700, %v2152
        %v2236 = vadd.f32 %v1701, %v2201
        %v2237 = vadd.f32 %v1700, %v2155
        %v2238 = vadd.f32 %v1701, %v2204
        %v2239 = vadd.f32 %v1700, %v2157
        %v2240 = vadd.f32 %v1701, %v2206
        %v2241 = vadd.f32 %v1700, %v2160
        %v2242 = vadd.f32 %v1701, %v2209
        %v2243 = vadd.f32 %v1700, %v2162
        %v2244 = vadd.f32 %v1701, %v2211
        %2253 = vrot.lane.b32.xlu0 %v1704, 64
        %v2254 = vpop.permute.xlu0 %2253
        %2255 = vrot.lane.b32.xlu0 %v1705, 64
        %v2256 = vpop.permute.xlu0 %2255
        %2257 = vrot.lane.b32.xlu0 %v1706, 64
        %v2258 = vpop.permute.xlu0 %2257
        %2259 = vrot.lane.b32.xlu0 %v1707, 64
        %v2260 = vpop.permute.xlu0 %2259
        %2261 = vrot.lane.b32.xlu0 %v1708, 64
        %v2262 = vpop.permute.xlu0 %2261
        %2263 = vrot.lane.b32.xlu0 %v1709, 64
        %v2264 = vpop.permute.xlu0 %2263
        %2265 = vrot.lane.b32.xlu0 %v1710, 64
        %v2266 = vpop.permute.xlu0 %2265
        %2267 = vrot.lane.b32.xlu0 %v1711, 64
        %v2268 = vpop.permute.xlu0 %2267
        %2277 = vrot.lane.b32.xlu0 %v1712, 64
        %v2278 = vpop.permute.xlu0 %2277
        %2279 = vrot.lane.b32.xlu0 %v1713, 64
        %v2280 = vpop.permute.xlu0 %2279
        %2281 = vrot.lane.b32.xlu0 %v1714, 64
        %v2282 = vpop.permute.xlu0 %2281
        %2283 = vrot.lane.b32.xlu0 %v1715, 64
        %v2284 = vpop.permute.xlu0 %2283
        %2285 = vrot.lane.b32.xlu0 %v1716, 64
        %v2286 = vpop.permute.xlu0 %2285
        %2287 = vrot.lane.b32.xlu0 %v1717, 64
        %v2288 = vpop.permute.xlu0 %2287
        %2289 = vrot.lane.b32.xlu0 %v1718, 64
        %v2290 = vpop.permute.xlu0 %2289
        %2291 = vrot.lane.b32.xlu0 %v1719, 64
        %v2292 = vpop.permute.xlu0 %2291
        %v2294 = vsel %vm1728, %v2254, 0
        %v2297 = vsel %vm1728, %v2256, 0
        %v2300 = vsel %vm1728, %v2258, 0
        %v2303 = vsel %vm1728, %v2260, 0
        %v2306 = vsel %vm1728, %v2262, 0
        %v2309 = vsel %vm1728, %v2264, 0
        %v2312 = vsel %vm1728, %v2266, 0
        %v2315 = vsel %vm1728, %v2268, 0
        %v2318 = vsel %vm1728, %v2278, 0
        %v2321 = vsel %vm1728, %v2280, 0
        %v2324 = vsel %vm1728, %v2282, 0
        %v2327 = vsel %vm1728, %v2284, 0
        %v2330 = vsel %vm1728, %v2286, 0
        %v2333 = vsel %vm1728, %v2288, 0
        %v2336 = vsel %vm1728, %v2290, 0
        %v2339 = vsel %vm1728, %v2292, 0
        %2341 = vmatpush.bf16.xpose.msra.mxu0 %v2339
        %2342 = vmatpush.bf16.xpose.msra.mxu0 %v2336
        %2343 = vmatpush.bf16.xpose.msra.mxu0 %v2333
        %2344 = vmatpush.bf16.xpose.msra.mxu0 %v2330
        %2345 = vmatpush.bf16.xpose.msra.mxu0 %v2327
        %2346 = vmatpush.bf16.xpose.msra.mxu0 %v2324
        %2347 = vmatpush.bf16.xpose.msra.mxu0 %v2321
        %2348 = vmatpush.bf16.xpose.msra.mxu0 %v2318
        %2349 = vmatmul.bf16.gmra.mxu0 %v2294
        %v2350 = vpop.f32.mrf.mxu0
        %v2351 = vadd.f32 0.0, %v2350
        %v2352 = vpop.f32.mrf.mxu0
        %v2353 = vadd.f32 0.0, %v2352
        %2354 = vmatmul.bf16.gmra.mxu0 %v2297
        %v2355 = vpop.f32.mrf.mxu0
        %v2356 = vadd.f32 0.0, %v2355
        %v2357 = vpop.f32.mrf.mxu0
        %v2358 = vadd.f32 0.0, %v2357
        %2359 = vmatmul.bf16.gmra.mxu0 %v2300
        %v2360 = vpop.f32.mrf.mxu0
        %v2361 = vadd.f32 0.0, %v2360
        %v2362 = vpop.f32.mrf.mxu0
        %v2363 = vadd.f32 0.0, %v2362
        %2364 = vmatmul.bf16.gmra.mxu0 %v2303
        %v2365 = vpop.f32.mrf.mxu0
        %v2366 = vadd.f32 0.0, %v2365
        %v2367 = vpop.f32.mrf.mxu0
        %v2368 = vadd.f32 0.0, %v2367
        %2369 = vmatmul.bf16.gmra.mxu0 %v2306
        %v2370 = vpop.f32.mrf.mxu0
        %v2371 = vadd.f32 0.0, %v2370
        %v2372 = vpop.f32.mrf.mxu0
        %v2373 = vadd.f32 0.0, %v2372
        %2374 = vmatmul.bf16.gmra.mxu0 %v2309
        %v2375 = vpop.f32.mrf.mxu0
        %v2376 = vadd.f32 0.0, %v2375
        %v2377 = vpop.f32.mrf.mxu0
        %v2378 = vadd.f32 0.0, %v2377
        %2379 = vmatmul.bf16.gmra.mxu0 %v2312
        %v2380 = vpop.f32.mrf.mxu0
        %v2381 = vadd.f32 0.0, %v2380
        %v2382 = vpop.f32.mrf.mxu0
        %v2383 = vadd.f32 0.0, %v2382
        %2384 = vmatmul.bf16.gmra.mxu0 %v2315
        %v2385 = vpop.f32.mrf.mxu0
        %v2386 = vadd.f32 0.0, %v2385
        %v2387 = vpop.f32.mrf.mxu0
        %v2388 = vadd.f32 0.0, %v2387
        %2389 = vdwg.mxu0
        %v2390 = vsel %vm1650, -1e+30, %v2351
        %v2391 = vsel %vm1651, -1e+30, %v2353
        %v2392 = vsel %vm1652, -1e+30, %v2356
        %v2393 = vsel %vm1653, -1e+30, %v2358
        %v2394 = vsel %vm1654, -1e+30, %v2361
        %v2395 = vsel %vm1655, -1e+30, %v2363
        %v2396 = vsel %vm1656, -1e+30, %v2366
        %v2397 = vsel %vm1657, -1e+30, %v2368
        %v2398 = vsel %vm1658, -1e+30, %v2371
        %v2399 = vsel %vm1659, -1e+30, %v2373
        %v2400 = vsel %vm1660, -1e+30, %v2376
        %v2401 = vsel %vm1661, -1e+30, %v2378
        %v2402 = vsel %vm1662, -1e+30, %v2381
        %v2403 = vsel %vm1663, -1e+30, %v2383
        %v2404 = vsel %vm1664, -1e+30, %v2386
        %v2405 = vsel %vm1665, -1e+30, %v2388
        %2406 = vmax.xlane.f32.xlu0 %v2390
        %v2407 = vpop.xlane.xlu0 %2406
        %2408 = vmax.xlane.f32.xlu0 %v2391
        %v2409 = vpop.xlane.xlu0 %2408
        %2410 = vmax.xlane.f32.xlu0 %v2392
        %v2411 = vpop.xlane.xlu0 %2410
        %2412 = vmax.xlane.f32.xlu0 %v2393
        %v2413 = vpop.xlane.xlu0 %2412
        %2414 = vmax.xlane.f32.xlu0 %v2394
        %v2415 = vpop.xlane.xlu0 %2414
        %2416 = vmax.xlane.f32.xlu0 %v2395
        %v2417 = vpop.xlane.xlu0 %2416
        %2418 = vmax.xlane.f32.xlu0 %v2396
        %v2419 = vpop.xlane.xlu0 %2418
        %2420 = vmax.xlane.f32.xlu0 %v2397
        %v2421 = vpop.xlane.xlu0 %2420
        %2422 = vmax.xlane.f32.xlu0 %v2398
        %v2423 = vpop.xlane.xlu0 %2422
        %2424 = vmax.xlane.f32.xlu0 %v2399
        %v2425 = vpop.xlane.xlu0 %2424
        %2426 = vmax.xlane.f32.xlu0 %v2400
        %v2427 = vpop.xlane.xlu0 %2426
        %2428 = vmax.xlane.f32.xlu0 %v2401
        %v2429 = vpop.xlane.xlu0 %2428
        %2430 = vmax.xlane.f32.xlu0 %v2402
        %v2431 = vpop.xlane.xlu0 %2430
        %2432 = vmax.xlane.f32.xlu0 %v2403
        %v2433 = vpop.xlane.xlu0 %2432
        %2434 = vmax.xlane.f32.xlu0 %v2404
        %v2435 = vpop.xlane.xlu0 %2434
        %2436 = vmax.xlane.f32.xlu0 %v2405
        %v2437 = vpop.xlane.xlu0 %2436
        %v2438 = vsub.f32 %v2390, %v2407
        %v2439 = vsub.f32 %v2391, %v2409
        %v2440 = vsub.f32 %v2392, %v2411
        %v2441 = vsub.f32 %v2393, %v2413
        %v2442 = vsub.f32 %v2394, %v2415
        %v2443 = vsub.f32 %v2395, %v2417
        %v2444 = vsub.f32 %v2396, %v2419
        %v2445 = vsub.f32 %v2397, %v2421
        %v2446 = vsub.f32 %v2398, %v2423
        %v2447 = vsub.f32 %v2399, %v2425
        %v2448 = vsub.f32 %v2400, %v2427
        %v2449 = vsub.f32 %v2401, %v2429
        %v2450 = vsub.f32 %v2402, %v2431
        %v2451 = vsub.f32 %v2403, %v2433
        %v2452 = vsub.f32 %v2404, %v2435
        %v2453 = vsub.f32 %v2405, %v2437
        %v2454 = vmul.f32 %v2438, 1.442695
        %v2455 = vpow.pop %v2454
        %v2456 = vmul.f32 %v2439, 1.442695
        %v2457 = vpow.pop %v2456
        %v2458 = vmul.f32 %v2440, 1.442695
        %v2459 = vpow.pop %v2458
        %v2460 = vmul.f32 %v2441, 1.442695
        %v2461 = vpow.pop %v2460
        %v2462 = vmul.f32 %v2442, 1.442695
        %v2463 = vpow.pop %v2462
        %v2464 = vmul.f32 %v2443, 1.442695
        %v2465 = vpow.pop %v2464
        %v2466 = vmul.f32 %v2444, 1.442695
        %v2467 = vpow.pop %v2466
        %v2468 = vmul.f32 %v2445, 1.442695
        %v2469 = vpow.pop %v2468
        %v2470 = vmul.f32 %v2446, 1.442695
        %v2471 = vpow.pop %v2470
        %v2472 = vmul.f32 %v2447, 1.442695
        %v2473 = vpow.pop %v2472
        %v2474 = vmul.f32 %v2448, 1.442695
        %v2475 = vpow.pop %v2474
        %v2476 = vmul.f32 %v2449, 1.442695
        %v2477 = vpow.pop %v2476
        %v2478 = vmul.f32 %v2450, 1.442695
        %v2479 = vpow.pop %v2478
        %v2480 = vmul.f32 %v2451, 1.442695
        %v2481 = vpow.pop %v2480
        %v2482 = vmul.f32 %v2452, 1.442695
        %v2483 = vpow.pop %v2482
        %v2484 = vmul.f32 %v2453, 1.442695
        %v2485 = vpow.pop %v2484
        %2486 = vadd.xlane.f32.xlu0 %v2455
        %v2487 = vpop.xlane.xlu0 %2486
        %2488 = vadd.xlane.f32.xlu0 %v2457
        %v2489 = vpop.xlane.xlu0 %2488
        %2490 = vadd.xlane.f32.xlu0 %v2459
        %v2491 = vpop.xlane.xlu0 %2490
        %2492 = vadd.xlane.f32.xlu0 %v2461
        %v2493 = vpop.xlane.xlu0 %2492
        %2494 = vadd.xlane.f32.xlu0 %v2463
        %v2495 = vpop.xlane.xlu0 %2494
        %2496 = vadd.xlane.f32.xlu0 %v2465
        %v2497 = vpop.xlane.xlu0 %2496
        %2498 = vadd.xlane.f32.xlu0 %v2467
        %v2499 = vpop.xlane.xlu0 %2498
        %2500 = vadd.xlane.f32.xlu0 %v2469
        %v2501 = vpop.xlane.xlu0 %2500
        %2502 = vadd.xlane.f32.xlu0 %v2471
        %v2503 = vpop.xlane.xlu0 %2502
        %2504 = vadd.xlane.f32.xlu0 %v2473
        %v2505 = vpop.xlane.xlu0 %2504
        %2506 = vadd.xlane.f32.xlu0 %v2475
        %v2507 = vpop.xlane.xlu0 %2506
        %2508 = vadd.xlane.f32.xlu0 %v2477
        %v2509 = vpop.xlane.xlu0 %2508
        %2510 = vadd.xlane.f32.xlu0 %v2479
        %v2511 = vpop.xlane.xlu0 %2510
        %2512 = vadd.xlane.f32.xlu0 %v2481
        %v2513 = vpop.xlane.xlu0 %2512
        %2514 = vadd.xlane.f32.xlu0 %v2483
        %v2515 = vpop.xlane.xlu0 %2514
        %2516 = vadd.xlane.f32.xlu0 %v2485
        %v2517 = vpop.xlane.xlu0 %2516
        %v2518 = vrcp.pop %v2487
        %v2519 = vrcp.pop %v2489
        %v2520 = vrcp.pop %v2491
        %v2521 = vrcp.pop %v2493
        %v2522 = vrcp.pop %v2495
        %v2523 = vrcp.pop %v2497
        %v2524 = vrcp.pop %v2499
        %v2525 = vrcp.pop %v2501
        %v2526 = vrcp.pop %v2503
        %v2527 = vrcp.pop %v2505
        %v2528 = vrcp.pop %v2507
        %v2529 = vrcp.pop %v2509
        %v2530 = vrcp.pop %v2511
        %v2531 = vrcp.pop %v2513
        %v2532 = vrcp.pop %v2515
        %v2533 = vrcp.pop %v2517
        %v2534 = vmul.f32 %v2455, %v2518
        %v2535 = vmul.f32 %v2457, %v2519
        %v2536 = vmul.f32 %v2459, %v2520
        %v2537 = vmul.f32 %v2461, %v2521
        %v2538 = vmul.f32 %v2463, %v2522
        %v2539 = vmul.f32 %v2465, %v2523
        %v2540 = vmul.f32 %v2467, %v2524
        %v2541 = vmul.f32 %v2469, %v2525
        %v2542 = vmul.f32 %v2471, %v2526
        %v2543 = vmul.f32 %v2473, %v2527
        %v2544 = vmul.f32 %v2475, %v2528
        %v2545 = vmul.f32 %v2477, %v2529
        %v2546 = vmul.f32 %v2479, %v2530
        %v2547 = vmul.f32 %v2481, %v2531
        %v2548 = vmul.f32 %v2483, %v2532
        %v2549 = vmul.f32 %v2485, %v2533
        %v2550 = vpack.c.bf16 %v2535, %v2534
        %v2551 = vpack.c.bf16 %v2537, %v2536
        %v2552 = vpack.c.bf16 %v2539, %v2538
        %v2553 = vpack.c.bf16 %v2541, %v2540
        %v2554 = vpack.c.bf16 %v2543, %v2542
        %v2555 = vpack.c.bf16 %v2545, %v2544
        %v2556 = vpack.c.bf16 %v2547, %v2546
        %v2557 = vpack.c.bf16 %v2549, %v2548
        %2566 = vrot.lane.b32.xlu0 %v1720, 64
        %v2567 = vpop.permute.xlu0 %2566
        %2568 = vrot.lane.b32.xlu0 %v1721, 64
        %v2569 = vpop.permute.xlu0 %2568
        %2570 = vrot.lane.b32.xlu0 %v1722, 64
        %v2571 = vpop.permute.xlu0 %2570
        %2572 = vrot.lane.b32.xlu0 %v1723, 64
        %v2573 = vpop.permute.xlu0 %2572
        %2574 = vrot.lane.b32.xlu0 %v1724, 64
        %v2575 = vpop.permute.xlu0 %2574
        %2576 = vrot.lane.b32.xlu0 %v1725, 64
        %v2577 = vpop.permute.xlu0 %2576
        %2578 = vrot.lane.b32.xlu0 %v1726, 64
        %v2579 = vpop.permute.xlu0 %2578
        %2580 = vrot.lane.b32.xlu0 %v1727, 64
        %v2581 = vpop.permute.xlu0 %2580
        %2590 = vmatpush.bf16.msra.mxu0 %v2581
        %2591 = vmatpush.bf16.msra.mxu0 %v2579
        %2592 = vmatpush.bf16.msra.mxu0 %v2577
        %2593 = vmatpush.bf16.msra.mxu0 %v2575
        %2594 = vmatpush.bf16.msra.mxu0 %v2573
        %2595 = vmatpush.bf16.msra.mxu0 %v2571
        %2596 = vmatpush.bf16.msra.mxu0 %v2569
        %2597 = vmatpush.bf16.msra.mxu0 %v2567
        %2598 = vmatmul.bf16.gmra.mxu0 %v2550
        %v2599 = vpop.f32.mrf.mxu0
        %v2600 = vadd.f32 0.0, %v2599
        %v2601 = vpop.f32.mrf.mxu0
        %v2602 = vadd.f32 0.0, %v2601
        %2603 = vmatmul.bf16.gmra.mxu0 %v2551
        %v2604 = vpop.f32.mrf.mxu0
        %v2605 = vadd.f32 0.0, %v2604
        %v2606 = vpop.f32.mrf.mxu0
        %v2607 = vadd.f32 0.0, %v2606
        %2608 = vmatmul.bf16.gmra.mxu0 %v2552
        %v2609 = vpop.f32.mrf.mxu0
        %v2610 = vadd.f32 0.0, %v2609
        %v2611 = vpop.f32.mrf.mxu0
        %v2612 = vadd.f32 0.0, %v2611
        %2613 = vmatmul.bf16.gmra.mxu0 %v2553
        %v2614 = vpop.f32.mrf.mxu0
        %v2615 = vadd.f32 0.0, %v2614
        %v2616 = vpop.f32.mrf.mxu0
        %v2617 = vadd.f32 0.0, %v2616
        %2618 = vmatmul.bf16.gmra.mxu0 %v2554
        %v2619 = vpop.f32.mrf.mxu0
        %v2620 = vadd.f32 0.0, %v2619
        %v2621 = vpop.f32.mrf.mxu0
        %v2622 = vadd.f32 0.0, %v2621
        %2623 = vmatmul.bf16.gmra.mxu0 %v2555
        %v2624 = vpop.f32.mrf.mxu0
        %v2625 = vadd.f32 0.0, %v2624
        %v2626 = vpop.f32.mrf.mxu0
        %v2627 = vadd.f32 0.0, %v2626
        %2628 = vmatmul.bf16.gmra.mxu0 %v2556
        %v2629 = vpop.f32.mrf.mxu0
        %v2630 = vadd.f32 0.0, %v2629
        %v2631 = vpop.f32.mrf.mxu0
        %v2632 = vadd.f32 0.0, %v2631
        %2633 = vmatmul.bf16.gmra.mxu0 %v2557
        %v2634 = vpop.f32.mrf.mxu0
        %v2635 = vadd.f32 0.0, %v2634
        %v2636 = vpop.f32.mrf.mxu0
        %v2637 = vadd.f32 0.0, %v2636
        %2638 = vdwg.mxu0
        %v2639 = vpack.c.bf16 %v2602, %v2600
        %v2640 = vpack.c.bf16 %v2607, %v2605
        %v2641 = vpack.c.bf16 %v2612, %v2610
        %v2642 = vpack.c.bf16 %v2617, %v2615
        %v2643 = vpack.c.bf16 %v2622, %v2620
        %v2644 = vpack.c.bf16 %v2627, %v2625
        %v2645 = vpack.c.bf16 %v2632, %v2630
        %v2646 = vpack.c.bf16 %v2637, %v2635
        %v2655 = vunpack.c.l.b16 %v1674
        %v2656 = vunpack.c.h.b16 %v1674
        %v2657 = vunpack.c.l.b16 %v1675
        %v2658 = vunpack.c.h.b16 %v1675
        %v2659 = vunpack.c.l.b16 %v1676
        %v2660 = vunpack.c.h.b16 %v1676
        %v2661 = vunpack.c.l.b16 %v1677
        %v2662 = vunpack.c.h.b16 %v1677
        %v2663 = vunpack.c.l.b16 %v1678
        %v2664 = vunpack.c.h.b16 %v1678
        %v2665 = vunpack.c.l.b16 %v1679
        %v2666 = vunpack.c.h.b16 %v1679
        %v2667 = vunpack.c.l.b16 %v1680
        %v2668 = vunpack.c.h.b16 %v1680
        %v2669 = vunpack.c.l.b16 %v1681
        %v2670 = vunpack.c.h.b16 %v1681
        %v2671 = vpack.c.b16 %v2657, %v2655
        %v2672 = vpack.c.b16 %v2658, %v2656
        %v2673 = vpack.c.b16 %v2661, %v2659
        %v2674 = vpack.c.b16 %v2662, %v2660
        %v2675 = vpack.c.b16 %v2665, %v2663
        %v2676 = vpack.c.b16 %v2666, %v2664
        %v2677 = vpack.c.b16 %v2669, %v2667
        %v2678 = vpack.c.b16 %v2670, %v2668
        %v2688 = vsel %vm1728, %v2639, 0
        %v2691 = vsel %vm1728, %v2640, 0
        %v2694 = vsel %vm1728, %v2641, 0
        %v2697 = vsel %vm1728, %v2642, 0
        %v2700 = vsel %vm1728, %v2643, 0
        %v2703 = vsel %vm1728, %v2644, 0
        %v2706 = vsel %vm1728, %v2645, 0
        %v2709 = vsel %vm1728, %v2646, 0
        %2711 = vmatpush.bf16.msra.mxu0 0
        %2712 = vmatpush.bf16.msra.mxu0 0
        %2713 = vmatpush.bf16.msra.mxu0 0
        %2714 = vmatpush.bf16.msra.mxu0 0
        %2715 = vmatpush.bf16.msra.mxu0 %v2677
        %2716 = vmatpush.bf16.msra.mxu0 %v2675
        %2717 = vmatpush.bf16.msra.mxu0 %v2673
        %2718 = vmatpush.bf16.msra.mxu0 %v2671
        %2719 = vmatmul.bf16.gmra.mxu0 %v2688
        %v2720 = vpop.f32.mrf.mxu0
        %v2721 = vadd.f32 0.0, %v2720
        %v2722 = vpop.f32.mrf.mxu0
        %v2723 = vadd.f32 0.0, %v2722
        %2724 = vmatmul.bf16.gmra.mxu0 %v2691
        %v2725 = vpop.f32.mrf.mxu0
        %v2726 = vadd.f32 0.0, %v2725
        %v2727 = vpop.f32.mrf.mxu0
        %v2728 = vadd.f32 0.0, %v2727
        %2729 = vmatmul.bf16.gmra.mxu0 %v2694
        %v2730 = vpop.f32.mrf.mxu0
        %v2731 = vadd.f32 0.0, %v2730
        %v2732 = vpop.f32.mrf.mxu0
        %v2733 = vadd.f32 0.0, %v2732
        %2734 = vmatmul.bf16.gmra.mxu0 %v2697
        %v2735 = vpop.f32.mrf.mxu0
        %v2736 = vadd.f32 0.0, %v2735
        %v2737 = vpop.f32.mrf.mxu0
        %v2738 = vadd.f32 0.0, %v2737
        %2739 = vmatmul.bf16.gmra.mxu0 %v2700
        %v2740 = vpop.f32.mrf.mxu0
        %v2741 = vadd.f32 0.0, %v2740
        %v2742 = vpop.f32.mrf.mxu0
        %v2743 = vadd.f32 0.0, %v2742
        %2744 = vmatmul.bf16.gmra.mxu0 %v2703
        %v2745 = vpop.f32.mrf.mxu0
        %v2746 = vadd.f32 0.0, %v2745
        %v2747 = vpop.f32.mrf.mxu0
        %v2748 = vadd.f32 0.0, %v2747
        %2749 = vmatmul.bf16.gmra.mxu0 %v2706
        %v2750 = vpop.f32.mrf.mxu0
        %v2751 = vadd.f32 0.0, %v2750
        %v2752 = vpop.f32.mrf.mxu0
        %v2753 = vadd.f32 0.0, %v2752
        %2754 = vmatmul.bf16.gmra.mxu0 %v2709
        %v2755 = vpop.f32.mrf.mxu0
        %v2756 = vadd.f32 0.0, %v2755
        %v2757 = vpop.f32.mrf.mxu0
        %v2758 = vadd.f32 0.0, %v2757
        %2759 = vdwg.mxu0
        %2760 = vmatpush.bf16.msra.mxu0 0
        %2761 = vmatpush.bf16.msra.mxu0 0
        %2762 = vmatpush.bf16.msra.mxu0 0
        %2763 = vmatpush.bf16.msra.mxu0 0
        %2764 = vmatpush.bf16.msra.mxu0 %v2678
        %2765 = vmatpush.bf16.msra.mxu0 %v2676
        %2766 = vmatpush.bf16.msra.mxu0 %v2674
        %2767 = vmatpush.bf16.msra.mxu0 %v2672
        %2768 = vmatmul.bf16.gmra.mxu0 %v2688
        %v2769 = vpop.f32.mrf.mxu0
        %v2770 = vadd.f32 0.0, %v2769
        %v2771 = vpop.f32.mrf.mxu0
        %v2772 = vadd.f32 0.0, %v2771
        %2773 = vmatmul.bf16.gmra.mxu0 %v2691
        %v2774 = vpop.f32.mrf.mxu0
        %v2775 = vadd.f32 0.0, %v2774
        %v2776 = vpop.f32.mrf.mxu0
        %v2777 = vadd.f32 0.0, %v2776
        %2778 = vmatmul.bf16.gmra.mxu0 %v2694
        %v2779 = vpop.f32.mrf.mxu0
        %v2780 = vadd.f32 0.0, %v2779
        %v2781 = vpop.f32.mrf.mxu0
        %v2782 = vadd.f32 0.0, %v2781
        %2783 = vmatmul.bf16.gmra.mxu0 %v2697
        %v2784 = vpop.f32.mrf.mxu0
        %v2785 = vadd.f32 0.0, %v2784
        %v2786 = vpop.f32.mrf.mxu0
        %v2787 = vadd.f32 0.0, %v2786
        %2788 = vmatmul.bf16.gmra.mxu0 %v2700
        %v2789 = vpop.f32.mrf.mxu0
        %v2790 = vadd.f32 0.0, %v2789
        %v2791 = vpop.f32.mrf.mxu0
        %v2792 = vadd.f32 0.0, %v2791
        %2793 = vmatmul.bf16.gmra.mxu0 %v2703
        %v2794 = vpop.f32.mrf.mxu0
        %v2795 = vadd.f32 0.0, %v2794
        %v2796 = vpop.f32.mrf.mxu0
        %v2797 = vadd.f32 0.0, %v2796
        %2798 = vmatmul.bf16.gmra.mxu0 %v2706
        %v2799 = vpop.f32.mrf.mxu0
        %v2800 = vadd.f32 0.0, %v2799
        %v2801 = vpop.f32.mrf.mxu0
        %v2802 = vadd.f32 0.0, %v2801
        %2803 = vmatmul.bf16.gmra.mxu0 %v2709
        %v2804 = vpop.f32.mrf.mxu0
        %v2805 = vadd.f32 0.0, %v2804
        %v2806 = vpop.f32.mrf.mxu0
        %v2807 = vadd.f32 0.0, %v2806
        %2808 = vdwg.mxu0
        %v2809 = vadd.f32 %v2213, %v2721
        %v2810 = vadd.f32 %v2214, %v2770
        %v2811 = vadd.f32 %v2215, %v2723
        %v2812 = vadd.f32 %v2216, %v2772
        %v2813 = vadd.f32 %v2217, %v2726
        %v2814 = vadd.f32 %v2218, %v2775
        %v2815 = vadd.f32 %v2219, %v2728
        %v2816 = vadd.f32 %v2220, %v2777
        %v2817 = vadd.f32 %v2221, %v2731
        %v2818 = vadd.f32 %v2222, %v2780
        %v2819 = vadd.f32 %v2223, %v2733
        %v2820 = vadd.f32 %v2224, %v2782
        %v2821 = vadd.f32 %v2225, %v2736
        %v2822 = vadd.f32 %v2226, %v2785
        %v2823 = vadd.f32 %v2227, %v2738
        %v2824 = vadd.f32 %v2228, %v2787
        %v2825 = vadd.f32 %v2229, %v2741
        %v2826 = vadd.f32 %v2230, %v2790
        %v2827 = vadd.f32 %v2231, %v2743
        %v2828 = vadd.f32 %v2232, %v2792
        %v2829 = vadd.f32 %v2233, %v2746
        %v2830 = vadd.f32 %v2234, %v2795
        %v2831 = vadd.f32 %v2235, %v2748
        %v2832 = vadd.f32 %v2236, %v2797
        %v2833 = vadd.f32 %v2237, %v2751
        %v2834 = vadd.f32 %v2238, %v2800
        %v2835 = vadd.f32 %v2239, %v2753
        %v2836 = vadd.f32 %v2240, %v2802
        %v2837 = vadd.f32 %v2241, %v2756
        %v2838 = vadd.f32 %v2242, %v2805
        %v2839 = vadd.f32 %v2243, %v2758
        %v2840 = vadd.f32 %v2244, %v2807
        %v2841 = vpack.c.bf16 %v1602, %v1600
        %v2842 = vpack.c.bf16 %v1606, %v1604
        %v2843 = vpack.c.bf16 %v1610, %v1608
        %v2844 = vpack.c.bf16 %v1614, %v1612
        %v2845 = vpack.c.bf16 %v1618, %v1616
        %v2846 = vpack.c.bf16 %v1622, %v1620
        %v2847 = vpack.c.bf16 %v1626, %v1624
        %v2848 = vpack.c.bf16 %v1630, %v1628
        %v2849 = vpack.c.bf16 %v1174, %v1172
        %v2850 = vpack.c.bf16 %v1179, %v1177
        %v2851 = vpack.c.bf16 %v1184, %v1182
        %v2852 = vpack.c.bf16 %v1189, %v1187
        %v2853 = vpack.c.bf16 %v1194, %v1192
        %v2854 = vpack.c.bf16 %v1199, %v1197
        %v2855 = vpack.c.bf16 %v1204, %v1202
        %v2856 = vpack.c.bf16 %v1209, %v1207
        %v2857 = vpack.c.bf16 %v1562, %v1560
        %v2858 = vpack.c.bf16 %v1567, %v1565
        %v2859 = vpack.c.bf16 %v1572, %v1570
        %v2860 = vpack.c.bf16 %v1577, %v1575
        %v2861 = vpack.c.bf16 %v1582, %v1580
        %v2862 = vpack.c.bf16 %v1587, %v1585
        %v2863 = vpack.c.bf16 %v1592, %v1590
        %v2864 = vpack.c.bf16 %v1597, %v1595
        %v2866 = vsel %vm1728, %v2841, 0
        %v2869 = vsel %vm1728, %v2842, 0
        %v2872 = vsel %vm1728, %v2843, 0
        %v2875 = vsel %vm1728, %v2844, 0
        %v2878 = vsel %vm1728, %v2845, 0
        %v2881 = vsel %vm1728, %v2846, 0
        %v2884 = vsel %vm1728, %v2847, 0
        %v2887 = vsel %vm1728, %v2848, 0
        %v2890 = vsel %vm1728, %v2849, 0
        %v2893 = vsel %vm1728, %v2850, 0
        %v2896 = vsel %vm1728, %v2851, 0
        %v2899 = vsel %vm1728, %v2852, 0
        %v2902 = vsel %vm1728, %v2853, 0
        %v2905 = vsel %vm1728, %v2854, 0
        %v2908 = vsel %vm1728, %v2855, 0
        %v2911 = vsel %vm1728, %v2856, 0
        %2913 = vmatpush.bf16.xpose.msra.mxu0 %v2911
        %2914 = vmatpush.bf16.xpose.msra.mxu0 %v2908
        %2915 = vmatpush.bf16.xpose.msra.mxu0 %v2905
        %2916 = vmatpush.bf16.xpose.msra.mxu0 %v2902
        %2917 = vmatpush.bf16.xpose.msra.mxu0 %v2899
        %2918 = vmatpush.bf16.xpose.msra.mxu0 %v2896
        %2919 = vmatpush.bf16.xpose.msra.mxu0 %v2893
        %2920 = vmatpush.bf16.xpose.msra.mxu0 %v2890
        %2921 = vmatmul.bf16.gmra.mxu0 %v2866
        %v2922 = vpop.f32.mrf.mxu0
        %v2923 = vadd.f32 0.0, %v2922
        %v2924 = vpop.f32.mrf.mxu0
        %v2925 = vadd.f32 0.0, %v2924
        %2926 = vmatmul.bf16.gmra.mxu0 %v2869
        %v2927 = vpop.f32.mrf.mxu0
        %v2928 = vadd.f32 0.0, %v2927
        %v2929 = vpop.f32.mrf.mxu0
        %v2930 = vadd.f32 0.0, %v2929
        %2931 = vmatmul.bf16.gmra.mxu0 %v2872
        %v2932 = vpop.f32.mrf.mxu0
        %v2933 = vadd.f32 0.0, %v2932
        %v2934 = vpop.f32.mrf.mxu0
        %v2935 = vadd.f32 0.0, %v2934
        %2936 = vmatmul.bf16.gmra.mxu0 %v2875
        %v2937 = vpop.f32.mrf.mxu0
        %v2938 = vadd.f32 0.0, %v2937
        %v2939 = vpop.f32.mrf.mxu0
        %v2940 = vadd.f32 0.0, %v2939
        %2941 = vmatmul.bf16.gmra.mxu0 %v2878
        %v2942 = vpop.f32.mrf.mxu0
        %v2943 = vadd.f32 0.0, %v2942
        %v2944 = vpop.f32.mrf.mxu0
        %v2945 = vadd.f32 0.0, %v2944
        %2946 = vmatmul.bf16.gmra.mxu0 %v2881
        %v2947 = vpop.f32.mrf.mxu0
        %v2948 = vadd.f32 0.0, %v2947
        %v2949 = vpop.f32.mrf.mxu0
        %v2950 = vadd.f32 0.0, %v2949
        %2951 = vmatmul.bf16.gmra.mxu0 %v2884
        %v2952 = vpop.f32.mrf.mxu0
        %v2953 = vadd.f32 0.0, %v2952
        %v2954 = vpop.f32.mrf.mxu0
        %v2955 = vadd.f32 0.0, %v2954
        %2956 = vmatmul.bf16.gmra.mxu0 %v2887
        %v2957 = vpop.f32.mrf.mxu0
        %v2958 = vadd.f32 0.0, %v2957
        %v2959 = vpop.f32.mrf.mxu0
        %v2960 = vadd.f32 0.0, %v2959
        %2961 = vdwg.mxu0
        %v2962 = vsel %vm1650, -1e+30, %v2923
        %v2963 = vsel %vm1651, -1e+30, %v2925
        %v2964 = vsel %vm1652, -1e+30, %v2928
        %v2965 = vsel %vm1653, -1e+30, %v2930
        %v2966 = vsel %vm1654, -1e+30, %v2933
        %v2967 = vsel %vm1655, -1e+30, %v2935
        %v2968 = vsel %vm1656, -1e+30, %v2938
        %v2969 = vsel %vm1657, -1e+30, %v2940
        %v2970 = vsel %vm1658, -1e+30, %v2943
        %v2971 = vsel %vm1659, -1e+30, %v2945
        %v2972 = vsel %vm1660, -1e+30, %v2948
        %v2973 = vsel %vm1661, -1e+30, %v2950
        %v2974 = vsel %vm1662, -1e+30, %v2953
        %v2975 = vsel %vm1663, -1e+30, %v2955
        %v2976 = vsel %vm1664, -1e+30, %v2958
        %v2977 = vsel %vm1665, -1e+30, %v2960
        %2978 = vmax.xlane.f32.xlu0 %v2962
        %v2979 = vpop.xlane.xlu0 %2978
        %2980 = vmax.xlane.f32.xlu0 %v2963
        %v2981 = vpop.xlane.xlu0 %2980
        %2982 = vmax.xlane.f32.xlu0 %v2964
        %v2983 = vpop.xlane.xlu0 %2982
        %2984 = vmax.xlane.f32.xlu0 %v2965
        %v2985 = vpop.xlane.xlu0 %2984
        %2986 = vmax.xlane.f32.xlu0 %v2966
        %v2987 = vpop.xlane.xlu0 %2986
        %2988 = vmax.xlane.f32.xlu0 %v2967
        %v2989 = vpop.xlane.xlu0 %2988
        %2990 = vmax.xlane.f32.xlu0 %v2968
        %v2991 = vpop.xlane.xlu0 %2990
        %2992 = vmax.xlane.f32.xlu0 %v2969
        %v2993 = vpop.xlane.xlu0 %2992
        %2994 = vmax.xlane.f32.xlu0 %v2970
        %v2995 = vpop.xlane.xlu0 %2994
        %2996 = vmax.xlane.f32.xlu0 %v2971
        %v2997 = vpop.xlane.xlu0 %2996
        %2998 = vmax.xlane.f32.xlu0 %v2972
        %v2999 = vpop.xlane.xlu0 %2998
        %3000 = vmax.xlane.f32.xlu0 %v2973
        %v3001 = vpop.xlane.xlu0 %3000
        %3002 = vmax.xlane.f32.xlu0 %v2974
        %v3003 = vpop.xlane.xlu0 %3002
        %3004 = vmax.xlane.f32.xlu0 %v2975
        %v3005 = vpop.xlane.xlu0 %3004
        %3006 = vmax.xlane.f32.xlu0 %v2976
        %v3007 = vpop.xlane.xlu0 %3006
        %3008 = vmax.xlane.f32.xlu0 %v2977
        %v3009 = vpop.xlane.xlu0 %3008
        %v3010 = vsub.f32 %v2962, %v2979
        %v3011 = vsub.f32 %v2963, %v2981
        %v3012 = vsub.f32 %v2964, %v2983
        %v3013 = vsub.f32 %v2965, %v2985
        %v3014 = vsub.f32 %v2966, %v2987
        %v3015 = vsub.f32 %v2967, %v2989
        %v3016 = vsub.f32 %v2968, %v2991
        %v3017 = vsub.f32 %v2969, %v2993
        %v3018 = vsub.f32 %v2970, %v2995
        %v3019 = vsub.f32 %v2971, %v2997
        %v3020 = vsub.f32 %v2972, %v2999
        %v3021 = vsub.f32 %v2973, %v3001
        %v3022 = vsub.f32 %v2974, %v3003
        %v3023 = vsub.f32 %v2975, %v3005
        %v3024 = vsub.f32 %v2976, %v3007
        %v3025 = vsub.f32 %v2977, %v3009
        %v3026 = vmul.f32 %v3010, 1.442695
        %v3027 = vpow.pop %v3026
        %v3028 = vmul.f32 %v3011, 1.442695
        %v3029 = vpow.pop %v3028
        %v3030 = vmul.f32 %v3012, 1.442695
        %v3031 = vpow.pop %v3030
        %v3032 = vmul.f32 %v3013, 1.442695
        %v3033 = vpow.pop %v3032
        %v3034 = vmul.f32 %v3014, 1.442695
        %v3035 = vpow.pop %v3034
        %v3036 = vmul.f32 %v3015, 1.442695
        %v3037 = vpow.pop %v3036
        %v3038 = vmul.f32 %v3016, 1.442695
        %v3039 = vpow.pop %v3038
        %v3040 = vmul.f32 %v3017, 1.442695
        %v3041 = vpow.pop %v3040
        %v3042 = vmul.f32 %v3018, 1.442695
        %v3043 = vpow.pop %v3042
        %v3044 = vmul.f32 %v3019, 1.442695
        %v3045 = vpow.pop %v3044
        %v3046 = vmul.f32 %v3020, 1.442695
        %v3047 = vpow.pop %v3046
        %v3048 = vmul.f32 %v3021, 1.442695
        %v3049 = vpow.pop %v3048
        %v3050 = vmul.f32 %v3022, 1.442695
        %v3051 = vpow.pop %v3050
        %v3052 = vmul.f32 %v3023, 1.442695
        %v3053 = vpow.pop %v3052
        %v3054 = vmul.f32 %v3024, 1.442695
        %v3055 = vpow.pop %v3054
        %v3056 = vmul.f32 %v3025, 1.442695
        %v3057 = vpow.pop %v3056
        %3058 = vadd.xlane.f32.xlu0 %v3027
        %v3059 = vpop.xlane.xlu0 %3058
        %3060 = vadd.xlane.f32.xlu0 %v3029
        %v3061 = vpop.xlane.xlu0 %3060
        %3062 = vadd.xlane.f32.xlu0 %v3031
        %v3063 = vpop.xlane.xlu0 %3062
        %3064 = vadd.xlane.f32.xlu0 %v3033
        %v3065 = vpop.xlane.xlu0 %3064
        %3066 = vadd.xlane.f32.xlu0 %v3035
        %v3067 = vpop.xlane.xlu0 %3066
        %3068 = vadd.xlane.f32.xlu0 %v3037
        %v3069 = vpop.xlane.xlu0 %3068
        %3070 = vadd.xlane.f32.xlu0 %v3039
        %v3071 = vpop.xlane.xlu0 %3070
        %3072 = vadd.xlane.f32.xlu0 %v3041
        %v3073 = vpop.xlane.xlu0 %3072
        %3074 = vadd.xlane.f32.xlu0 %v3043
        %v3075 = vpop.xlane.xlu0 %3074
        %3076 = vadd.xlane.f32.xlu0 %v3045
        %v3077 = vpop.xlane.xlu0 %3076
        %3078 = vadd.xlane.f32.xlu0 %v3047
        %v3079 = vpop.xlane.xlu0 %3078
        %3080 = vadd.xlane.f32.xlu0 %v3049
        %v3081 = vpop.xlane.xlu0 %3080
        %3082 = vadd.xlane.f32.xlu0 %v3051
        %v3083 = vpop.xlane.xlu0 %3082
        %3084 = vadd.xlane.f32.xlu0 %v3053
        %v3085 = vpop.xlane.xlu0 %3084
        %3086 = vadd.xlane.f32.xlu0 %v3055
        %v3087 = vpop.xlane.xlu0 %3086
        %3088 = vadd.xlane.f32.xlu0 %v3057
        %v3089 = vpop.xlane.xlu0 %3088
        %v3090 = vrcp.pop %v3059
        %v3091 = vrcp.pop %v3061
        %v3092 = vrcp.pop %v3063
        %v3093 = vrcp.pop %v3065
        %v3094 = vrcp.pop %v3067
        %v3095 = vrcp.pop %v3069
        %v3096 = vrcp.pop %v3071
        %v3097 = vrcp.pop %v3073
        %v3098 = vrcp.pop %v3075
        %v3099 = vrcp.pop %v3077
        %v3100 = vrcp.pop %v3079
        %v3101 = vrcp.pop %v3081
        %v3102 = vrcp.pop %v3083
        %v3103 = vrcp.pop %v3085
        %v3104 = vrcp.pop %v3087
        %v3105 = vrcp.pop %v3089
        %v3106 = vmul.f32 %v3027, %v3090
        %v3107 = vmul.f32 %v3029, %v3091
        %v3108 = vmul.f32 %v3031, %v3092
        %v3109 = vmul.f32 %v3033, %v3093
        %v3110 = vmul.f32 %v3035, %v3094
        %v3111 = vmul.f32 %v3037, %v3095
        %v3112 = vmul.f32 %v3039, %v3096
        %v3113 = vmul.f32 %v3041, %v3097
        %v3114 = vmul.f32 %v3043, %v3098
        %v3115 = vmul.f32 %v3045, %v3099
        %v3116 = vmul.f32 %v3047, %v3100
        %v3117 = vmul.f32 %v3049, %v3101
        %v3118 = vmul.f32 %v3051, %v3102
        %v3119 = vmul.f32 %v3053, %v3103
        %v3120 = vmul.f32 %v3055, %v3104
        %v3121 = vmul.f32 %v3057, %v3105
        %v3122 = vpack.c.bf16 %v3107, %v3106
        %v3123 = vpack.c.bf16 %v3109, %v3108
        %v3124 = vpack.c.bf16 %v3111, %v3110
        %v3125 = vpack.c.bf16 %v3113, %v3112
        %v3126 = vpack.c.bf16 %v3115, %v3114
        %v3127 = vpack.c.bf16 %v3117, %v3116
        %v3128 = vpack.c.bf16 %v3119, %v3118
        %v3129 = vpack.c.bf16 %v3121, %v3120
        %3130 = vmatpush.bf16.msra.mxu0 %v2864
        %3131 = vmatpush.bf16.msra.mxu0 %v2863
        %3132 = vmatpush.bf16.msra.mxu0 %v2862
        %3133 = vmatpush.bf16.msra.mxu0 %v2861
        %3134 = vmatpush.bf16.msra.mxu0 %v2860
        %3135 = vmatpush.bf16.msra.mxu0 %v2859
        %3136 = vmatpush.bf16.msra.mxu0 %v2858
        %3137 = vmatpush.bf16.msra.mxu0 %v2857
        %3138 = vmatmul.bf16.gmra.mxu0 %v3122
        %v3139 = vpop.f32.mrf.mxu0
        %v3140 = vadd.f32 0.0, %v3139
        %v3141 = vpop.f32.mrf.mxu0
        %v3142 = vadd.f32 0.0, %v3141
        %3143 = vmatmul.bf16.gmra.mxu0 %v3123
        %v3144 = vpop.f32.mrf.mxu0
        %v3145 = vadd.f32 0.0, %v3144
        %v3146 = vpop.f32.mrf.mxu0
        %v3147 = vadd.f32 0.0, %v3146
        %3148 = vmatmul.bf16.gmra.mxu0 %v3124
        %v3149 = vpop.f32.mrf.mxu0
        %v3150 = vadd.f32 0.0, %v3149
        %v3151 = vpop.f32.mrf.mxu0
        %v3152 = vadd.f32 0.0, %v3151
        %3153 = vmatmul.bf16.gmra.mxu0 %v3125
        %v3154 = vpop.f32.mrf.mxu0
        %v3155 = vadd.f32 0.0, %v3154
        %v3156 = vpop.f32.mrf.mxu0
        %v3157 = vadd.f32 0.0, %v3156
        %3158 = vmatmul.bf16.gmra.mxu0 %v3126
        %v3159 = vpop.f32.mrf.mxu0
        %v3160 = vadd.f32 0.0, %v3159
        %v3161 = vpop.f32.mrf.mxu0
        %v3162 = vadd.f32 0.0, %v3161
        %3163 = vmatmul.bf16.gmra.mxu0 %v3127
        %v3164 = vpop.f32.mrf.mxu0
        %v3165 = vadd.f32 0.0, %v3164
        %v3166 = vpop.f32.mrf.mxu0
        %v3167 = vadd.f32 0.0, %v3166
        %3168 = vmatmul.bf16.gmra.mxu0 %v3128
        %v3169 = vpop.f32.mrf.mxu0
        %v3170 = vadd.f32 0.0, %v3169
        %v3171 = vpop.f32.mrf.mxu0
        %v3172 = vadd.f32 0.0, %v3171
        %3173 = vmatmul.bf16.gmra.mxu0 %v3129
        %v3174 = vpop.f32.mrf.mxu0
        %v3175 = vadd.f32 0.0, %v3174
        %v3176 = vpop.f32.mrf.mxu0
        %v3177 = vadd.f32 0.0, %v3176
        %3178 = vdwg.mxu0
        %v3179 = vpack.c.bf16 %v3142, %v3140
        %v3180 = vpack.c.bf16 %v3147, %v3145
        %v3181 = vpack.c.bf16 %v3152, %v3150
        %v3182 = vpack.c.bf16 %v3157, %v3155
        %v3183 = vpack.c.bf16 %v3162, %v3160
        %v3184 = vpack.c.bf16 %v3167, %v3165
        %v3185 = vpack.c.bf16 %v3172, %v3170
        %v3186 = vpack.c.bf16 %v3177, %v3175
        %v3195 = vunpack.c.l.b16 %v1682
        %v3196 = vunpack.c.h.b16 %v1682
        %v3197 = vunpack.c.l.b16 %v1683
        %v3198 = vunpack.c.h.b16 %v1683
        %v3199 = vunpack.c.l.b16 %v1684
        %v3200 = vunpack.c.h.b16 %v1684
        %v3201 = vunpack.c.l.b16 %v1685
        %v3202 = vunpack.c.h.b16 %v1685
        %v3203 = vunpack.c.l.b16 %v1686
        %v3204 = vunpack.c.h.b16 %v1686
        %v3205 = vunpack.c.l.b16 %v1687
        %v3206 = vunpack.c.h.b16 %v1687
        %v3207 = vunpack.c.l.b16 %v1688
        %v3208 = vunpack.c.h.b16 %v1688
        %v3209 = vunpack.c.l.b16 %v1689
        %v3210 = vunpack.c.h.b16 %v1689
        %v3211 = vpack.c.b16 %v3197, %v3195
        %v3212 = vpack.c.b16 %v3198, %v3196
        %v3213 = vpack.c.b16 %v3201, %v3199
        %v3214 = vpack.c.b16 %v3202, %v3200
        %v3215 = vpack.c.b16 %v3205, %v3203
        %v3216 = vpack.c.b16 %v3206, %v3204
        %v3217 = vpack.c.b16 %v3209, %v3207
        %v3218 = vpack.c.b16 %v3210, %v3208
        %v3228 = vsel %vm1728, %v3179, 0
        %v3231 = vsel %vm1728, %v3180, 0
        %v3234 = vsel %vm1728, %v3181, 0
        %v3237 = vsel %vm1728, %v3182, 0
        %v3240 = vsel %vm1728, %v3183, 0
        %v3243 = vsel %vm1728, %v3184, 0
        %v3246 = vsel %vm1728, %v3185, 0
        %v3249 = vsel %vm1728, %v3186, 0
        %3251 = vmatpush.bf16.msra.mxu0 0
        %3252 = vmatpush.bf16.msra.mxu0 0
        %3253 = vmatpush.bf16.msra.mxu0 0
        %3254 = vmatpush.bf16.msra.mxu0 0
        %3255 = vmatpush.bf16.msra.mxu0 %v3217
        %3256 = vmatpush.bf16.msra.mxu0 %v3215
        %3257 = vmatpush.bf16.msra.mxu0 %v3213
        %3258 = vmatpush.bf16.msra.mxu0 %v3211
        %3259 = vmatmul.bf16.gmra.mxu0 %v3228
        %v3260 = vpop.f32.mrf.mxu0
        %v3261 = vadd.f32 0.0, %v3260
        %v3262 = vpop.f32.mrf.mxu0
        %v3263 = vadd.f32 0.0, %v3262
        %3264 = vmatmul.bf16.gmra.mxu0 %v3231
        %v3265 = vpop.f32.mrf.mxu0
        %v3266 = vadd.f32 0.0, %v3265
        %v3267 = vpop.f32.mrf.mxu0
        %v3268 = vadd.f32 0.0, %v3267
        %3269 = vmatmul.bf16.gmra.mxu0 %v3234
        %v3270 = vpop.f32.mrf.mxu0
        %v3271 = vadd.f32 0.0, %v3270
        %v3272 = vpop.f32.mrf.mxu0
        %v3273 = vadd.f32 0.0, %v3272
        %3274 = vmatmul.bf16.gmra.mxu0 %v3237
        %v3275 = vpop.f32.mrf.mxu0
        %v3276 = vadd.f32 0.0, %v3275
        %v3277 = vpop.f32.mrf.mxu0
        %v3278 = vadd.f32 0.0, %v3277
        %3279 = vmatmul.bf16.gmra.mxu0 %v3240
        %v3280 = vpop.f32.mrf.mxu0
        %v3281 = vadd.f32 0.0, %v3280
        %v3282 = vpop.f32.mrf.mxu0
        %v3283 = vadd.f32 0.0, %v3282
        %3284 = vmatmul.bf16.gmra.mxu0 %v3243
        %v3285 = vpop.f32.mrf.mxu0
        %v3286 = vadd.f32 0.0, %v3285
        %v3287 = vpop.f32.mrf.mxu0
        %v3288 = vadd.f32 0.0, %v3287
        %3289 = vmatmul.bf16.gmra.mxu0 %v3246
        %v3290 = vpop.f32.mrf.mxu0
        %v3291 = vadd.f32 0.0, %v3290
        %v3292 = vpop.f32.mrf.mxu0
        %v3293 = vadd.f32 0.0, %v3292
        %3294 = vmatmul.bf16.gmra.mxu0 %v3249
        %v3295 = vpop.f32.mrf.mxu0
        %v3296 = vadd.f32 0.0, %v3295
        %v3297 = vpop.f32.mrf.mxu0
        %v3298 = vadd.f32 0.0, %v3297
        %3299 = vdwg.mxu0
        %3300 = vmatpush.bf16.msra.mxu0 0
        %3301 = vmatpush.bf16.msra.mxu0 0
        %3302 = vmatpush.bf16.msra.mxu0 0
        %3303 = vmatpush.bf16.msra.mxu0 0
        %3304 = vmatpush.bf16.msra.mxu0 %v3218
        %3305 = vmatpush.bf16.msra.mxu0 %v3216
        %3306 = vmatpush.bf16.msra.mxu0 %v3214
        %3307 = vmatpush.bf16.msra.mxu0 %v3212
        %3308 = vmatmul.bf16.gmra.mxu0 %v3228
        %v3309 = vpop.f32.mrf.mxu0
        %v3310 = vadd.f32 0.0, %v3309
        %v3311 = vpop.f32.mrf.mxu0
        %v3312 = vadd.f32 0.0, %v3311
        %3313 = vmatmul.bf16.gmra.mxu0 %v3231
        %v3314 = vpop.f32.mrf.mxu0
        %v3315 = vadd.f32 0.0, %v3314
        %v3316 = vpop.f32.mrf.mxu0
        %v3317 = vadd.f32 0.0, %v3316
        %3318 = vmatmul.bf16.gmra.mxu0 %v3234
        %v3319 = vpop.f32.mrf.mxu0
        %v3320 = vadd.f32 0.0, %v3319
        %v3321 = vpop.f32.mrf.mxu0
        %v3322 = vadd.f32 0.0, %v3321
        %3323 = vmatmul.bf16.gmra.mxu0 %v3237
        %v3324 = vpop.f32.mrf.mxu0
        %v3325 = vadd.f32 0.0, %v3324
        %v3326 = vpop.f32.mrf.mxu0
        %v3327 = vadd.f32 0.0, %v3326
        %3328 = vmatmul.bf16.gmra.mxu0 %v3240
        %v3329 = vpop.f32.mrf.mxu0
        %v3330 = vadd.f32 0.0, %v3329
        %v3331 = vpop.f32.mrf.mxu0
        %v3332 = vadd.f32 0.0, %v3331
        %3333 = vmatmul.bf16.gmra.mxu0 %v3243
        %v3334 = vpop.f32.mrf.mxu0
        %v3335 = vadd.f32 0.0, %v3334
        %v3336 = vpop.f32.mrf.mxu0
        %v3337 = vadd.f32 0.0, %v3336
        %3338 = vmatmul.bf16.gmra.mxu0 %v3246
        %v3339 = vpop.f32.mrf.mxu0
        %v3340 = vadd.f32 0.0, %v3339
        %v3341 = vpop.f32.mrf.mxu0
        %v3342 = vadd.f32 0.0, %v3341
        %3343 = vmatmul.bf16.gmra.mxu0 %v3249
        %v3344 = vpop.f32.mrf.mxu0
        %v3345 = vadd.f32 0.0, %v3344
        %v3346 = vpop.f32.mrf.mxu0
        %v3347 = vadd.f32 0.0, %v3346
        %3348 = vdwg.mxu0
        %v3349 = vadd.f32 %v2809, %v3261
        %v3350 = vadd.f32 %v2810, %v3310
        %v3351 = vadd.f32 %v2811, %v3263
        %v3352 = vadd.f32 %v2812, %v3312
        %v3353 = vadd.f32 %v2813, %v3266
        %v3354 = vadd.f32 %v2814, %v3315
        %v3355 = vadd.f32 %v2815, %v3268
        %v3356 = vadd.f32 %v2816, %v3317
        %v3357 = vadd.f32 %v2817, %v3271
        %v3358 = vadd.f32 %v2818, %v3320
        %v3359 = vadd.f32 %v2819, %v3273
        %v3360 = vadd.f32 %v2820, %v3322
        %v3361 = vadd.f32 %v2821, %v3276
        %v3362 = vadd.f32 %v2822, %v3325
        %v3363 = vadd.f32 %v2823, %v3278
        %v3364 = vadd.f32 %v2824, %v3327
        %v3365 = vadd.f32 %v2825, %v3281
        %v3366 = vadd.f32 %v2826, %v3330
        %v3367 = vadd.f32 %v2827, %v3283
        %v3368 = vadd.f32 %v2828, %v3332
        %v3369 = vadd.f32 %v2829, %v3286
        %v3370 = vadd.f32 %v2830, %v3335
        %v3371 = vadd.f32 %v2831, %v3288
        %v3372 = vadd.f32 %v2832, %v3337
        %v3373 = vadd.f32 %v2833, %v3291
        %v3374 = vadd.f32 %v2834, %v3340
        %v3375 = vadd.f32 %v2835, %v3293
        %v3376 = vadd.f32 %v2836, %v3342
        %v3377 = vadd.f32 %v2837, %v3296
        %v3378 = vadd.f32 %v2838, %v3345
        %v3379 = vadd.f32 %v2839, %v3298
        %v3380 = vadd.f32 %v2840, %v3347
        %3389 = vrot.lane.b32.xlu0 %v2841, 64
        %v3390 = vpop.permute.xlu0 %3389
        %3391 = vrot.lane.b32.xlu0 %v2842, 64
        %v3392 = vpop.permute.xlu0 %3391
        %3393 = vrot.lane.b32.xlu0 %v2843, 64
        %v3394 = vpop.permute.xlu0 %3393
        %3395 = vrot.lane.b32.xlu0 %v2844, 64
        %v3396 = vpop.permute.xlu0 %3395
        %3397 = vrot.lane.b32.xlu0 %v2845, 64
        %v3398 = vpop.permute.xlu0 %3397
        %3399 = vrot.lane.b32.xlu0 %v2846, 64
        %v3400 = vpop.permute.xlu0 %3399
        %3401 = vrot.lane.b32.xlu0 %v2847, 64
        %v3402 = vpop.permute.xlu0 %3401
        %3403 = vrot.lane.b32.xlu0 %v2848, 64
        %v3404 = vpop.permute.xlu0 %3403
        %3413 = vrot.lane.b32.xlu0 %v2849, 64
        %v3414 = vpop.permute.xlu0 %3413
        %3415 = vrot.lane.b32.xlu0 %v2850, 64
        %v3416 = vpop.permute.xlu0 %3415
        %3417 = vrot.lane.b32.xlu0 %v2851, 64
        %v3418 = vpop.permute.xlu0 %3417
        %3419 = vrot.lane.b32.xlu0 %v2852, 64
        %v3420 = vpop.permute.xlu0 %3419
        %3421 = vrot.lane.b32.xlu0 %v2853, 64
        %v3422 = vpop.permute.xlu0 %3421
        %3423 = vrot.lane.b32.xlu0 %v2854, 64
        %v3424 = vpop.permute.xlu0 %3423
        %3425 = vrot.lane.b32.xlu0 %v2855, 64
        %v3426 = vpop.permute.xlu0 %3425
        %3427 = vrot.lane.b32.xlu0 %v2856, 64
        %v3428 = vpop.permute.xlu0 %3427
        %v3430 = vsel %vm1728, %v3390, 0
        %v3433 = vsel %vm1728, %v3392, 0
        %v3436 = vsel %vm1728, %v3394, 0
        %v3439 = vsel %vm1728, %v3396, 0
        %v3442 = vsel %vm1728, %v3398, 0
        %v3445 = vsel %vm1728, %v3400, 0
        %v3448 = vsel %vm1728, %v3402, 0
        %v3451 = vsel %vm1728, %v3404, 0
        %v3454 = vsel %vm1728, %v3414, 0
        %v3457 = vsel %vm1728, %v3416, 0
        %v3460 = vsel %vm1728, %v3418, 0
        %v3463 = vsel %vm1728, %v3420, 0
        %v3466 = vsel %vm1728, %v3422, 0
        %v3469 = vsel %vm1728, %v3424, 0
        %v3472 = vsel %vm1728, %v3426, 0
        %v3475 = vsel %vm1728, %v3428, 0
        %3477 = vmatpush.bf16.xpose.msra.mxu0 %v3475
        %3478 = vmatpush.bf16.xpose.msra.mxu0 %v3472
        %3479 = vmatpush.bf16.xpose.msra.mxu0 %v3469
        %3480 = vmatpush.bf16.xpose.msra.mxu0 %v3466
        %3481 = vmatpush.bf16.xpose.msra.mxu0 %v3463
        %3482 = vmatpush.bf16.xpose.msra.mxu0 %v3460
        %3483 = vmatpush.bf16.xpose.msra.mxu0 %v3457
        %3484 = vmatpush.bf16.xpose.msra.mxu0 %v3454
        %3485 = vmatmul.bf16.gmra.mxu0 %v3430
        %v3486 = vpop.f32.mrf.mxu0
        %v3487 = vadd.f32 0.0, %v3486
        %v3488 = vpop.f32.mrf.mxu0
        %v3489 = vadd.f32 0.0, %v3488
        %3490 = vmatmul.bf16.gmra.mxu0 %v3433
        %v3491 = vpop.f32.mrf.mxu0
        %v3492 = vadd.f32 0.0, %v3491
        %v3493 = vpop.f32.mrf.mxu0
        %v3494 = vadd.f32 0.0, %v3493
        %3495 = vmatmul.bf16.gmra.mxu0 %v3436
        %v3496 = vpop.f32.mrf.mxu0
        %v3497 = vadd.f32 0.0, %v3496
        %v3498 = vpop.f32.mrf.mxu0
        %v3499 = vadd.f32 0.0, %v3498
        %3500 = vmatmul.bf16.gmra.mxu0 %v3439
        %v3501 = vpop.f32.mrf.mxu0
        %v3502 = vadd.f32 0.0, %v3501
        %v3503 = vpop.f32.mrf.mxu0
        %v3504 = vadd.f32 0.0, %v3503
        %3505 = vmatmul.bf16.gmra.mxu0 %v3442
        %v3506 = vpop.f32.mrf.mxu0
        %v3507 = vadd.f32 0.0, %v3506
        %v3508 = vpop.f32.mrf.mxu0
        %v3509 = vadd.f32 0.0, %v3508
        %3510 = vmatmul.bf16.gmra.mxu0 %v3445
        %v3511 = vpop.f32.mrf.mxu0
        %v3512 = vadd.f32 0.0, %v3511
        %v3513 = vpop.f32.mrf.mxu0
        %v3514 = vadd.f32 0.0, %v3513
        %3515 = vmatmul.bf16.gmra.mxu0 %v3448
        %v3516 = vpop.f32.mrf.mxu0
        %v3517 = vadd.f32 0.0, %v3516
        %v3518 = vpop.f32.mrf.mxu0
        %v3519 = vadd.f32 0.0, %v3518
        %3520 = vmatmul.bf16.gmra.mxu0 %v3451
        %v3521 = vpop.f32.mrf.mxu0
        %v3522 = vadd.f32 0.0, %v3521
        %v3523 = vpop.f32.mrf.mxu0
        %v3524 = vadd.f32 0.0, %v3523
        %3525 = vdwg.mxu0
        %v3526 = vsel %vm1650, -1e+30, %v3487
        %v3527 = vsel %vm1651, -1e+30, %v3489
        %v3528 = vsel %vm1652, -1e+30, %v3492
        %v3529 = vsel %vm1653, -1e+30, %v3494
        %v3530 = vsel %vm1654, -1e+30, %v3497
        %v3531 = vsel %vm1655, -1e+30, %v3499
        %v3532 = vsel %vm1656, -1e+30, %v3502
        %v3533 = vsel %vm1657, -1e+30, %v3504
        %v3534 = vsel %vm1658, -1e+30, %v3507
        %v3535 = vsel %vm1659, -1e+30, %v3509
        %v3536 = vsel %vm1660, -1e+30, %v3512
        %v3537 = vsel %vm1661, -1e+30, %v3514
        %v3538 = vsel %vm1662, -1e+30, %v3517
        %v3539 = vsel %vm1663, -1e+30, %v3519
        %v3540 = vsel %vm1664, -1e+30, %v3522
        %v3541 = vsel %vm1665, -1e+30, %v3524
        %3542 = vmax.xlane.f32.xlu0 %v3526
        %v3543 = vpop.xlane.xlu0 %3542
        %3544 = vmax.xlane.f32.xlu0 %v3527
        %v3545 = vpop.xlane.xlu0 %3544
        %3546 = vmax.xlane.f32.xlu0 %v3528
        %v3547 = vpop.xlane.xlu0 %3546
        %3548 = vmax.xlane.f32.xlu0 %v3529
        %v3549 = vpop.xlane.xlu0 %3548
        %3550 = vmax.xlane.f32.xlu0 %v3530
        %v3551 = vpop.xlane.xlu0 %3550
        %3552 = vmax.xlane.f32.xlu0 %v3531
        %v3553 = vpop.xlane.xlu0 %3552
        %3554 = vmax.xlane.f32.xlu0 %v3532
        %v3555 = vpop.xlane.xlu0 %3554
        %3556 = vmax.xlane.f32.xlu0 %v3533
        %v3557 = vpop.xlane.xlu0 %3556
        %3558 = vmax.xlane.f32.xlu0 %v3534
        %v3559 = vpop.xlane.xlu0 %3558
        %3560 = vmax.xlane.f32.xlu0 %v3535
        %v3561 = vpop.xlane.xlu0 %3560
        %3562 = vmax.xlane.f32.xlu0 %v3536
        %v3563 = vpop.xlane.xlu0 %3562
        %3564 = vmax.xlane.f32.xlu0 %v3537
        %v3565 = vpop.xlane.xlu0 %3564
        %3566 = vmax.xlane.f32.xlu0 %v3538
        %v3567 = vpop.xlane.xlu0 %3566
        %3568 = vmax.xlane.f32.xlu0 %v3539
        %v3569 = vpop.xlane.xlu0 %3568
        %3570 = vmax.xlane.f32.xlu0 %v3540
        %v3571 = vpop.xlane.xlu0 %3570
        %3572 = vmax.xlane.f32.xlu0 %v3541
        %v3573 = vpop.xlane.xlu0 %3572
        %v3574 = vsub.f32 %v3526, %v3543
        %v3575 = vsub.f32 %v3527, %v3545
        %v3576 = vsub.f32 %v3528, %v3547
        %v3577 = vsub.f32 %v3529, %v3549
        %v3578 = vsub.f32 %v3530, %v3551
        %v3579 = vsub.f32 %v3531, %v3553
        %v3580 = vsub.f32 %v3532, %v3555
        %v3581 = vsub.f32 %v3533, %v3557
        %v3582 = vsub.f32 %v3534, %v3559
        %v3583 = vsub.f32 %v3535, %v3561
        %v3584 = vsub.f32 %v3536, %v3563
        %v3585 = vsub.f32 %v3537, %v3565
        %v3586 = vsub.f32 %v3538, %v3567
        %v3587 = vsub.f32 %v3539, %v3569
        %v3588 = vsub.f32 %v3540, %v3571
        %v3589 = vsub.f32 %v3541, %v3573
        %v3590 = vmul.f32 %v3574, 1.442695
        %v3591 = vpow.pop %v3590
        %v3592 = vmul.f32 %v3575, 1.442695
        %v3593 = vpow.pop %v3592
        %v3594 = vmul.f32 %v3576, 1.442695
        %v3595 = vpow.pop %v3594
        %v3596 = vmul.f32 %v3577, 1.442695
        %v3597 = vpow.pop %v3596
        %v3598 = vmul.f32 %v3578, 1.442695
        %v3599 = vpow.pop %v3598
        %v3600 = vmul.f32 %v3579, 1.442695
        %v3601 = vpow.pop %v3600
        %v3602 = vmul.f32 %v3580, 1.442695
        %v3603 = vpow.pop %v3602
        %v3604 = vmul.f32 %v3581, 1.442695
        %v3605 = vpow.pop %v3604
        %v3606 = vmul.f32 %v3582, 1.442695
        %v3607 = vpow.pop %v3606
        %v3608 = vmul.f32 %v3583, 1.442695
        %v3609 = vpow.pop %v3608
        %v3610 = vmul.f32 %v3584, 1.442695
        %v3611 = vpow.pop %v3610
        %v3612 = vmul.f32 %v3585, 1.442695
        %v3613 = vpow.pop %v3612
        %v3614 = vmul.f32 %v3586, 1.442695
        %v3615 = vpow.pop %v3614
        %v3616 = vmul.f32 %v3587, 1.442695
        %v3617 = vpow.pop %v3616
        %v3618 = vmul.f32 %v3588, 1.442695
        %v3619 = vpow.pop %v3618
        %v3620 = vmul.f32 %v3589, 1.442695
        %v3621 = vpow.pop %v3620
        %3622 = vadd.xlane.f32.xlu0 %v3591
        %v3623 = vpop.xlane.xlu0 %3622
        %3624 = vadd.xlane.f32.xlu0 %v3593
        %v3625 = vpop.xlane.xlu0 %3624
        %3626 = vadd.xlane.f32.xlu0 %v3595
        %v3627 = vpop.xlane.xlu0 %3626
        %3628 = vadd.xlane.f32.xlu0 %v3597
        %v3629 = vpop.xlane.xlu0 %3628
        %3630 = vadd.xlane.f32.xlu0 %v3599
        %v3631 = vpop.xlane.xlu0 %3630
        %3632 = vadd.xlane.f32.xlu0 %v3601
        %v3633 = vpop.xlane.xlu0 %3632
        %3634 = vadd.xlane.f32.xlu0 %v3603
        %v3635 = vpop.xlane.xlu0 %3634
        %3636 = vadd.xlane.f32.xlu0 %v3605
        %v3637 = vpop.xlane.xlu0 %3636
        %3638 = vadd.xlane.f32.xlu0 %v3607
        %v3639 = vpop.xlane.xlu0 %3638
        %3640 = vadd.xlane.f32.xlu0 %v3609
        %v3641 = vpop.xlane.xlu0 %3640
        %3642 = vadd.xlane.f32.xlu0 %v3611
        %v3643 = vpop.xlane.xlu0 %3642
        %3644 = vadd.xlane.f32.xlu0 %v3613
        %v3645 = vpop.xlane.xlu0 %3644
        %3646 = vadd.xlane.f32.xlu0 %v3615
        %v3647 = vpop.xlane.xlu0 %3646
        %3648 = vadd.xlane.f32.xlu0 %v3617
        %v3649 = vpop.xlane.xlu0 %3648
        %3650 = vadd.xlane.f32.xlu0 %v3619
        %v3651 = vpop.xlane.xlu0 %3650
        %3652 = vadd.xlane.f32.xlu0 %v3621
        %v3653 = vpop.xlane.xlu0 %3652
        %v3654 = vrcp.pop %v3623
        %v3655 = vrcp.pop %v3625
        %v3656 = vrcp.pop %v3627
        %v3657 = vrcp.pop %v3629
        %v3658 = vrcp.pop %v3631
        %v3659 = vrcp.pop %v3633
        %v3660 = vrcp.pop %v3635
        %v3661 = vrcp.pop %v3637
        %v3662 = vrcp.pop %v3639
        %v3663 = vrcp.pop %v3641
        %v3664 = vrcp.pop %v3643
        %v3665 = vrcp.pop %v3645
        %v3666 = vrcp.pop %v3647
        %v3667 = vrcp.pop %v3649
        %v3668 = vrcp.pop %v3651
        %v3669 = vrcp.pop %v3653
        %v3670 = vmul.f32 %v3591, %v3654
        %v3671 = vmul.f32 %v3593, %v3655
        %v3672 = vmul.f32 %v3595, %v3656
        %v3673 = vmul.f32 %v3597, %v3657
        %v3674 = vmul.f32 %v3599, %v3658
        %v3675 = vmul.f32 %v3601, %v3659
        %v3676 = vmul.f32 %v3603, %v3660
        %v3677 = vmul.f32 %v3605, %v3661
        %v3678 = vmul.f32 %v3607, %v3662
        %v3679 = vmul.f32 %v3609, %v3663
        %v3680 = vmul.f32 %v3611, %v3664
        %v3681 = vmul.f32 %v3613, %v3665
        %v3682 = vmul.f32 %v3615, %v3666
        %v3683 = vmul.f32 %v3617, %v3667
        %v3684 = vmul.f32 %v3619, %v3668
        %v3685 = vmul.f32 %v3621, %v3669
        %v3686 = vpack.c.bf16 %v3671, %v3670
        %v3687 = vpack.c.bf16 %v3673, %v3672
        %v3688 = vpack.c.bf16 %v3675, %v3674
        %v3689 = vpack.c.bf16 %v3677, %v3676
        %v3690 = vpack.c.bf16 %v3679, %v3678
        %v3691 = vpack.c.bf16 %v3681, %v3680
        %v3692 = vpack.c.bf16 %v3683, %v3682
        %v3693 = vpack.c.bf16 %v3685, %v3684
        %3702 = vrot.lane.b32.xlu0 %v2857, 64
        %v3703 = vpop.permute.xlu0 %3702
        %3704 = vrot.lane.b32.xlu0 %v2858, 64
        %v3705 = vpop.permute.xlu0 %3704
        %3706 = vrot.lane.b32.xlu0 %v2859, 64
        %v3707 = vpop.permute.xlu0 %3706
        %3708 = vrot.lane.b32.xlu0 %v2860, 64
        %v3709 = vpop.permute.xlu0 %3708
        %3710 = vrot.lane.b32.xlu0 %v2861, 64
        %v3711 = vpop.permute.xlu0 %3710
        %3712 = vrot.lane.b32.xlu0 %v2862, 64
        %v3713 = vpop.permute.xlu0 %3712
        %3714 = vrot.lane.b32.xlu0 %v2863, 64
        %v3715 = vpop.permute.xlu0 %3714
        %3716 = vrot.lane.b32.xlu0 %v2864, 64
        %v3717 = vpop.permute.xlu0 %3716
        %3726 = vmatpush.bf16.msra.mxu0 %v3717
        %3727 = vmatpush.bf16.msra.mxu0 %v3715
        %3728 = vmatpush.bf16.msra.mxu0 %v3713
        %3729 = vmatpush.bf16.msra.mxu0 %v3711
        %3730 = vmatpush.bf16.msra.mxu0 %v3709
        %3731 = vmatpush.bf16.msra.mxu0 %v3707
        %3732 = vmatpush.bf16.msra.mxu0 %v3705
        %3733 = vmatpush.bf16.msra.mxu0 %v3703
        %3734 = vmatmul.bf16.gmra.mxu0 %v3686
        %v3735 = vpop.f32.mrf.mxu0
        %v3736 = vadd.f32 0.0, %v3735
        %v3737 = vpop.f32.mrf.mxu0
        %v3738 = vadd.f32 0.0, %v3737
        %3739 = vmatmul.bf16.gmra.mxu0 %v3687
        %v3740 = vpop.f32.mrf.mxu0
        %v3741 = vadd.f32 0.0, %v3740
        %v3742 = vpop.f32.mrf.mxu0
        %v3743 = vadd.f32 0.0, %v3742
        %3744 = vmatmul.bf16.gmra.mxu0 %v3688
        %v3745 = vpop.f32.mrf.mxu0
        %v3746 = vadd.f32 0.0, %v3745
        %v3747 = vpop.f32.mrf.mxu0
        %v3748 = vadd.f32 0.0, %v3747
        %3749 = vmatmul.bf16.gmra.mxu0 %v3689
        %v3750 = vpop.f32.mrf.mxu0
        %v3751 = vadd.f32 0.0, %v3750
        %v3752 = vpop.f32.mrf.mxu0
        %v3753 = vadd.f32 0.0, %v3752
        %3754 = vmatmul.bf16.gmra.mxu0 %v3690
        %v3755 = vpop.f32.mrf.mxu0
        %v3756 = vadd.f32 0.0, %v3755
        %v3757 = vpop.f32.mrf.mxu0
        %v3758 = vadd.f32 0.0, %v3757
        %3759 = vmatmul.bf16.gmra.mxu0 %v3691
        %v3760 = vpop.f32.mrf.mxu0
        %v3761 = vadd.f32 0.0, %v3760
        %v3762 = vpop.f32.mrf.mxu0
        %v3763 = vadd.f32 0.0, %v3762
        %3764 = vmatmul.bf16.gmra.mxu0 %v3692
        %v3765 = vpop.f32.mrf.mxu0
        %v3766 = vadd.f32 0.0, %v3765
        %v3767 = vpop.f32.mrf.mxu0
        %v3768 = vadd.f32 0.0, %v3767
        %3769 = vmatmul.bf16.gmra.mxu0 %v3693
        %v3770 = vpop.f32.mrf.mxu0
        %v3771 = vadd.f32 0.0, %v3770
        %v3772 = vpop.f32.mrf.mxu0
        %v3773 = vadd.f32 0.0, %v3772
        %3774 = vdwg.mxu0
        %v3775 = vpack.c.bf16 %v3738, %v3736
        %v3776 = vpack.c.bf16 %v3743, %v3741
        %v3777 = vpack.c.bf16 %v3748, %v3746
        %v3778 = vpack.c.bf16 %v3753, %v3751
        %v3779 = vpack.c.bf16 %v3758, %v3756
        %v3780 = vpack.c.bf16 %v3763, %v3761
        %v3781 = vpack.c.bf16 %v3768, %v3766
        %v3782 = vpack.c.bf16 %v3773, %v3771
        %v3791 = vunpack.c.l.b16 %v1690
        %v3792 = vunpack.c.h.b16 %v1690
        %v3793 = vunpack.c.l.b16 %v1691
        %v3794 = vunpack.c.h.b16 %v1691
        %v3795 = vunpack.c.l.b16 %v1692
        %v3796 = vunpack.c.h.b16 %v1692
        %v3797 = vunpack.c.l.b16 %v1693
        %v3798 = vunpack.c.h.b16 %v1693
        %v3799 = vunpack.c.l.b16 %v1694
        %v3800 = vunpack.c.h.b16 %v1694
        %v3801 = vunpack.c.l.b16 %v1695
        %v3802 = vunpack.c.h.b16 %v1695
        %v3803 = vunpack.c.l.b16 %v1696
        %v3804 = vunpack.c.h.b16 %v1696
        %v3805 = vunpack.c.l.b16 %v1697
        %v3806 = vunpack.c.h.b16 %v1697
        %v3807 = vpack.c.b16 %v3793, %v3791
        %v3808 = vpack.c.b16 %v3794, %v3792
        %v3809 = vpack.c.b16 %v3797, %v3795
        %v3810 = vpack.c.b16 %v3798, %v3796
        %v3811 = vpack.c.b16 %v3801, %v3799
        %v3812 = vpack.c.b16 %v3802, %v3800
        %v3813 = vpack.c.b16 %v3805, %v3803
        %v3814 = vpack.c.b16 %v3806, %v3804
        %v3824 = vsel %vm1728, %v3775, 0
        %v3827 = vsel %vm1728, %v3776, 0
        %v3830 = vsel %vm1728, %v3777, 0
        %v3833 = vsel %vm1728, %v3778, 0
        %v3836 = vsel %vm1728, %v3779, 0
        %v3839 = vsel %vm1728, %v3780, 0
        %v3842 = vsel %vm1728, %v3781, 0
        %v3845 = vsel %vm1728, %v3782, 0
        %3847 = vmatpush.bf16.msra.mxu0 0
        %3848 = vmatpush.bf16.msra.mxu0 0
        %3849 = vmatpush.bf16.msra.mxu0 0
        %3850 = vmatpush.bf16.msra.mxu0 0
        %3851 = vmatpush.bf16.msra.mxu0 %v3813
        %3852 = vmatpush.bf16.msra.mxu0 %v3811
        %3853 = vmatpush.bf16.msra.mxu0 %v3809
        %3854 = vmatpush.bf16.msra.mxu0 %v3807
        %3855 = vmatmul.bf16.gmra.mxu0 %v3824
        %v3856 = vpop.f32.mrf.mxu0
        %v3857 = vadd.f32 0.0, %v3856
        %v3858 = vpop.f32.mrf.mxu0
        %v3859 = vadd.f32 0.0, %v3858
        %3860 = vmatmul.bf16.gmra.mxu0 %v3827
        %v3861 = vpop.f32.mrf.mxu0
        %v3862 = vadd.f32 0.0, %v3861
        %v3863 = vpop.f32.mrf.mxu0
        %v3864 = vadd.f32 0.0, %v3863
        %3865 = vmatmul.bf16.gmra.mxu0 %v3830
        %v3866 = vpop.f32.mrf.mxu0
        %v3867 = vadd.f32 0.0, %v3866
        %v3868 = vpop.f32.mrf.mxu0
        %v3869 = vadd.f32 0.0, %v3868
        %3870 = vmatmul.bf16.gmra.mxu0 %v3833
        %v3871 = vpop.f32.mrf.mxu0
        %v3872 = vadd.f32 0.0, %v3871
        %v3873 = vpop.f32.mrf.mxu0
        %v3874 = vadd.f32 0.0, %v3873
        %3875 = vmatmul.bf16.gmra.mxu0 %v3836
        %v3876 = vpop.f32.mrf.mxu0
        %v3877 = vadd.f32 0.0, %v3876
        %v3878 = vpop.f32.mrf.mxu0
        %v3879 = vadd.f32 0.0, %v3878
        %3880 = vmatmul.bf16.gmra.mxu0 %v3839
        %v3881 = vpop.f32.mrf.mxu0
        %v3882 = vadd.f32 0.0, %v3881
        %v3883 = vpop.f32.mrf.mxu0
        %v3884 = vadd.f32 0.0, %v3883
        %3885 = vmatmul.bf16.gmra.mxu0 %v3842
        %v3886 = vpop.f32.mrf.mxu0
        %v3887 = vadd.f32 0.0, %v3886
        %v3888 = vpop.f32.mrf.mxu0
        %v3889 = vadd.f32 0.0, %v3888
        %3890 = vmatmul.bf16.gmra.mxu0 %v3845
        %v3891 = vpop.f32.mrf.mxu0
        %v3892 = vadd.f32 0.0, %v3891
        %v3893 = vpop.f32.mrf.mxu0
        %v3894 = vadd.f32 0.0, %v3893
        %3895 = vdwg.mxu0
        %3896 = vmatpush.bf16.msra.mxu0 0
        %3897 = vmatpush.bf16.msra.mxu0 0
        %3898 = vmatpush.bf16.msra.mxu0 0
        %3899 = vmatpush.bf16.msra.mxu0 0
        %3900 = vmatpush.bf16.msra.mxu0 %v3814
        %3901 = vmatpush.bf16.msra.mxu0 %v3812
        %3902 = vmatpush.bf16.msra.mxu0 %v3810
        %3903 = vmatpush.bf16.msra.mxu0 %v3808
        %3904 = vmatmul.bf16.gmra.mxu0 %v3824
        %v3905 = vpop.f32.mrf.mxu0
        %v3906 = vadd.f32 0.0, %v3905
        %v3907 = vpop.f32.mrf.mxu0
        %v3908 = vadd.f32 0.0, %v3907
        %3909 = vmatmul.bf16.gmra.mxu0 %v3827
        %v3910 = vpop.f32.mrf.mxu0
        %v3911 = vadd.f32 0.0, %v3910
        %v3912 = vpop.f32.mrf.mxu0
        %v3913 = vadd.f32 0.0, %v3912
        %3914 = vmatmul.bf16.gmra.mxu0 %v3830
        %v3915 = vpop.f32.mrf.mxu0
        %v3916 = vadd.f32 0.0, %v3915
        %v3917 = vpop.f32.mrf.mxu0
        %v3918 = vadd.f32 0.0, %v3917
        %3919 = vmatmul.bf16.gmra.mxu0 %v3833
        %v3920 = vpop.f32.mrf.mxu0
        %v3921 = vadd.f32 0.0, %v3920
        %v3922 = vpop.f32.mrf.mxu0
        %v3923 = vadd.f32 0.0, %v3922
        %3924 = vmatmul.bf16.gmra.mxu0 %v3836
        %v3925 = vpop.f32.mrf.mxu0
        %v3926 = vadd.f32 0.0, %v3925
        %v3927 = vpop.f32.mrf.mxu0
        %v3928 = vadd.f32 0.0, %v3927
        %3929 = vmatmul.bf16.gmra.mxu0 %v3839
        %v3930 = vpop.f32.mrf.mxu0
        %v3931 = vadd.f32 0.0, %v3930
        %v3932 = vpop.f32.mrf.mxu0
        %v3933 = vadd.f32 0.0, %v3932
        %3934 = vmatmul.bf16.gmra.mxu0 %v3842
        %v3935 = vpop.f32.mrf.mxu0
        %v3936 = vadd.f32 0.0, %v3935
        %v3937 = vpop.f32.mrf.mxu0
        %v3938 = vadd.f32 0.0, %v3937
        %3939 = vmatmul.bf16.gmra.mxu0 %v3845
        %v3940 = vpop.f32.mrf.mxu0
        %v3941 = vadd.f32 0.0, %v3940
        %v3942 = vpop.f32.mrf.mxu0
        %v3943 = vadd.f32 0.0, %v3942
        %3944 = vdwg.mxu0
        %v3945 = vadd.f32 %v3349, %v3857
        %v3946 = vadd.f32 %v3350, %v3906
        %v3947 = vadd.f32 %v3351, %v3859
        %v3948 = vadd.f32 %v3352, %v3908
        %v3949 = vadd.f32 %v3353, %v3862
        %v3950 = vadd.f32 %v3354, %v3911
        %v3951 = vadd.f32 %v3355, %v3864
        %v3952 = vadd.f32 %v3356, %v3913
        %v3953 = vadd.f32 %v3357, %v3867
        %v3954 = vadd.f32 %v3358, %v3916
        %v3955 = vadd.f32 %v3359, %v3869
        %v3956 = vadd.f32 %v3360, %v3918
        %v3957 = vadd.f32 %v3361, %v3872
        %v3958 = vadd.f32 %v3362, %v3921
        %v3959 = vadd.f32 %v3363, %v3874
        %v3960 = vadd.f32 %v3364, %v3923
        %v3961 = vadd.f32 %v3365, %v3877
        %v3962 = vadd.f32 %v3366, %v3926
        %v3963 = vadd.f32 %v3367, %v3879
        %v3964 = vadd.f32 %v3368, %v3928
        %v3965 = vadd.f32 %v3369, %v3882
        %v3966 = vadd.f32 %v3370, %v3931
        %v3967 = vadd.f32 %v3371, %v3884
        %v3968 = vadd.f32 %v3372, %v3933
        %v3969 = vadd.f32 %v3373, %v3887
        %v3970 = vadd.f32 %v3374, %v3936
        %v3971 = vadd.f32 %v3375, %v3889
        %v3972 = vadd.f32 %v3376, %v3938
        %v3973 = vadd.f32 %v3377, %v3892
        %v3974 = vadd.f32 %v3378, %v3941
        %v3975 = vadd.f32 %v3379, %v3894
        %v3976 = vadd.f32 %v3380, %v3943
        %3977 = vst [vmem:[%s337] sm:$0xff] %v3945
        %3978 = vst [vmem:[%s337 + $0x8] sm:$0xff] %v3946
        %3979 = vst [vmem:[%s337 + $0x10] sm:$0xff] %v3947
        %3980 = vst [vmem:[%s337 + $0x18] sm:$0xff] %v3948
        %3981 = vst [vmem:[%s337 + $0x20] sm:$0xff] %v3949
        %3982 = vst [vmem:[%s337 + $0x28] sm:$0xff] %v3950
        %3983 = vst [vmem:[%s337 + $0x30] sm:$0xff] %v3951
        %3984 = vst [vmem:[%s337 + $0x38] sm:$0xff] %v3952
        %3985 = vst [vmem:[%s337 + $0x40] sm:$0xff] %v3953
        %3986 = vst [vmem:[%s337 + $0x48] sm:$0xff] %v3954
        %3987 = vst [vmem:[%s337 + $0x50] sm:$0xff] %v3955
        %3988 = vst [vmem:[%s337 + $0x58] sm:$0xff] %v3956
        %3989 = vst [vmem:[%s337 + $0x60] sm:$0xff] %v3957
        %3990 = vst [vmem:[%s337 + $0x68] sm:$0xff] %v3958
        %3991 = vst [vmem:[%s337 + $0x70] sm:$0xff] %v3959
        %3992 = vst [vmem:[%s337 + $0x78] sm:$0xff] %v3960
        %3993 = vst [vmem:[%s337 + $0x80] sm:$0xff] %v3961
        %3994 = vst [vmem:[%s337 + $0x88] sm:$0xff] %v3962
        %3995 = vst [vmem:[%s337 + $0x90] sm:$0xff] %v3963
        %3996 = vst [vmem:[%s337 + $0x98] sm:$0xff] %v3964
        %3997 = vst [vmem:[%s337 + $0xa0] sm:$0xff] %v3965
        %3998 = vst [vmem:[%s337 + $0xa8] sm:$0xff] %v3966
        %3999 = vst [vmem:[%s337 + $0xb0] sm:$0xff] %v3967
        %4000 = vst [vmem:[%s337 + $0xb8] sm:$0xff] %v3968
        %4001 = vst [vmem:[%s337 + $0xc0] sm:$0xff] %v3969
        %4002 = vst [vmem:[%s337 + $0xc8] sm:$0xff] %v3970
        %4003 = vst [vmem:[%s337 + $0xd0] sm:$0xff] %v3971
        %4004 = vst [vmem:[%s337 + $0xd8] sm:$0xff] %v3972
        %4005 = vst [vmem:[%s337 + $0xe0] sm:$0xff] %v3973
        %4006 = vst [vmem:[%s337 + $0xe8] sm:$0xff] %v3974
        %4007 = vst [vmem:[%s337 + $0xf0] sm:$0xff] %v3975
        %4008 = vst [vmem:[%s337 + $0xf8] sm:$0xff] %v3976
        %s4009 = sand.u32 %s164, 1
        %s4010 = scalar_lea.sflag [#allocation4], %s4009
        %s4011 = sand.u32 %s164, 1
        %s4012 = smul.addr %s4011, 256
        %s4013 = scalar_lea.vmem [#allocation11], %s4012
        // Predicated region
        $region65: #{tpu_custom_call.1} parent=43 // pred_check
          %p4014 = pneg %p174
        $region66: #{tpu_custom_call.1} parent=43 // pred_check_branch
          %4016 = sbr.rel (%p4014) target = $region68
        $region67: #{tpu_custom_call.1} parent=43 // pred_region
          %4018 = vsyncadd %s4010, 0
          %s4019 = smul.addr %s25, 32
          %s4020 = smul.addr %s4019, 8
          %s4021 = scalar_lea.hbm %s6, %s4020
          %s4022 = sshll.u32 %s4013, 4
          %s4023 = int_to_ptr.vmem [resolvable:$true] %s4022
          %s4024 = sshll.u32 %s4021, 4
          %s4025 = int_to_ptr.hbm [resolvable:$true] %s4024
          %4030 = dma.vmem_to_hbm [thread:$0]  %s4023, 4096, %s4025, %s4010, 256, 256, 16
        $region68: #{tpu_custom_call.1} parent=43 // pred_fallthru
          _
      $region44: #{tpu_custom_call.1} parent=5 // pred_fallthru
        _
      %p4031 = scmp.le.s32.totalorder 2, %s20
      // Predicated region
      $region69: #{tpu_custom_call.1} parent=5 // pred_check
        %p4032 = pneg %p4031
      $region70: #{tpu_custom_call.1} parent=5 // pred_check_branch
        %4034 = sbr.rel (%p4032) target = $region72
      $region71: #{tpu_custom_call.1} parent=5 // pred_region
        %s4035 = ssub.s32 %s20, 2
        // Predicated region
        $region73: #{tpu_custom_call.1} parent=71 // pred_check
          %p4036 = pneg %p180
        $region74: #{tpu_custom_call.1} parent=71 // pred_check_branch
          %4038 = sbr.rel (%p4036) target = $region76
        $region75: #{tpu_custom_call.1} parent=71 // pred_region
          %s4039 = sand.u32 %s165, 1
          %s4040 = scalar_lea.sflag [#allocation4], %s4039
          %s4041 = sand.u32 %s165, 1
          %s4042 = smul.addr %s4041, 256
          %s4043 = scalar_lea.vmem [#allocation11], %s4042
          %4045 = dma.done %s4040, 4096
        $region76: #{tpu_custom_call.1} parent=71 // pred_fallthru
          _
      $region72: #{tpu_custom_call.1} parent=5 // pred_fallthru
        _
    $region6: #{tpu_custom_call.1} parent=1 // loop_footer
      %s24 = sadd.s32 1, %s20
    $region7: #{tpu_custom_call.1} parent=1 // loop_footer_branch
      %19 = sbr.rel target = $region3
    $region8: #{tpu_custom_call.1} parent=1 // loop_exit
      _
    %4046 = vsyncpa [#allocation3], 1
    %s4047 = scalar_lea.sflag [#allocation3], 1
    %4048 = vsyncpa %s4047, 1
    %4049 = vsyncpa [#allocation6], 1
    %4050 = vsyncpa [#allocation9], 1
    %4051 = vsyncpa [#allocation4], 1
    %s4052 = scalar_lea.sflag [#allocation4], 1
    %4053 = vsyncpa %s4052, 1

</llo_original>
